<compile_context>
chip_gen: v5e
topology: v5e:2x2
jax: 0.10.0
libtpu: 0.0.40
codegen_flags: <defaults>
</compile_context>

<pallas_src>
import jax
import jax.numpy as jnp
from jax.experimental import pallas as pl
from jax.experimental.pallas import tpu as pltpu

IN_DIM = 69
HID_DIM = 136
OUT_DIM = 2
OUT_PAD = 128          # lane-dense padded output width (sliced back to 2 in wrapper)
N_HIDDEN = 17          # number of Linear(136, 136) layers
NEG_SLOPE = 0.01       # torch.nn.LeakyReLU default


def _leaky_relu(x):
    # One vmul + one vmax (cheaper than compare + select).
    return jnp.maximum(x, NEG_SLOPE * x)


def _round_up(n, m):
    return ((n + m - 1) // m) * m


def mlp_kernel(x_ref, w_in_ref, b_in_ref, w_hid_ref, b_hid_ref,
               w_out_ref, b_out_ref, o_ref):
    # Input layer: (TB, 69) @ (69, 136) + (1, 136).  bf16 operands, f32 accumulate.
    h = jnp.dot(x_ref[...].astype(jnp.bfloat16), w_in_ref[...],
                preferred_element_type=jnp.float32)
    h = _leaky_relu(h + b_in_ref[...])

    # 17 hidden layers, statically unrolled (small fixed trip count).
    for i in range(N_HIDDEN):
        h = jnp.dot(h.astype(jnp.bfloat16), w_hid_ref[i],
                    preferred_element_type=jnp.float32)
        h = _leaky_relu(h + b_hid_ref[i])

    # Output layer (padded to 128 lanes -> unmasked vst), no activation.
    out = jnp.dot(h.astype(jnp.bfloat16), w_out_ref[...],
                  preferred_element_type=jnp.float32)
    o_ref[...] = out + b_out_ref[...]


def mlp_forward(x, params, *, block_b=256):
    """x: (B, 69) f32. params from init_params (bf16 weights, f32 biases)."""
    w_in, b_in, w_hid, b_hid, w_out, b_out = params
    B = x.shape[0]

    # Pad the tiny output layer to 128 lanes so the final store is lane-dense.
    w_out_p = jnp.zeros((HID_DIM, OUT_PAD), w_out.dtype).at[:, :OUT_DIM].set(w_out)
    b_out_p = jnp.zeros((1, OUT_PAD), b_out.dtype).at[:, :OUT_DIM].set(b_out)

    # Batch tile: 256 rows feeds the 256x256 MXU on v6e/v7x (and is a multiple
    # of 128 for v5e); shrink for tiny batches, keep a multiple of 8 sublanes.
    tb = min(block_b, _round_up(B, 8))
    b_pad = _round_up(B, tb)
    if b_pad != B:
        x = jnp.pad(x, ((0, b_pad - B), (0, 0)))

    grid = (b_pad // tb,)

    def resident(a):
        # Full-array block, constant index_map -> stays in VMEM across grid steps.
        n = a.ndim
        return pl.BlockSpec(a.shape, lambda i: (0,) * n)

    out = pl.pallas_call(
        mlp_kernel,
        out_shape=jax.ShapeDtypeStruct((b_pad, OUT_PAD), jnp.float32),
        grid=grid,
        in_specs=[
            pl.BlockSpec((tb, IN_DIM), lambda i: (i, 0)),   # x streams per tile
            resident(w_in), resident(b_in),
            resident(w_hid), resident(b_hid),
            resident(w_out_p), resident(b_out_p),
        ],
        out_specs=pl.BlockSpec((tb, OUT_PAD), lambda i: (i, 0)),
        compiler_params=pltpu.CompilerParams(
            dimension_semantics=("parallel",),   # shard batch tiles across TCs on v7x
            vmem_limit_bytes=32 << 20,           # sized for v7x's 64 MiB physical VMEM
        ),
    )(x, w_in, b_in, w_hid, b_hid, w_out_p, b_out_p)

    return out[:B, :OUT_DIM]


def init_params(key):
    """Deterministic synthetic parameters (uniform, Kaiming-ish scale).

    Weights are stored in bf16 (MXU-native); biases stay f32 (VPU math in f32).
    """
    ks = jax.random.split(key, 6)

    def unif(k, shape, fan_in):
        bound = 1.0 / jnp.sqrt(fan_in)
        return jax.random.uniform(k, shape, jnp.float32, -bound, bound)

    w_in = unif(ks[0], (IN_DIM, HID_DIM), IN_DIM).astype(jnp.bfloat16)
    b_in = unif(ks[1], (1, HID_DIM), IN_DIM)
    w_hid = unif(ks[2], (N_HIDDEN, HID_DIM, HID_DIM), HID_DIM).astype(jnp.bfloat16)
    b_hid = unif(ks[3], (N_HIDDEN, 1, HID_DIM), HID_DIM)
    w_out = unif(ks[4], (HID_DIM, OUT_DIM), HID_DIM).astype(jnp.bfloat16)
    b_out = unif(ks[5], (1, OUT_DIM), HID_DIM)
    return (w_in, b_in, w_hid, b_hid, w_out, b_out)


def mlp_reference(x, params):
    """Pure-JAX reference (same bf16-operand / f32-accumulate math as kernel)."""
    w_in, b_in, w_hid, b_hid, w_out, b_out = params

    def dot(a, w):
        return jnp.dot(a.astype(jnp.bfloat16), w,
                       preferred_element_type=jnp.float32)

    h = _leaky_relu(dot(x, w_in) + b_in)
    for i in range(N_HIDDEN):
        h = _leaky_relu(dot(h, w_hid[i]) + b_hid[i])
    return dot(h, w_out) + b_out


if __name__ == "__main__":
    key = jax.random.PRNGKey(0)
    k_param, k_x = jax.random.split(key)

    B = 8
    x = jax.random.normal(k_x, (B, IN_DIM), jnp.float32)
    params = init_params(k_param)

    out = jax.block_until_ready(mlp_forward(x, params))
    ref = mlp_reference(x, params)

    assert out.shape == (B, OUT_DIM), out.shape
    assert jnp.allclose(out, ref, atol=2e-3, rtol=2e-3), "mismatch vs reference"

    print("KERNEL_OK")
</pallas_src>

<mosaic_0001>
module attributes {stable_mosaic.version = 11 : i64} {
  func.func @mlp_kernel(%arg0: i32, %arg1: memref<8x69xf32, #tpu.memory_space<vmem>>, %arg2: memref<69x136xbf16, #tpu.memory_space<vmem>>, %arg3: memref<1x136xf32, #tpu.memory_space<vmem>>, %arg4: memref<17x136x136xbf16, #tpu.memory_space<vmem>>, %arg5: memref<17x1x136xf32, #tpu.memory_space<vmem>>, %arg6: memref<136x128xbf16, #tpu.memory_space<vmem>>, %arg7: memref<1x128xf32, #tpu.memory_space<vmem>>, %arg8: memref<8x128xf32, #tpu.memory_space<vmem>>) attributes {dimension_semantics = [#tpu.dimension_semantics<parallel>], iteration_bounds = array<i64: 1>, scalar_prefetch = 0 : i64, scratch_operands = 0 : i64, tpu.core_type = #tpu.core_type<tc>, window_params = [{transform_indices = @transform_0, window_bounds = array<i64: 8, 69>}, {pipeline_mode = #tpu.pipeline_mode<synchronous>, transform_indices = @transform_1, window_bounds = array<i64: 69, 136>}, {pipeline_mode = #tpu.pipeline_mode<synchronous>, transform_indices = @transform_2, window_bounds = array<i64: 1, 136>}, {pipeline_mode = #tpu.pipeline_mode<synchronous>, transform_indices = @transform_3, window_bounds = array<i64: 17, 136, 136>}, {pipeline_mode = #tpu.pipeline_mode<synchronous>, transform_indices = @transform_4, window_bounds = array<i64: 17, 1, 136>}, {pipeline_mode = #tpu.pipeline_mode<synchronous>, transform_indices = @transform_5, window_bounds = array<i64: 136, 128>}, {pipeline_mode = #tpu.pipeline_mode<synchronous>, transform_indices = @transform_6, window_bounds = array<i64: 1, 128>}, {transform_indices = @transform_7, window_bounds = array<i64: 8, 128>}]} {
    %c0 = arith.constant 0 : index
    %c0_0 = arith.constant 0 : index
    %0 = vector.load %arg1[%c0, %c0_0] : memref<8x69xf32, #tpu.memory_space<vmem>>, vector<8x69xf32>
    %1 = arith.truncf %0 : vector<8x69xf32> to vector<8x69xbf16>
    %c0_1 = arith.constant 0 : index
    %c0_2 = arith.constant 0 : index
    %2 = vector.load %arg2[%c0_1, %c0_2] : memref<69x136xbf16, #tpu.memory_space<vmem>>, vector<69x136xbf16>
    %cst = arith.constant dense<0.000000e+00> : vector<8x136xf32>
    %3 = tpu.matmul %1, %2, %cst {dimension_numbers = #tpu.dot_dimension_numbers<[1], [0], [0], [1], [0, 0, 1, 1], [], []>} : vector<8x69xbf16>, vector<69x136xbf16>, vector<8x136xf32> -> vector<8x136xf32>
    %c0_3 = arith.constant 0 : index
    %c0_4 = arith.constant 0 : index
    %4 = vector.load %arg3[%c0_3, %c0_4] : memref<1x136xf32, #tpu.memory_space<vmem>>, vector<1x136xf32>
    %5 = vector.broadcast %4 : vector<1x136xf32> to vector<8x136xf32>
    %6 = arith.addf %3, %5 : vector<8x136xf32>
    %cst_5 = arith.constant 0.00999999977 : f32
    %7 = vector.broadcast %cst_5 : f32 to vector<8x136xf32>
    %8 = arith.mulf %7, %6 : vector<8x136xf32>
    %9 = arith.maximumf %6, %8 : vector<8x136xf32>
    %10 = arith.truncf %9 : vector<8x136xf32> to vector<8x136xbf16>
    %c0_6 = arith.constant 0 : index
    %c0_7 = arith.constant 0 : index
    %c0_8 = arith.constant 0 : index
    %11 = vector.load %arg4[%c0_6, %c0_7, %c0_8] : memref<17x136x136xbf16, #tpu.memory_space<vmem>>, vector<1x136x136xbf16>
    %12 = vector.shape_cast %11 : vector<1x136x136xbf16> to vector<136x136xbf16>
    %cst_9 = arith.constant dense<0.000000e+00> : vector<8x136xf32>
    %13 = tpu.matmul %10, %12, %cst_9 {dimension_numbers = #tpu.dot_dimension_numbers<[1], [0], [0], [1], [0, 0, 1, 1], [], []>} : vector<8x136xbf16>, vector<136x136xbf16>, vector<8x136xf32> -> vector<8x136xf32>
    %c0_10 = arith.constant 0 : index
    %c0_11 = arith.constant 0 : index
    %c0_12 = arith.constant 0 : index
    %14 = vector.load %arg5[%c0_10, %c0_11, %c0_12] : memref<17x1x136xf32, #tpu.memory_space<vmem>>, vector<1x1x136xf32>
    %15 = vector.shape_cast %14 : vector<1x1x136xf32> to vector<1x136xf32>
    %16 = vector.broadcast %15 : vector<1x136xf32> to vector<8x136xf32>
    %17 = arith.addf %13, %16 : vector<8x136xf32>
    %cst_13 = arith.constant 0.00999999977 : f32
    %18 = vector.broadcast %cst_13 : f32 to vector<8x136xf32>
    %19 = arith.mulf %18, %17 : vector<8x136xf32>
    %20 = arith.maximumf %17, %19 : vector<8x136xf32>
    %21 = arith.truncf %20 : vector<8x136xf32> to vector<8x136xbf16>
    %c1 = arith.constant 1 : index
    %c0_14 = arith.constant 0 : index
    %c0_15 = arith.constant 0 : index
    %22 = vector.load %arg4[%c1, %c0_14, %c0_15] : memref<17x136x136xbf16, #tpu.memory_space<vmem>>, vector<1x136x136xbf16>
    %23 = vector.shape_cast %22 : vector<1x136x136xbf16> to vector<136x136xbf16>
    %cst_16 = arith.constant dense<0.000000e+00> : vector<8x136xf32>
    %24 = tpu.matmul %21, %23, %cst_16 {dimension_numbers = #tpu.dot_dimension_numbers<[1], [0], [0], [1], [0, 0, 1, 1], [], []>} : vector<8x136xbf16>, vector<136x136xbf16>, vector<8x136xf32> -> vector<8x136xf32>
    %c1_17 = arith.constant 1 : index
    %c0_18 = arith.constant 0 : index
    %c0_19 = arith.constant 0 : index
    %25 = vector.load %arg5[%c1_17, %c0_18, %c0_19] : memref<17x1x136xf32, #tpu.memory_space<vmem>>, vector<1x1x136xf32>
    %26 = vector.shape_cast %25 : vector<1x1x136xf32> to vector<1x136xf32>
    %27 = vector.broadcast %26 : vector<1x136xf32> to vector<8x136xf32>
    %28 = arith.addf %24, %27 : vector<8x136xf32>
    %cst_20 = arith.constant 0.00999999977 : f32
    %29 = vector.broadcast %cst_20 : f32 to vector<8x136xf32>
    %30 = arith.mulf %29, %28 : vector<8x136xf32>
    %31 = arith.maximumf %28, %30 : vector<8x136xf32>
    %32 = arith.truncf %31 : vector<8x136xf32> to vector<8x136xbf16>
    %c2 = arith.constant 2 : index
    %c0_21 = arith.constant 0 : index
    %c0_22 = arith.constant 0 : index
    %33 = vector.load %arg4[%c2, %c0_21, %c0_22] : memref<17x136x136xbf16, #tpu.memory_space<vmem>>, vector<1x136x136xbf16>
    %34 = vector.shape_cast %33 : vector<1x136x136xbf16> to vector<136x136xbf16>
    %cst_23 = arith.constant dense<0.000000e+00> : vector<8x136xf32>
    %35 = tpu.matmul %32, %34, %cst_23 {dimension_numbers = #tpu.dot_dimension_numbers<[1], [0], [0], [1], [0, 0, 1, 1], [], []>} : vector<8x136xbf16>, vector<136x136xbf16>, vector<8x136xf32> -> vector<8x136xf32>
    %c2_24 = arith.constant 2 : index
    %c0_25 = arith.constant 0 : index
    %c0_26 = arith.constant 0 : index
    %36 = vector.load %arg5[%c2_24, %c0_25, %c0_26] : memref<17x1x136xf32, #tpu.memory_space<vmem>>, vector<1x1x136xf32>
    %37 = vector.shape_cast %36 : vector<1x1x136xf32> to vector<1x136xf32>
    %38 = vector.broadcast %37 : vector<1x136xf32> to vector<8x136xf32>
    %39 = arith.addf %35, %38 : vector<8x136xf32>
    %cst_27 = arith.constant 0.00999999977 : f32
    %40 = vector.broadcast %cst_27 : f32 to vector<8x136xf32>
    %41 = arith.mulf %40, %39 : vector<8x136xf32>
    %42 = arith.maximumf %39, %41 : vector<8x136xf32>
    %43 = arith.truncf %42 : vector<8x136xf32> to vector<8x136xbf16>
    %c3 = arith.constant 3 : index
    %c0_28 = arith.constant 0 : index
    %c0_29 = arith.constant 0 : index
    %44 = vector.load %arg4[%c3, %c0_28, %c0_29] : memref<17x136x136xbf16, #tpu.memory_space<vmem>>, vector<1x136x136xbf16>
    %45 = vector.shape_cast %44 : vector<1x136x136xbf16> to vector<136x136xbf16>
    %cst_30 = arith.constant dense<0.000000e+00> : vector<8x136xf32>
    %46 = tpu.matmul %43, %45, %cst_30 {dimension_numbers = #tpu.dot_dimension_numbers<[1], [0], [0], [1], [0, 0, 1, 1], [], []>} : vector<8x136xbf16>, vector<136x136xbf16>, vector<8x136xf32> -> vector<8x136xf32>
    %c3_31 = arith.constant 3 : index
    %c0_32 = arith.constant 0 : index
    %c0_33 = arith.constant 0 : index
    %47 = vector.load %arg5[%c3_31, %c0_32, %c0_33] : memref<17x1x136xf32, #tpu.memory_space<vmem>>, vector<1x1x136xf32>
    %48 = vector.shape_cast %47 : vector<1x1x136xf32> to vector<1x136xf32>
    %49 = vector.broadcast %48 : vector<1x136xf32> to vector<8x136xf32>
    %50 = arith.addf %46, %49 : vector<8x136xf32>
    %cst_34 = arith.constant 0.00999999977 : f32
    %51 = vector.broadcast %cst_34 : f32 to vector<8x136xf32>
    %52 = arith.mulf %51, %50 : vector<8x136xf32>
    %53 = arith.maximumf %50, %52 : vector<8x136xf32>
    %54 = arith.truncf %53 : vector<8x136xf32> to vector<8x136xbf16>
    %c4 = arith.constant 4 : index
    %c0_35 = arith.constant 0 : index
    %c0_36 = arith.constant 0 : index
    %55 = vector.load %arg4[%c4, %c0_35, %c0_36] : memref<17x136x136xbf16, #tpu.memory_space<vmem>>, vector<1x136x136xbf16>
    %56 = vector.shape_cast %55 : vector<1x136x136xbf16> to vector<136x136xbf16>
    %cst_37 = arith.constant dense<0.000000e+00> : vector<8x136xf32>
    %57 = tpu.matmul %54, %56, %cst_37 {dimension_numbers = #tpu.dot_dimension_numbers<[1], [0], [0], [1], [0, 0, 1, 1], [], []>} : vector<8x136xbf16>, vector<136x136xbf16>, vector<8x136xf32> -> vector<8x136xf32>
    %c4_38 = arith.constant 4 : index
    %c0_39 = arith.constant 0 : index
    %c0_40 = arith.constant 0 : index
    %58 = vector.load %arg5[%c4_38, %c0_39, %c0_40] : memref<17x1x136xf32, #tpu.memory_space<vmem>>, vector<1x1x136xf32>
    %59 = vector.shape_cast %58 : vector<1x1x136xf32> to vector<1x136xf32>
    %60 = vector.broadcast %59 : vector<1x136xf32> to vector<8x136xf32>
    %61 = arith.addf %57, %60 : vector<8x136xf32>
    %cst_41 = arith.constant 0.00999999977 : f32
    %62 = vector.broadcast %cst_41 : f32 to vector<8x136xf32>
    %63 = arith.mulf %62, %61 : vector<8x136xf32>
    %64 = arith.maximumf %61, %63 : vector<8x136xf32>
    %65 = arith.truncf %64 : vector<8x136xf32> to vector<8x136xbf16>
    %c5 = arith.constant 5 : index
    %c0_42 = arith.constant 0 : index
    %c0_43 = arith.constant 0 : index
    %66 = vector.load %arg4[%c5, %c0_42, %c0_43] : memref<17x136x136xbf16, #tpu.memory_space<vmem>>, vector<1x136x136xbf16>
    %67 = vector.shape_cast %66 : vector<1x136x136xbf16> to vector<136x136xbf16>
    %cst_44 = arith.constant dense<0.000000e+00> : vector<8x136xf32>
    %68 = tpu.matmul %65, %67, %cst_44 {dimension_numbers = #tpu.dot_dimension_numbers<[1], [0], [0], [1], [0, 0, 1, 1], [], []>} : vector<8x136xbf16>, vector<136x136xbf16>, vector<8x136xf32> -> vector<8x136xf32>
    %c5_45 = arith.constant 5 : index
    %c0_46 = arith.constant 0 : index
    %c0_47 = arith.constant 0 : index
    %69 = vector.load %arg5[%c5_45, %c0_46, %c0_47] : memref<17x1x136xf32, #tpu.memory_space<vmem>>, vector<1x1x136xf32>
    %70 = vector.shape_cast %69 : vector<1x1x136xf32> to vector<1x136xf32>
    %71 = vector.broadcast %70 : vector<1x136xf32> to vector<8x136xf32>
    %72 = arith.addf %68, %71 : vector<8x136xf32>
    %cst_48 = arith.constant 0.00999999977 : f32
    %73 = vector.broadcast %cst_48 : f32 to vector<8x136xf32>
    %74 = arith.mulf %73, %72 : vector<8x136xf32>
    %75 = arith.maximumf %72, %74 : vector<8x136xf32>
    %76 = arith.truncf %75 : vector<8x136xf32> to vector<8x136xbf16>
    %c6 = arith.constant 6 : index
    %c0_49 = arith.constant 0 : index
    %c0_50 = arith.constant 0 : index
    %77 = vector.load %arg4[%c6, %c0_49, %c0_50] : memref<17x136x136xbf16, #tpu.memory_space<vmem>>, vector<1x136x136xbf16>
    %78 = vector.shape_cast %77 : vector<1x136x136xbf16> to vector<136x136xbf16>
    %cst_51 = arith.constant dense<0.000000e+00> : vector<8x136xf32>
    %79 = tpu.matmul %76, %78, %cst_51 {dimension_numbers = #tpu.dot_dimension_numbers<[1], [0], [0], [1], [0, 0, 1, 1], [], []>} : vector<8x136xbf16>, vector<136x136xbf16>, vector<8x136xf32> -> vector<8x136xf32>
    %c6_52 = arith.constant 6 : index
    %c0_53 = arith.constant 0 : index
    %c0_54 = arith.constant 0 : index
    %80 = vector.load %arg5[%c6_52, %c0_53, %c0_54] : memref<17x1x136xf32, #tpu.memory_space<vmem>>, vector<1x1x136xf32>
    %81 = vector.shape_cast %80 : vector<1x1x136xf32> to vector<1x136xf32>
    %82 = vector.broadcast %81 : vector<1x136xf32> to vector<8x136xf32>
    %83 = arith.addf %79, %82 : vector<8x136xf32>
    %cst_55 = arith.constant 0.00999999977 : f32
    %84 = vector.broadcast %cst_55 : f32 to vector<8x136xf32>
    %85 = arith.mulf %84, %83 : vector<8x136xf32>
    %86 = arith.maximumf %83, %85 : vector<8x136xf32>
    %87 = arith.truncf %86 : vector<8x136xf32> to vector<8x136xbf16>
    %c7 = arith.constant 7 : index
    %c0_56 = arith.constant 0 : index
    %c0_57 = arith.constant 0 : index
    %88 = vector.load %arg4[%c7, %c0_56, %c0_57] : memref<17x136x136xbf16, #tpu.memory_space<vmem>>, vector<1x136x136xbf16>
    %89 = vector.shape_cast %88 : vector<1x136x136xbf16> to vector<136x136xbf16>
    %cst_58 = arith.constant dense<0.000000e+00> : vector<8x136xf32>
    %90 = tpu.matmul %87, %89, %cst_58 {dimension_numbers = #tpu.dot_dimension_numbers<[1], [0], [0], [1], [0, 0, 1, 1], [], []>} : vector<8x136xbf16>, vector<136x136xbf16>, vector<8x136xf32> -> vector<8x136xf32>
    %c7_59 = arith.constant 7 : index
    %c0_60 = arith.constant 0 : index
    %c0_61 = arith.constant 0 : index
    %91 = vector.load %arg5[%c7_59, %c0_60, %c0_61] : memref<17x1x136xf32, #tpu.memory_space<vmem>>, vector<1x1x136xf32>
    %92 = vector.shape_cast %91 : vector<1x1x136xf32> to vector<1x136xf32>
    %93 = vector.broadcast %92 : vector<1x136xf32> to vector<8x136xf32>
    %94 = arith.addf %90, %93 : vector<8x136xf32>
    %cst_62 = arith.constant 0.00999999977 : f32
    %95 = vector.broadcast %cst_62 : f32 to vector<8x136xf32>
    %96 = arith.mulf %95, %94 : vector<8x136xf32>
    %97 = arith.maximumf %94, %96 : vector<8x136xf32>
    %98 = arith.truncf %97 : vector<8x136xf32> to vector<8x136xbf16>
    %c8 = arith.constant 8 : index
    %c0_63 = arith.constant 0 : index
    %c0_64 = arith.constant 0 : index
    %99 = vector.load %arg4[%c8, %c0_63, %c0_64] : memref<17x136x136xbf16, #tpu.memory_space<vmem>>, vector<1x136x136xbf16>
    %100 = vector.shape_cast %99 : vector<1x136x136xbf16> to vector<136x136xbf16>
    %cst_65 = arith.constant dense<0.000000e+00> : vector<8x136xf32>
    %101 = tpu.matmul %98, %100, %cst_65 {dimension_numbers = #tpu.dot_dimension_numbers<[1], [0], [0], [1], [0, 0, 1, 1], [], []>} : vector<8x136xbf16>, vector<136x136xbf16>, vector<8x136xf32> -> vector<8x136xf32>
    %c8_66 = arith.constant 8 : index
    %c0_67 = arith.constant 0 : index
    %c0_68 = arith.constant 0 : index
    %102 = vector.load %arg5[%c8_66, %c0_67, %c0_68] : memref<17x1x136xf32, #tpu.memory_space<vmem>>, vector<1x1x136xf32>
    %103 = vector.shape_cast %102 : vector<1x1x136xf32> to vector<1x136xf32>
    %104 = vector.broadcast %103 : vector<1x136xf32> to vector<8x136xf32>
    %105 = arith.addf %101, %104 : vector<8x136xf32>
    %cst_69 = arith.constant 0.00999999977 : f32
    %106 = vector.broadcast %cst_69 : f32 to vector<8x136xf32>
    %107 = arith.mulf %106, %105 : vector<8x136xf32>
    %108 = arith.maximumf %105, %107 : vector<8x136xf32>
    %109 = arith.truncf %108 : vector<8x136xf32> to vector<8x136xbf16>
    %c9 = arith.constant 9 : index
    %c0_70 = arith.constant 0 : index
    %c0_71 = arith.constant 0 : index
    %110 = vector.load %arg4[%c9, %c0_70, %c0_71] : memref<17x136x136xbf16, #tpu.memory_space<vmem>>, vector<1x136x136xbf16>
    %111 = vector.shape_cast %110 : vector<1x136x136xbf16> to vector<136x136xbf16>
    %cst_72 = arith.constant dense<0.000000e+00> : vector<8x136xf32>
    %112 = tpu.matmul %109, %111, %cst_72 {dimension_numbers = #tpu.dot_dimension_numbers<[1], [0], [0], [1], [0, 0, 1, 1], [], []>} : vector<8x136xbf16>, vector<136x136xbf16>, vector<8x136xf32> -> vector<8x136xf32>
    %c9_73 = arith.constant 9 : index
    %c0_74 = arith.constant 0 : index
    %c0_75 = arith.constant 0 : index
    %113 = vector.load %arg5[%c9_73, %c0_74, %c0_75] : memref<17x1x136xf32, #tpu.memory_space<vmem>>, vector<1x1x136xf32>
    %114 = vector.shape_cast %113 : vector<1x1x136xf32> to vector<1x136xf32>
    %115 = vector.broadcast %114 : vector<1x136xf32> to vector<8x136xf32>
    %116 = arith.addf %112, %115 : vector<8x136xf32>
    %cst_76 = arith.constant 0.00999999977 : f32
    %117 = vector.broadcast %cst_76 : f32 to vector<8x136xf32>
    %118 = arith.mulf %117, %116 : vector<8x136xf32>
    %119 = arith.maximumf %116, %118 : vector<8x136xf32>
    %120 = arith.truncf %119 : vector<8x136xf32> to vector<8x136xbf16>
    %c10 = arith.constant 10 : index
    %c0_77 = arith.constant 0 : index
    %c0_78 = arith.constant 0 : index
    %121 = vector.load %arg4[%c10, %c0_77, %c0_78] : memref<17x136x136xbf16, #tpu.memory_space<vmem>>, vector<1x136x136xbf16>
    %122 = vector.shape_cast %121 : vector<1x136x136xbf16> to vector<136x136xbf16>
    %cst_79 = arith.constant dense<0.000000e+00> : vector<8x136xf32>
    %123 = tpu.matmul %120, %122, %cst_79 {dimension_numbers = #tpu.dot_dimension_numbers<[1], [0], [0], [1], [0, 0, 1, 1], [], []>} : vector<8x136xbf16>, vector<136x136xbf16>, vector<8x136xf32> -> vector<8x136xf32>
    %c10_80 = arith.constant 10 : index
    %c0_81 = arith.constant 0 : index
    %c0_82 = arith.constant 0 : index
    %124 = vector.load %arg5[%c10_80, %c0_81, %c0_82] : memref<17x1x136xf32, #tpu.memory_space<vmem>>, vector<1x1x136xf32>
    %125 = vector.shape_cast %124 : vector<1x1x136xf32> to vector<1x136xf32>
    %126 = vector.broadcast %125 : vector<1x136xf32> to vector<8x136xf32>
    %127 = arith.addf %123, %126 : vector<8x136xf32>
    %cst_83 = arith.constant 0.00999999977 : f32
    %128 = vector.broadcast %cst_83 : f32 to vector<8x136xf32>
    %129 = arith.mulf %128, %127 : vector<8x136xf32>
    %130 = arith.maximumf %127, %129 : vector<8x136xf32>
    %131 = arith.truncf %130 : vector<8x136xf32> to vector<8x136xbf16>
    %c11 = arith.constant 11 : index
    %c0_84 = arith.constant 0 : index
    %c0_85 = arith.constant 0 : index
    %132 = vector.load %arg4[%c11, %c0_84, %c0_85] : memref<17x136x136xbf16, #tpu.memory_space<vmem>>, vector<1x136x136xbf16>
    %133 = vector.shape_cast %132 : vector<1x136x136xbf16> to vector<136x136xbf16>
    %cst_86 = arith.constant dense<0.000000e+00> : vector<8x136xf32>
    %134 = tpu.matmul %131, %133, %cst_86 {dimension_numbers = #tpu.dot_dimension_numbers<[1], [0], [0], [1], [0, 0, 1, 1], [], []>} : vector<8x136xbf16>, vector<136x136xbf16>, vector<8x136xf32> -> vector<8x136xf32>
    %c11_87 = arith.constant 11 : index
    %c0_88 = arith.constant 0 : index
    %c0_89 = arith.constant 0 : index
    %135 = vector.load %arg5[%c11_87, %c0_88, %c0_89] : memref<17x1x136xf32, #tpu.memory_space<vmem>>, vector<1x1x136xf32>
    %136 = vector.shape_cast %135 : vector<1x1x136xf32> to vector<1x136xf32>
    %137 = vector.broadcast %136 : vector<1x136xf32> to vector<8x136xf32>
    %138 = arith.addf %134, %137 : vector<8x136xf32>
    %cst_90 = arith.constant 0.00999999977 : f32
    %139 = vector.broadcast %cst_90 : f32 to vector<8x136xf32>
    %140 = arith.mulf %139, %138 : vector<8x136xf32>
    %141 = arith.maximumf %138, %140 : vector<8x136xf32>
    %142 = arith.truncf %141 : vector<8x136xf32> to vector<8x136xbf16>
    %c12 = arith.constant 12 : index
    %c0_91 = arith.constant 0 : index
    %c0_92 = arith.constant 0 : index
    %143 = vector.load %arg4[%c12, %c0_91, %c0_92] : memref<17x136x136xbf16, #tpu.memory_space<vmem>>, vector<1x136x136xbf16>
    %144 = vector.shape_cast %143 : vector<1x136x136xbf16> to vector<136x136xbf16>
    %cst_93 = arith.constant dense<0.000000e+00> : vector<8x136xf32>
    %145 = tpu.matmul %142, %144, %cst_93 {dimension_numbers = #tpu.dot_dimension_numbers<[1], [0], [0], [1], [0, 0, 1, 1], [], []>} : vector<8x136xbf16>, vector<136x136xbf16>, vector<8x136xf32> -> vector<8x136xf32>
    %c12_94 = arith.constant 12 : index
    %c0_95 = arith.constant 0 : index
    %c0_96 = arith.constant 0 : index
    %146 = vector.load %arg5[%c12_94, %c0_95, %c0_96] : memref<17x1x136xf32, #tpu.memory_space<vmem>>, vector<1x1x136xf32>
    %147 = vector.shape_cast %146 : vector<1x1x136xf32> to vector<1x136xf32>
    %148 = vector.broadcast %147 : vector<1x136xf32> to vector<8x136xf32>
    %149 = arith.addf %145, %148 : vector<8x136xf32>
    %cst_97 = arith.constant 0.00999999977 : f32
    %150 = vector.broadcast %cst_97 : f32 to vector<8x136xf32>
    %151 = arith.mulf %150, %149 : vector<8x136xf32>
    %152 = arith.maximumf %149, %151 : vector<8x136xf32>
    %153 = arith.truncf %152 : vector<8x136xf32> to vector<8x136xbf16>
    %c13 = arith.constant 13 : index
    %c0_98 = arith.constant 0 : index
    %c0_99 = arith.constant 0 : index
    %154 = vector.load %arg4[%c13, %c0_98, %c0_99] : memref<17x136x136xbf16, #tpu.memory_space<vmem>>, vector<1x136x136xbf16>
    %155 = vector.shape_cast %154 : vector<1x136x136xbf16> to vector<136x136xbf16>
    %cst_100 = arith.constant dense<0.000000e+00> : vector<8x136xf32>
    %156 = tpu.matmul %153, %155, %cst_100 {dimension_numbers = #tpu.dot_dimension_numbers<[1], [0], [0], [1], [0, 0, 1, 1], [], []>} : vector<8x136xbf16>, vector<136x136xbf16>, vector<8x136xf32> -> vector<8x136xf32>
    %c13_101 = arith.constant 13 : index
    %c0_102 = arith.constant 0 : index
    %c0_103 = arith.constant 0 : index
    %157 = vector.load %arg5[%c13_101, %c0_102, %c0_103] : memref<17x1x136xf32, #tpu.memory_space<vmem>>, vector<1x1x136xf32>
    %158 = vector.shape_cast %157 : vector<1x1x136xf32> to vector<1x136xf32>
    %159 = vector.broadcast %158 : vector<1x136xf32> to vector<8x136xf32>
    %160 = arith.addf %156, %159 : vector<8x136xf32>
    %cst_104 = arith.constant 0.00999999977 : f32
    %161 = vector.broadcast %cst_104 : f32 to vector<8x136xf32>
    %162 = arith.mulf %161, %160 : vector<8x136xf32>
    %163 = arith.maximumf %160, %162 : vector<8x136xf32>
    %164 = arith.truncf %163 : vector<8x136xf32> to vector<8x136xbf16>
    %c14 = arith.constant 14 : index
    %c0_105 = arith.constant 0 : index
    %c0_106 = arith.constant 0 : index
    %165 = vector.load %arg4[%c14, %c0_105, %c0_106] : memref<17x136x136xbf16, #tpu.memory_space<vmem>>, vector<1x136x136xbf16>
    %166 = vector.shape_cast %165 : vector<1x136x136xbf16> to vector<136x136xbf16>
    %cst_107 = arith.constant dense<0.000000e+00> : vector<8x136xf32>
    %167 = tpu.matmul %164, %166, %cst_107 {dimension_numbers = #tpu.dot_dimension_numbers<[1], [0], [0], [1], [0, 0, 1, 1], [], []>} : vector<8x136xbf16>, vector<136x136xbf16>, vector<8x136xf32> -> vector<8x136xf32>
    %c14_108 = arith.constant 14 : index
    %c0_109 = arith.constant 0 : index
    %c0_110 = arith.constant 0 : index
    %168 = vector.load %arg5[%c14_108, %c0_109, %c0_110] : memref<17x1x136xf32, #tpu.memory_space<vmem>>, vector<1x1x136xf32>
    %169 = vector.shape_cast %168 : vector<1x1x136xf32> to vector<1x136xf32>
    %170 = vector.broadcast %169 : vector<1x136xf32> to vector<8x136xf32>
    %171 = arith.addf %167, %170 : vector<8x136xf32>
    %cst_111 = arith.constant 0.00999999977 : f32
    %172 = vector.broadcast %cst_111 : f32 to vector<8x136xf32>
    %173 = arith.mulf %172, %171 : vector<8x136xf32>
    %174 = arith.maximumf %171, %173 : vector<8x136xf32>
    %175 = arith.truncf %174 : vector<8x136xf32> to vector<8x136xbf16>
    %c15 = arith.constant 15 : index
    %c0_112 = arith.constant 0 : index
    %c0_113 = arith.constant 0 : index
    %176 = vector.load %arg4[%c15, %c0_112, %c0_113] : memref<17x136x136xbf16, #tpu.memory_space<vmem>>, vector<1x136x136xbf16>
    %177 = vector.shape_cast %176 : vector<1x136x136xbf16> to vector<136x136xbf16>
    %cst_114 = arith.constant dense<0.000000e+00> : vector<8x136xf32>
    %178 = tpu.matmul %175, %177, %cst_114 {dimension_numbers = #tpu.dot_dimension_numbers<[1], [0], [0], [1], [0, 0, 1, 1], [], []>} : vector<8x136xbf16>, vector<136x136xbf16>, vector<8x136xf32> -> vector<8x136xf32>
    %c15_115 = arith.constant 15 : index
    %c0_116 = arith.constant 0 : index
    %c0_117 = arith.constant 0 : index
    %179 = vector.load %arg5[%c15_115, %c0_116, %c0_117] : memref<17x1x136xf32, #tpu.memory_space<vmem>>, vector<1x1x136xf32>
    %180 = vector.shape_cast %179 : vector<1x1x136xf32> to vector<1x136xf32>
    %181 = vector.broadcast %180 : vector<1x136xf32> to vector<8x136xf32>
    %182 = arith.addf %178, %181 : vector<8x136xf32>
    %cst_118 = arith.constant 0.00999999977 : f32
    %183 = vector.broadcast %cst_118 : f32 to vector<8x136xf32>
    %184 = arith.mulf %183, %182 : vector<8x136xf32>
    %185 = arith.maximumf %182, %184 : vector<8x136xf32>
    %186 = arith.truncf %185 : vector<8x136xf32> to vector<8x136xbf16>
    %c16 = arith.constant 16 : index
    %c0_119 = arith.constant 0 : index
    %c0_120 = arith.constant 0 : index
    %187 = vector.load %arg4[%c16, %c0_119, %c0_120] : memref<17x136x136xbf16, #tpu.memory_space<vmem>>, vector<1x136x136xbf16>
    %188 = vector.shape_cast %187 : vector<1x136x136xbf16> to vector<136x136xbf16>
    %cst_121 = arith.constant dense<0.000000e+00> : vector<8x136xf32>
    %189 = tpu.matmul %186, %188, %cst_121 {dimension_numbers = #tpu.dot_dimension_numbers<[1], [0], [0], [1], [0, 0, 1, 1], [], []>} : vector<8x136xbf16>, vector<136x136xbf16>, vector<8x136xf32> -> vector<8x136xf32>
    %c16_122 = arith.constant 16 : index
    %c0_123 = arith.constant 0 : index
    %c0_124 = arith.constant 0 : index
    %190 = vector.load %arg5[%c16_122, %c0_123, %c0_124] : memref<17x1x136xf32, #tpu.memory_space<vmem>>, vector<1x1x136xf32>
    %191 = vector.shape_cast %190 : vector<1x1x136xf32> to vector<1x136xf32>
    %192 = vector.broadcast %191 : vector<1x136xf32> to vector<8x136xf32>
    %193 = arith.addf %189, %192 : vector<8x136xf32>
    %cst_125 = arith.constant 0.00999999977 : f32
    %194 = vector.broadcast %cst_125 : f32 to vector<8x136xf32>
    %195 = arith.mulf %194, %193 : vector<8x136xf32>
    %196 = arith.maximumf %193, %195 : vector<8x136xf32>
    %197 = arith.truncf %196 : vector<8x136xf32> to vector<8x136xbf16>
    %c0_126 = arith.constant 0 : index
    %c0_127 = arith.constant 0 : index
    %198 = vector.load %arg6[%c0_126, %c0_127] : memref<136x128xbf16, #tpu.memory_space<vmem>>, vector<136x128xbf16>
    %cst_128 = arith.constant dense<0.000000e+00> : vector<8x128xf32>
    %199 = tpu.matmul %197, %198, %cst_128 {dimension_numbers = #tpu.dot_dimension_numbers<[1], [0], [0], [1], [0, 0, 1, 1], [], []>} : vector<8x136xbf16>, vector<136x128xbf16>, vector<8x128xf32> -> vector<8x128xf32>
    %c0_129 = arith.constant 0 : index
    %c0_130 = arith.constant 0 : index
    %200 = vector.load %arg7[%c0_129, %c0_130] : memref<1x128xf32, #tpu.memory_space<vmem>>, vector<1x128xf32>
    %201 = vector.broadcast %200 : vector<1x128xf32> to vector<8x128xf32>
    %202 = arith.addf %199, %201 : vector<8x128xf32>
    %c0_131 = arith.constant 0 : index
    %c0_132 = arith.constant 0 : index
    %203 = vector.load %arg8[%c0_131, %c0_132] : memref<8x128xf32, #tpu.memory_space<vmem>>, vector<8x128xf32>
    tpu.vector_store %arg8[%c0_131, %c0_132], %202 {strides = array<i32>} : memref<8x128xf32, #tpu.memory_space<vmem>>, vector<8x128xf32>,
    return
  }
  func.func @transform_0(%arg0: i32) -> (i32, i32) {
    %c0_i32 = arith.constant 0 : i32
    %c0_i32_0 = arith.constant 0 : i32
    return %arg0, %c0_i32 : i32, i32
  }
  func.func @transform_1(%arg0: i32) -> (i32, i32) {
    %c0_i32 = arith.constant 0 : i32
    %c0_i32_0 = arith.constant 0 : i32
    %c0_i32_1 = arith.constant 0 : i32
    return %c0_i32, %c0_i32_0 : i32, i32
  }
  func.func @transform_2(%arg0: i32) -> (i32, i32) {
    %c0_i32 = arith.constant 0 : i32
    %c0_i32_0 = arith.constant 0 : i32
    %c0_i32_1 = arith.constant 0 : i32
    return %c0_i32, %c0_i32_0 : i32, i32
  }
  func.func @transform_3(%arg0: i32) -> (i32, i32, i32) {
    %c0_i32 = arith.constant 0 : i32
    %c0_i32_0 = arith.constant 0 : i32
    %c0_i32_1 = arith.constant 0 : i32
    %c0_i32_2 = arith.constant 0 : i32
    return %c0_i32, %c0_i32_0, %c0_i32_1 : i32, i32, i32
  }
  func.func @transform_4(%arg0: i32) -> (i32, i32, i32) {
    %c0_i32 = arith.constant 0 : i32
    %c0_i32_0 = arith.constant 0 : i32
    %c0_i32_1 = arith.constant 0 : i32
    %c0_i32_2 = arith.constant 0 : i32
    return %c0_i32, %c0_i32_0, %c0_i32_1 : i32, i32, i32
  }
  func.func @transform_5(%arg0: i32) -> (i32, i32) {
    %c0_i32 = arith.constant 0 : i32
    %c0_i32_0 = arith.constant 0 : i32
    %c0_i32_1 = arith.constant 0 : i32
    return %c0_i32, %c0_i32_0 : i32, i32
  }
  func.func @transform_6(%arg0: i32) -> (i32, i32) {
    %c0_i32 = arith.constant 0 : i32
    %c0_i32_0 = arith.constant 0 : i32
    %c0_i32_1 = arith.constant 0 : i32
    return %c0_i32, %c0_i32_0 : i32, i32
  }
  func.func @transform_7(%arg0: i32) -> (i32, i32) {
    %c0_i32 = arith.constant 0 : i32
    %c0_i32_0 = arith.constant 0 : i32
    return %arg0, %c0_i32 : i32, i32
  }
}

</mosaic_0001>

<llo_original>
// kernel: tpu_custom_call.1
$region0: #{tpu_custom_call.1}
  #allocation0 [shape = 'u32[]', space=smem, size = 0x4, offset = 0x4, fixed_abs, tag = 'smem constant byte address 0x4 - core index']
  #allocation1 [shape = 'u32[72,128]{1,0:T(1,128)}', space=vmem, size = 0x9000, scoped, tag = 'internal scratch']
  %s0 = inlined_call_operand.hbm [shape: f32[8,69], index: 0, kind: input, shape index: {}]
  %s1 = inlined_call_operand.vmem [shape: bf16[69,136], index: 1, kind: input, shape index: {}]
  %s2 = inlined_call_operand.hbm [shape: f32[1,136], index: 2, kind: input, shape index: {}]
  %s3 = inlined_call_operand.hbm [shape: bf16[17,136,136], index: 3, kind: input, shape index: {}]
  %s4 = inlined_call_operand.hbm [shape: f32[17,1,136], index: 4, kind: input, shape index: {}]
  %s5 = inlined_call_operand.hbm [shape: bf16[136,128], index: 5, kind: input, shape index: {}]
  %s6 = inlined_call_operand.hbm [shape: f32[1,128], index: 6, kind: input, shape index: {}]
  %s7 = inlined_call_operand.hbm [shape: f32[8,128], index: 7, kind: output, shape index: {}]
  %s8 = sld [smem:[#allocation0]]
  $region62: #{tpu_custom_call.1} parent=0
    _
  %s10 = ssub.s32 1, %s8
  %s11 = scalar_select 0, %s10, %s8
  $region1: #{tpu_custom_call.1} parent=0
    #allocation2 [shape = 'u8[4096]{0}', space=vmem, size = 0x1000, scoped, tag = 'input window, operand 0, single buffered']
    #allocation3 [shape = 's32[1]{0}', space=sflag, size = 0x4, scoped, tag = 'scoped memory for tpu_custom_call.1']
    #allocation4 [shape = 's32[1]{0}', space=sflag, size = 0x4, scoped, tag = 'scoped memory for tpu_custom_call.1']
    #allocation5 [shape = 'u8[1024]{0}', space=vmem, size = 0x400, scoped, tag = 'input window, operand 2, single buffered']
    #allocation6 [shape = 's32[1]{0}', space=sflag, size = 0x4, scoped, tag = 'scoped memory for tpu_custom_call.1']
    #allocation7 [shape = 'u8[1183744]{0}', space=vmem, size = 0x121000, scoped, tag = 'input window, operand 3, single buffered']
    #allocation8 [shape = 'u8[17408]{0}', space=vmem, size = 0x4400, scoped, tag = 'input window, operand 4, single buffered']
    #allocation9 [shape = 's32[1]{0}', space=sflag, size = 0x4, scoped, tag = 'scoped memory for tpu_custom_call.1']
    #allocation10 [shape = 'u8[34816]{0}', space=vmem, size = 0x8800, scoped, tag = 'input window, operand 5, single buffered']
    #allocation11 [shape = 'u8[512]{0}', space=vmem, size = 0x400, scoped, tag = 'input window, operand 6, single buffered']
    #allocation12 [shape = 's32[1]{0}', space=sflag, size = 0x4, scoped, tag = 'scoped memory for tpu_custom_call.1']
    #allocation13 [shape = 'u8[4096]{0}', space=vmem, size = 0x1000, scoped, tag = 'output window, operand 0, single buffered']
    %12 = vsyncpa [#allocation3], 0
    %13 = vsyncpa [#allocation6], 0
    %14 = vsyncpa [#allocation9], 0
    %15 = vsyncpa [#allocation12], 0
    %16 = vsyncpa [#allocation4], 0
    // Predicated region
    $region2: #{tpu_custom_call.1} parent=1 // pred_check
      _
    $region3: #{tpu_custom_call.1} parent=1 // pred_check_branch
      %18 = sbr.rel (0) target = $region5
    $region4: #{tpu_custom_call.1} parent=1 // pred_region
      %20 = vsyncadd [#allocation3], 0
      %s22 = sshll.u32 %s0, 4
      %s23 = int_to_ptr.hbm [resolvable:$true] %s22
      %s24 = sshll.u32 [#allocation2], 4
      %s25 = int_to_ptr.vmem [resolvable:$true] %s24
      %27 = dma.hbm_to_vmem [thread:$0]  %s23, 128, %s25, [#allocation3]
    $region5: #{tpu_custom_call.1} parent=1 // pred_fallthru
      _
    // Predicated region
    $region6: #{tpu_custom_call.1} parent=1 // pred_check
      _
    $region7: #{tpu_custom_call.1} parent=1 // pred_check_branch
      %29 = sbr.rel (0) target = $region9
    $region8: #{tpu_custom_call.1} parent=1 // pred_region
      _
    $region9: #{tpu_custom_call.1} parent=1 // pred_fallthru
      _
    // Predicated region
    $region10: #{tpu_custom_call.1} parent=1 // pred_check
      _
    $region11: #{tpu_custom_call.1} parent=1 // pred_check_branch
      %31 = sbr.rel (0) target = $region13
    $region12: #{tpu_custom_call.1} parent=1 // pred_region
      %33 = vsyncadd [#allocation6], 0
      %s35 = sshll.u32 %s2, 4
      %s36 = int_to_ptr.hbm [resolvable:$true] %s35
      %s37 = sshll.u32 [#allocation5], 4
      %s38 = int_to_ptr.vmem [resolvable:$true] %s37
      %40 = dma.hbm_to_vmem [thread:$0]  %s36, 32, %s38, [#allocation6]
    $region13: #{tpu_custom_call.1} parent=1 // pred_fallthru
      _
    // Predicated region
    $region14: #{tpu_custom_call.1} parent=1 // pred_check
      _
    $region15: #{tpu_custom_call.1} parent=1 // pred_check_branch
      %42 = sbr.rel (0) target = $region17
    $region16: #{tpu_custom_call.1} parent=1 // pred_region
      %44 = vsyncadd [#allocation6], 0
      %s45 = sshll.u32 %s3, 4
      %s46 = int_to_ptr.hbm [resolvable:$true] %s45
      %s47 = sshll.u32 [#allocation7], 4
      %s48 = int_to_ptr.vmem [resolvable:$true] %s47
      %53 = dma.hbm_to_vmem [thread:$0]  %s46, 36992, %s48, [#allocation6], 128, 128, 8
    $region17: #{tpu_custom_call.1} parent=1 // pred_fallthru
      _
    // Predicated region
    $region18: #{tpu_custom_call.1} parent=1 // pred_check
      _
    $region19: #{tpu_custom_call.1} parent=1 // pred_check_branch
      %55 = sbr.rel (0) target = $region21
    $region20: #{tpu_custom_call.1} parent=1 // pred_region
      %57 = vsyncadd [#allocation9], 0
      %s58 = sshll.u32 %s4, 4
      %s59 = int_to_ptr.hbm [resolvable:$true] %s58
      %s60 = sshll.u32 [#allocation8], 4
      %s61 = int_to_ptr.vmem [resolvable:$true] %s60
      %66 = dma.hbm_to_vmem [thread:$0]  %s59, 544, %s61, [#allocation9], 32, 32, 2
    $region21: #{tpu_custom_call.1} parent=1 // pred_fallthru
      _
    // Predicated region
    $region22: #{tpu_custom_call.1} parent=1 // pred_check
      _
    $region23: #{tpu_custom_call.1} parent=1 // pred_check_branch
      %68 = sbr.rel (0) target = $region25
    $region24: #{tpu_custom_call.1} parent=1 // pred_region
      %70 = vsyncadd [#allocation9], 0
      %s71 = sshll.u32 %s5, 4
      %s72 = int_to_ptr.hbm [resolvable:$true] %s71
      %s73 = sshll.u32 [#allocation10], 4
      %s74 = int_to_ptr.vmem [resolvable:$true] %s73
      %79 = dma.hbm_to_vmem [thread:$0]  %s72, 1088, %s74, [#allocation9], 64, 64, 4
    $region25: #{tpu_custom_call.1} parent=1 // pred_fallthru
      _
    // Predicated region
    $region26: #{tpu_custom_call.1} parent=1 // pred_check
      _
    $region27: #{tpu_custom_call.1} parent=1 // pred_check_branch
      %81 = sbr.rel (0) target = $region29
    $region28: #{tpu_custom_call.1} parent=1 // pred_region
      %83 = vsyncadd [#allocation12], 0
      %s85 = sshll.u32 %s6, 4
      %s86 = int_to_ptr.hbm [resolvable:$true] %s85
      %s87 = sshll.u32 [#allocation11], 4
      %s88 = int_to_ptr.vmem [resolvable:$true] %s87
      %90 = dma.hbm_to_vmem [thread:$0]  %s86, 16, %s88, [#allocation12]
    $region29: #{tpu_custom_call.1} parent=1 // pred_fallthru
      _
    // Predicated region
    $region30: #{tpu_custom_call.1} parent=1 // pred_check
      _
    $region31: #{tpu_custom_call.1} parent=1 // pred_check_branch
      %92 = sbr.rel (0) target = $region33
    $region32: #{tpu_custom_call.1} parent=1 // pred_region
      %94 = dma.done [#allocation3], 128
    $region33: #{tpu_custom_call.1} parent=1 // pred_fallthru
      _
    // Predicated region
    $region34: #{tpu_custom_call.1} parent=1 // pred_check
      _
    $region35: #{tpu_custom_call.1} parent=1 // pred_check_branch
      %96 = sbr.rel (0) target = $region37
    $region36: #{tpu_custom_call.1} parent=1 // pred_region
      %98 = dma.done [#allocation6], 32
    $region37: #{tpu_custom_call.1} parent=1 // pred_fallthru
      _
    // Predicated region
    $region38: #{tpu_custom_call.1} parent=1 // pred_check
      _
    $region39: #{tpu_custom_call.1} parent=1 // pred_check_branch
      %100 = sbr.rel (0) target = $region41
    $region40: #{tpu_custom_call.1} parent=1 // pred_region
      %102 = dma.done [#allocation6], 36992
    $region41: #{tpu_custom_call.1} parent=1 // pred_fallthru
      _
    // Predicated region
    $region42: #{tpu_custom_call.1} parent=1 // pred_check
      _
    $region43: #{tpu_custom_call.1} parent=1 // pred_check_branch
      %104 = sbr.rel (0) target = $region45
    $region44: #{tpu_custom_call.1} parent=1 // pred_region
      %106 = dma.done [#allocation9], 544
    $region45: #{tpu_custom_call.1} parent=1 // pred_fallthru
      _
    // Predicated region
    $region46: #{tpu_custom_call.1} parent=1 // pred_check
      _
    $region47: #{tpu_custom_call.1} parent=1 // pred_check_branch
      %108 = sbr.rel (0) target = $region49
    $region48: #{tpu_custom_call.1} parent=1 // pred_region
      %110 = dma.done [#allocation9], 1088
    $region49: #{tpu_custom_call.1} parent=1 // pred_fallthru
      _
    // Predicated region
    $region50: #{tpu_custom_call.1} parent=1 // pred_check
      _
    $region51: #{tpu_custom_call.1} parent=1 // pred_check_branch
      %112 = sbr.rel (0) target = $region53
    $region52: #{tpu_custom_call.1} parent=1 // pred_region
      %114 = dma.done [#allocation12], 16
    $region53: #{tpu_custom_call.1} parent=1 // pred_fallthru
      _
    %v116 = vld [vmem:[#allocation2] sm:$0xff]
    %v117 = vpack.c.bf16 %v116, %v116
    %v118 = vld [vmem:[%s1] sm:$0xff]
    %v119 = vld [vmem:[%s1 + $0x8] sm:$0xff]
    %v120 = vld [vmem:[%s1 + $0x10] sm:$0xff]
    %v121 = vld [vmem:[%s1 + $0x18] sm:$0xff]
    %v122 = vld [vmem:[%s1 + $0x20] sm:$0xff]
    %v123 = vld [vmem:[%s1 + $0x28] sm:$0xff]
    %v124 = vld [vmem:[%s1 + $0x30] sm:$0xff]
    %v125 = vld [vmem:[%s1 + $0x38] sm:$0xff]
    %v126 = vld [vmem:[%s1 + $0x40] sm:$0x77]
    %v127 = vld [vmem:[#allocation5] sm:$0x3]
    %v129 = vperm.slane %v127, 0
    %v130 = vperm.slane %v127, 1
    %v142 = vunpack.c.l.b16 %v118
    %v143 = vunpack.c.h.b16 %v118
    %v144 = vunpack.c.l.b16 %v119
    %v145 = vunpack.c.h.b16 %v119
    %v146 = vunpack.c.l.b16 %v120
    %v147 = vunpack.c.h.b16 %v120
    %v148 = vunpack.c.l.b16 %v121
    %v149 = vunpack.c.h.b16 %v121
    %v150 = vunpack.c.l.b16 %v122
    %v151 = vunpack.c.h.b16 %v122
    %v152 = vunpack.c.l.b16 %v123
    %v153 = vunpack.c.h.b16 %v123
    %v154 = vunpack.c.l.b16 %v124
    %v155 = vunpack.c.h.b16 %v124
    %v156 = vunpack.c.l.b16 %v125
    %v157 = vunpack.c.h.b16 %v125
    %v158 = vunpack.c.l.b16 %v126
    %v159 = vunpack.c.h.b16 %v126
    %v160 = vpack.c.b16 %v144, %v142
    %v161 = vpack.c.b16 %v145, %v143
    %v162 = vpack.c.b16 %v148, %v146
    %v163 = vpack.c.b16 %v149, %v147
    %v164 = vpack.c.b16 %v152, %v150
    %v165 = vpack.c.b16 %v153, %v151
    %v166 = vpack.c.b16 %v156, %v154
    %v167 = vpack.c.b16 %v157, %v155
    %v168 = vpack.c.b16 %v158, %v158
    %v169 = vpack.c.b16 %v159, %v159
    %vm178 = vcmask 564224
    %v180 = vsel %vm178, %v117, 0
    %vm182 = vcmask 1041408
    %vm183 = vcmask 1042432
    %v184 = vsel %vm182, 4294967295, 65535
    %v185 = vsel %vm183, %v184, 0
    %v187 = vand.u32 %v168, %v185
    %v190 = vand.u32 %v169, %v185
    %192 = vmatpush.bf16.msra.mxu0 0
    %193 = vmatpush.bf16.msra.mxu0 0
    %194 = vmatpush.bf16.msra.mxu0 0
    %195 = vmatpush.bf16.msra.mxu0 %v187
    %196 = vmatpush.bf16.msra.mxu0 %v166
    %197 = vmatpush.bf16.msra.mxu0 %v164
    %198 = vmatpush.bf16.msra.mxu0 %v162
    %199 = vmatpush.bf16.msra.mxu0 %v160
    %200 = vmatmul.bf16.gmra.mxu0 %v180
    %v201 = vpop.f32.mrf.mxu0
    %v202 = vadd.f32 %v129, %v201
    %v203 = vpop.f32.mrf.mxu0
    %204 = vdwg.mxu0
    %205 = vmatpush.bf16.msra.mxu0 0
    %206 = vmatpush.bf16.msra.mxu0 0
    %207 = vmatpush.bf16.msra.mxu0 0
    %208 = vmatpush.bf16.msra.mxu0 %v190
    %209 = vmatpush.bf16.msra.mxu0 %v167
    %210 = vmatpush.bf16.msra.mxu0 %v165
    %211 = vmatpush.bf16.msra.mxu0 %v163
    %212 = vmatpush.bf16.msra.mxu0 %v161
    %213 = vmatmul.bf16.gmra.mxu0 %v180
    %v214 = vpop.f32.mrf.mxu0
    %v215 = vadd.f32 %v130, %v214
    %v216 = vpop.f32.mrf.mxu0
    %217 = vdwg.mxu0
    %v218 = vmul.f32 %v202, 0.01
    %v219 = vmul.f32 %v215, 0.01
    %v220 = vmax.f32 %v202, %v218
    %v221 = vmax.f32 %v215, %v219
    %v222 = vpack.c.bf16 %v220, %v220
    %v223 = vpack.c.bf16 %v221, %v221
    %v224 = vld [vmem:[#allocation7] sm:$0xff]
    %v225 = vld [vmem:[#allocation7 + $0x8] sm:$0xff]
    %v226 = vld [vmem:[#allocation7 + $0x10] sm:$0xff]
    %v227 = vld [vmem:[#allocation7 + $0x18] sm:$0xff]
    %v228 = vld [vmem:[#allocation7 + $0x20] sm:$0xff]
    %v229 = vld [vmem:[#allocation7 + $0x28] sm:$0xff]
    %v230 = vld [vmem:[#allocation7 + $0x30] sm:$0xff]
    %v231 = vld [vmem:[#allocation7 + $0x38] sm:$0xff]
    %v232 = vld [vmem:[#allocation7 + $0x40] sm:$0xff]
    %v233 = vld [vmem:[#allocation7 + $0x48] sm:$0xff]
    %v234 = vld [vmem:[#allocation7 + $0x50] sm:$0xff]
    %v235 = vld [vmem:[#allocation7 + $0x58] sm:$0xff]
    %v236 = vld [vmem:[#allocation7 + $0x60] sm:$0xff]
    %v237 = vld [vmem:[#allocation7 + $0x68] sm:$0xff]
    %v238 = vld [vmem:[#allocation7 + $0x70] sm:$0xff]
    %v239 = vld [vmem:[#allocation7 + $0x78] sm:$0xff]
    %v240 = vld [vmem:[#allocation7 + $0x80] sm:$0xff]
    %v241 = vld [vmem:[#allocation8] sm:$0x3]
    %v243 = vperm.slane %v241, 0
    %v244 = vperm.slane %v241, 1
    %v264 = vunpack.c.l.b16 %v224
    %v265 = vunpack.c.h.b16 %v224
    %v266 = vunpack.c.l.b16 %v225
    %v267 = vunpack.c.h.b16 %v225
    %v268 = vunpack.c.l.b16 %v226
    %v269 = vunpack.c.h.b16 %v226
    %v270 = vunpack.c.l.b16 %v227
    %v271 = vunpack.c.h.b16 %v227
    %v272 = vunpack.c.l.b16 %v228
    %v273 = vunpack.c.h.b16 %v228
    %v274 = vunpack.c.l.b16 %v229
    %v275 = vunpack.c.h.b16 %v229
    %v276 = vunpack.c.l.b16 %v230
    %v277 = vunpack.c.h.b16 %v230
    %v278 = vunpack.c.l.b16 %v231
    %v279 = vunpack.c.h.b16 %v231
    %v280 = vunpack.c.l.b16 %v232
    %v281 = vunpack.c.h.b16 %v232
    %v282 = vunpack.c.l.b16 %v233
    %v283 = vunpack.c.h.b16 %v233
    %v284 = vunpack.c.l.b16 %v234
    %v285 = vunpack.c.h.b16 %v234
    %v286 = vunpack.c.l.b16 %v235
    %v287 = vunpack.c.h.b16 %v235
    %v288 = vunpack.c.l.b16 %v236
    %v289 = vunpack.c.h.b16 %v236
    %v290 = vunpack.c.l.b16 %v237
    %v291 = vunpack.c.h.b16 %v237
    %v292 = vunpack.c.l.b16 %v238
    %v293 = vunpack.c.h.b16 %v238
    %v294 = vunpack.c.l.b16 %v239
    %v295 = vunpack.c.h.b16 %v239
    %v296 = vunpack.c.l.b16 %v240
    %v297 = vunpack.c.h.b16 %v240
    %v298 = vpack.c.b16 %v266, %v264
    %v299 = vpack.c.b16 %v267, %v265
    %v300 = vpack.c.b16 %v270, %v268
    %v301 = vpack.c.b16 %v271, %v269
    %v302 = vpack.c.b16 %v274, %v272
    %v303 = vpack.c.b16 %v275, %v273
    %v304 = vpack.c.b16 %v278, %v276
    %v305 = vpack.c.b16 %v279, %v277
    %v306 = vpack.c.b16 %v282, %v280
    %v307 = vpack.c.b16 %v283, %v281
    %v308 = vpack.c.b16 %v286, %v284
    %v309 = vpack.c.b16 %v287, %v285
    %v310 = vpack.c.b16 %v290, %v288
    %v311 = vpack.c.b16 %v291, %v289
    %v312 = vpack.c.b16 %v294, %v292
    %v313 = vpack.c.b16 %v295, %v293
    %v314 = vpack.c.b16 %v296, %v296
    %v315 = vpack.c.b16 %v297, %v297
    %vm332 = vcmask 64512
    %v334 = vsel %vm332, %v223, 0
    %vm336 = vcmask 1043456
    %v338 = vsel %vm336, %v314, 0
    %v341 = vsel %vm336, %v315, 0
    %343 = vmatpush.bf16.msra.mxu0 %v312
    %344 = vmatpush.bf16.msra.mxu0 %v310
    %345 = vmatpush.bf16.msra.mxu0 %v308
    %346 = vmatpush.bf16.msra.mxu0 %v306
    %347 = vmatpush.bf16.msra.mxu0 %v304
    %348 = vmatpush.bf16.msra.mxu0 %v302
    %349 = vmatpush.bf16.msra.mxu0 %v300
    %350 = vmatpush.bf16.msra.mxu0 %v298
    %351 = vmatmul.bf16.gmra.mxu0 %v222
    %v352 = vpop.f32.mrf.mxu0
    %v353 = vadd.f32 %v243, %v352
    %v354 = vpop.f32.mrf.mxu0
    %355 = vdwg.mxu0
    %356 = vmatpush.bf16.msra.mxu0 0
    %357 = vmatpush.bf16.msra.mxu0 0
    %358 = vmatpush.bf16.msra.mxu0 0
    %359 = vmatpush.bf16.msra.mxu0 0
    %360 = vmatpush.bf16.msra.mxu0 0
    %361 = vmatpush.bf16.msra.mxu0 0
    %362 = vmatpush.bf16.msra.mxu0 0
    %363 = vmatpush.bf16.msra.mxu0 %v338
    %364 = vmatmul.bf16.gmra.mxu0 %v334
    %v365 = vpop.f32.mrf.mxu0
    %v366 = vadd.f32 %v353, %v365
    %v367 = vpop.f32.mrf.mxu0
    %368 = vdwg.mxu0
    %369 = vmatpush.bf16.msra.mxu0 %v313
    %370 = vmatpush.bf16.msra.mxu0 %v311
    %371 = vmatpush.bf16.msra.mxu0 %v309
    %372 = vmatpush.bf16.msra.mxu0 %v307
    %373 = vmatpush.bf16.msra.mxu0 %v305
    %374 = vmatpush.bf16.msra.mxu0 %v303
    %375 = vmatpush.bf16.msra.mxu0 %v301
    %376 = vmatpush.bf16.msra.mxu0 %v299
    %377 = vmatmul.bf16.gmra.mxu0 %v222
    %v378 = vpop.f32.mrf.mxu0
    %v379 = vadd.f32 %v244, %v378
    %v380 = vpop.f32.mrf.mxu0
    %381 = vdwg.mxu0
    %382 = vmatpush.bf16.msra.mxu0 0
    %383 = vmatpush.bf16.msra.mxu0 0
    %384 = vmatpush.bf16.msra.mxu0 0
    %385 = vmatpush.bf16.msra.mxu0 0
    %386 = vmatpush.bf16.msra.mxu0 0
    %387 = vmatpush.bf16.msra.mxu0 0
    %388 = vmatpush.bf16.msra.mxu0 0
    %389 = vmatpush.bf16.msra.mxu0 %v341
    %390 = vmatmul.bf16.gmra.mxu0 %v334
    %v391 = vpop.f32.mrf.mxu0
    %v392 = vadd.f32 %v379, %v391
    %v393 = vpop.f32.mrf.mxu0
    %394 = vdwg.mxu0
    %v395 = vmul.f32 %v366, 0.01
    %v396 = vmul.f32 %v392, 0.01
    %v397 = vmax.f32 %v366, %v395
    %v398 = vmax.f32 %v392, %v396
    %v399 = vpack.c.bf16 %v397, %v397
    %v400 = vpack.c.bf16 %v398, %v398
    %s401 = scalar_lea.vmem [#allocation7], 136
    %v402 = vld [vmem:[%s401] sm:$0xff]
    %v403 = vld [vmem:[%s401 + $0x8] sm:$0xff]
    %v404 = vld [vmem:[%s401 + $0x10] sm:$0xff]
    %v405 = vld [vmem:[%s401 + $0x18] sm:$0xff]
    %v406 = vld [vmem:[%s401 + $0x20] sm:$0xff]
    %v407 = vld [vmem:[%s401 + $0x28] sm:$0xff]
    %v408 = vld [vmem:[%s401 + $0x30] sm:$0xff]
    %v409 = vld [vmem:[%s401 + $0x38] sm:$0xff]
    %v410 = vld [vmem:[%s401 + $0x40] sm:$0xff]
    %v411 = vld [vmem:[%s401 + $0x48] sm:$0xff]
    %v412 = vld [vmem:[%s401 + $0x50] sm:$0xff]
    %v413 = vld [vmem:[%s401 + $0x58] sm:$0xff]
    %v414 = vld [vmem:[%s401 + $0x60] sm:$0xff]
    %v415 = vld [vmem:[%s401 + $0x68] sm:$0xff]
    %v416 = vld [vmem:[%s401 + $0x70] sm:$0xff]
    %v417 = vld [vmem:[%s401 + $0x78] sm:$0xff]
    %v418 = vld [vmem:[%s401 + $0x80] sm:$0xff]
    %s419 = scalar_lea.vmem [#allocation8], 2
    %v420 = vld [vmem:[%s419] sm:$0x3]
    %v422 = vperm.slane %v420, 0
    %v423 = vperm.slane %v420, 1
    %v443 = vunpack.c.l.b16 %v402
    %v444 = vunpack.c.h.b16 %v402
    %v445 = vunpack.c.l.b16 %v403
    %v446 = vunpack.c.h.b16 %v403
    %v447 = vunpack.c.l.b16 %v404
    %v448 = vunpack.c.h.b16 %v404
    %v449 = vunpack.c.l.b16 %v405
    %v450 = vunpack.c.h.b16 %v405
    %v451 = vunpack.c.l.b16 %v406
    %v452 = vunpack.c.h.b16 %v406
    %v453 = vunpack.c.l.b16 %v407
    %v454 = vunpack.c.h.b16 %v407
    %v455 = vunpack.c.l.b16 %v408
    %v456 = vunpack.c.h.b16 %v408
    %v457 = vunpack.c.l.b16 %v409
    %v458 = vunpack.c.h.b16 %v409
    %v459 = vunpack.c.l.b16 %v410
    %v460 = vunpack.c.h.b16 %v410
    %v461 = vunpack.c.l.b16 %v411
    %v462 = vunpack.c.h.b16 %v411
    %v463 = vunpack.c.l.b16 %v412
    %v464 = vunpack.c.h.b16 %v412
    %v465 = vunpack.c.l.b16 %v413
    %v466 = vunpack.c.h.b16 %v413
    %v467 = vunpack.c.l.b16 %v414
    %v468 = vunpack.c.h.b16 %v414
    %v469 = vunpack.c.l.b16 %v415
    %v470 = vunpack.c.h.b16 %v415
    %v471 = vunpack.c.l.b16 %v416
    %v472 = vunpack.c.h.b16 %v416
    %v473 = vunpack.c.l.b16 %v417
    %v474 = vunpack.c.h.b16 %v417
    %v475 = vunpack.c.l.b16 %v418
    %v476 = vunpack.c.h.b16 %v418
    %v477 = vpack.c.b16 %v445, %v443
    %v478 = vpack.c.b16 %v446, %v444
    %v479 = vpack.c.b16 %v449, %v447
    %v480 = vpack.c.b16 %v450, %v448
    %v481 = vpack.c.b16 %v453, %v451
    %v482 = vpack.c.b16 %v454, %v452
    %v483 = vpack.c.b16 %v457, %v455
    %v484 = vpack.c.b16 %v458, %v456
    %v485 = vpack.c.b16 %v461, %v459
    %v486 = vpack.c.b16 %v462, %v460
    %v487 = vpack.c.b16 %v465, %v463
    %v488 = vpack.c.b16 %v466, %v464
    %v489 = vpack.c.b16 %v469, %v467
    %v490 = vpack.c.b16 %v470, %v468
    %v491 = vpack.c.b16 %v473, %v471
    %v492 = vpack.c.b16 %v474, %v472
    %v493 = vpack.c.b16 %v475, %v475
    %v494 = vpack.c.b16 %v476, %v476
    %v512 = vsel %vm332, %v400, 0
    %v515 = vsel %vm336, %v493, 0
    %v518 = vsel %vm336, %v494, 0
    %520 = vmatpush.bf16.msra.mxu0 %v491
    %521 = vmatpush.bf16.msra.mxu0 %v489
    %522 = vmatpush.bf16.msra.mxu0 %v487
    %523 = vmatpush.bf16.msra.mxu0 %v485
    %524 = vmatpush.bf16.msra.mxu0 %v483
    %525 = vmatpush.bf16.msra.mxu0 %v481
    %526 = vmatpush.bf16.msra.mxu0 %v479
    %527 = vmatpush.bf16.msra.mxu0 %v477
    %528 = vmatmul.bf16.gmra.mxu0 %v399
    %v529 = vpop.f32.mrf.mxu0
    %v530 = vadd.f32 %v422, %v529
    %v531 = vpop.f32.mrf.mxu0
    %532 = vdwg.mxu0
    %533 = vmatpush.bf16.msra.mxu0 0
    %534 = vmatpush.bf16.msra.mxu0 0
    %535 = vmatpush.bf16.msra.mxu0 0
    %536 = vmatpush.bf16.msra.mxu0 0
    %537 = vmatpush.bf16.msra.mxu0 0
    %538 = vmatpush.bf16.msra.mxu0 0
    %539 = vmatpush.bf16.msra.mxu0 0
    %540 = vmatpush.bf16.msra.mxu0 %v515
    %541 = vmatmul.bf16.gmra.mxu0 %v512
    %v542 = vpop.f32.mrf.mxu0
    %v543 = vadd.f32 %v530, %v542
    %v544 = vpop.f32.mrf.mxu0
    %545 = vdwg.mxu0
    %546 = vmatpush.bf16.msra.mxu0 %v492
    %547 = vmatpush.bf16.msra.mxu0 %v490
    %548 = vmatpush.bf16.msra.mxu0 %v488
    %549 = vmatpush.bf16.msra.mxu0 %v486
    %550 = vmatpush.bf16.msra.mxu0 %v484
    %551 = vmatpush.bf16.msra.mxu0 %v482
    %552 = vmatpush.bf16.msra.mxu0 %v480
    %553 = vmatpush.bf16.msra.mxu0 %v478
    %554 = vmatmul.bf16.gmra.mxu0 %v399
    %v555 = vpop.f32.mrf.mxu0
    %v556 = vadd.f32 %v423, %v555
    %v557 = vpop.f32.mrf.mxu0
    %558 = vdwg.mxu0
    %559 = vmatpush.bf16.msra.mxu0 0
    %560 = vmatpush.bf16.msra.mxu0 0
    %561 = vmatpush.bf16.msra.mxu0 0
    %562 = vmatpush.bf16.msra.mxu0 0
    %563 = vmatpush.bf16.msra.mxu0 0
    %564 = vmatpush.bf16.msra.mxu0 0
    %565 = vmatpush.bf16.msra.mxu0 0
    %566 = vmatpush.bf16.msra.mxu0 %v518
    %567 = vmatmul.bf16.gmra.mxu0 %v512
    %v568 = vpop.f32.mrf.mxu0
    %v569 = vadd.f32 %v556, %v568
    %v570 = vpop.f32.mrf.mxu0
    %571 = vdwg.mxu0
    %v572 = vmul.f32 %v543, 0.01
    %v573 = vmul.f32 %v569, 0.01
    %v574 = vmax.f32 %v543, %v572
    %v575 = vmax.f32 %v569, %v573
    %v576 = vpack.c.bf16 %v574, %v574
    %v577 = vpack.c.bf16 %v575, %v575
    %s578 = scalar_lea.vmem [#allocation7], 272
    %v579 = vld [vmem:[%s578] sm:$0xff]
    %v580 = vld [vmem:[%s578 + $0x8] sm:$0xff]
    %v581 = vld [vmem:[%s578 + $0x10] sm:$0xff]
    %v582 = vld [vmem:[%s578 + $0x18] sm:$0xff]
    %v583 = vld [vmem:[%s578 + $0x20] sm:$0xff]
    %v584 = vld [vmem:[%s578 + $0x28] sm:$0xff]
    %v585 = vld [vmem:[%s578 + $0x30] sm:$0xff]
    %v586 = vld [vmem:[%s578 + $0x38] sm:$0xff]
    %v587 = vld [vmem:[%s578 + $0x40] sm:$0xff]
    %v588 = vld [vmem:[%s578 + $0x48] sm:$0xff]
    %v589 = vld [vmem:[%s578 + $0x50] sm:$0xff]
    %v590 = vld [vmem:[%s578 + $0x58] sm:$0xff]
    %v591 = vld [vmem:[%s578 + $0x60] sm:$0xff]
    %v592 = vld [vmem:[%s578 + $0x68] sm:$0xff]
    %v593 = vld [vmem:[%s578 + $0x70] sm:$0xff]
    %v594 = vld [vmem:[%s578 + $0x78] sm:$0xff]
    %v595 = vld [vmem:[%s578 + $0x80] sm:$0xff]
    %s596 = scalar_lea.vmem [#allocation8], 4
    %v597 = vld [vmem:[%s596] sm:$0x3]
    %v599 = vperm.slane %v597, 0
    %v600 = vperm.slane %v597, 1
    %v620 = vunpack.c.l.b16 %v579
    %v621 = vunpack.c.h.b16 %v579
    %v622 = vunpack.c.l.b16 %v580
    %v623 = vunpack.c.h.b16 %v580
    %v624 = vunpack.c.l.b16 %v581
    %v625 = vunpack.c.h.b16 %v581
    %v626 = vunpack.c.l.b16 %v582
    %v627 = vunpack.c.h.b16 %v582
    %v628 = vunpack.c.l.b16 %v583
    %v629 = vunpack.c.h.b16 %v583
    %v630 = vunpack.c.l.b16 %v584
    %v631 = vunpack.c.h.b16 %v584
    %v632 = vunpack.c.l.b16 %v585
    %v633 = vunpack.c.h.b16 %v585
    %v634 = vunpack.c.l.b16 %v586
    %v635 = vunpack.c.h.b16 %v586
    %v636 = vunpack.c.l.b16 %v587
    %v637 = vunpack.c.h.b16 %v587
    %v638 = vunpack.c.l.b16 %v588
    %v639 = vunpack.c.h.b16 %v588
    %v640 = vunpack.c.l.b16 %v589
    %v641 = vunpack.c.h.b16 %v589
    %v642 = vunpack.c.l.b16 %v590
    %v643 = vunpack.c.h.b16 %v590
    %v644 = vunpack.c.l.b16 %v591
    %v645 = vunpack.c.h.b16 %v591
    %v646 = vunpack.c.l.b16 %v592
    %v647 = vunpack.c.h.b16 %v592
    %v648 = vunpack.c.l.b16 %v593
    %v649 = vunpack.c.h.b16 %v593
    %v650 = vunpack.c.l.b16 %v594
    %v651 = vunpack.c.h.b16 %v594
    %v652 = vunpack.c.l.b16 %v595
    %v653 = vunpack.c.h.b16 %v595
    %v654 = vpack.c.b16 %v622, %v620
    %v655 = vpack.c.b16 %v623, %v621
    %v656 = vpack.c.b16 %v626, %v624
    %v657 = vpack.c.b16 %v627, %v625
    %v658 = vpack.c.b16 %v630, %v628
    %v659 = vpack.c.b16 %v631, %v629
    %v660 = vpack.c.b16 %v634, %v632
    %v661 = vpack.c.b16 %v635, %v633
    %v662 = vpack.c.b16 %v638, %v636
    %v663 = vpack.c.b16 %v639, %v637
    %v664 = vpack.c.b16 %v642, %v640
    %v665 = vpack.c.b16 %v643, %v641
    %v666 = vpack.c.b16 %v646, %v644
    %v667 = vpack.c.b16 %v647, %v645
    %v668 = vpack.c.b16 %v650, %v648
    %v669 = vpack.c.b16 %v651, %v649
    %v670 = vpack.c.b16 %v652, %v652
    %v671 = vpack.c.b16 %v653, %v653
    %v689 = vsel %vm332, %v577, 0
    %v692 = vsel %vm336, %v670, 0
    %v695 = vsel %vm336, %v671, 0
    %697 = vmatpush.bf16.msra.mxu0 %v668
    %698 = vmatpush.bf16.msra.mxu0 %v666
    %699 = vmatpush.bf16.msra.mxu0 %v664
    %700 = vmatpush.bf16.msra.mxu0 %v662
    %701 = vmatpush.bf16.msra.mxu0 %v660
    %702 = vmatpush.bf16.msra.mxu0 %v658
    %703 = vmatpush.bf16.msra.mxu0 %v656
    %704 = vmatpush.bf16.msra.mxu0 %v654
    %705 = vmatmul.bf16.gmra.mxu0 %v576
    %v706 = vpop.f32.mrf.mxu0
    %v707 = vadd.f32 %v599, %v706
    %v708 = vpop.f32.mrf.mxu0
    %709 = vdwg.mxu0
    %710 = vmatpush.bf16.msra.mxu0 0
    %711 = vmatpush.bf16.msra.mxu0 0
    %712 = vmatpush.bf16.msra.mxu0 0
    %713 = vmatpush.bf16.msra.mxu0 0
    %714 = vmatpush.bf16.msra.mxu0 0
    %715 = vmatpush.bf16.msra.mxu0 0
    %716 = vmatpush.bf16.msra.mxu0 0
    %717 = vmatpush.bf16.msra.mxu0 %v692
    %718 = vmatmul.bf16.gmra.mxu0 %v689
    %v719 = vpop.f32.mrf.mxu0
    %v720 = vadd.f32 %v707, %v719
    %v721 = vpop.f32.mrf.mxu0
    %722 = vdwg.mxu0
    %723 = vmatpush.bf16.msra.mxu0 %v669
    %724 = vmatpush.bf16.msra.mxu0 %v667
    %725 = vmatpush.bf16.msra.mxu0 %v665
    %726 = vmatpush.bf16.msra.mxu0 %v663
    %727 = vmatpush.bf16.msra.mxu0 %v661
    %728 = vmatpush.bf16.msra.mxu0 %v659
    %729 = vmatpush.bf16.msra.mxu0 %v657
    %730 = vmatpush.bf16.msra.mxu0 %v655
    %731 = vmatmul.bf16.gmra.mxu0 %v576
    %v732 = vpop.f32.mrf.mxu0
    %v733 = vadd.f32 %v600, %v732
    %v734 = vpop.f32.mrf.mxu0
    %735 = vdwg.mxu0
    %736 = vmatpush.bf16.msra.mxu0 0
    %737 = vmatpush.bf16.msra.mxu0 0
    %738 = vmatpush.bf16.msra.mxu0 0
    %739 = vmatpush.bf16.msra.mxu0 0
    %740 = vmatpush.bf16.msra.mxu0 0
    %741 = vmatpush.bf16.msra.mxu0 0
    %742 = vmatpush.bf16.msra.mxu0 0
    %743 = vmatpush.bf16.msra.mxu0 %v695
    %744 = vmatmul.bf16.gmra.mxu0 %v689
    %v745 = vpop.f32.mrf.mxu0
    %v746 = vadd.f32 %v733, %v745
    %v747 = vpop.f32.mrf.mxu0
    %748 = vdwg.mxu0
    %v749 = vmul.f32 %v720, 0.01
    %v750 = vmul.f32 %v746, 0.01
    %v751 = vmax.f32 %v720, %v749
    %v752 = vmax.f32 %v746, %v750
    %v753 = vpack.c.bf16 %v751, %v751
    %v754 = vpack.c.bf16 %v752, %v752
    %s755 = scalar_lea.vmem [#allocation7], 408
    %v756 = vld [vmem:[%s755] sm:$0xff]
    %v757 = vld [vmem:[%s755 + $0x8] sm:$0xff]
    %v758 = vld [vmem:[%s755 + $0x10] sm:$0xff]
    %v759 = vld [vmem:[%s755 + $0x18] sm:$0xff]
    %v760 = vld [vmem:[%s755 + $0x20] sm:$0xff]
    %v761 = vld [vmem:[%s755 + $0x28] sm:$0xff]
    %v762 = vld [vmem:[%s755 + $0x30] sm:$0xff]
    %v763 = vld [vmem:[%s755 + $0x38] sm:$0xff]
    %v764 = vld [vmem:[%s755 + $0x40] sm:$0xff]
    %v765 = vld [vmem:[%s755 + $0x48] sm:$0xff]
    %v766 = vld [vmem:[%s755 + $0x50] sm:$0xff]
    %v767 = vld [vmem:[%s755 + $0x58] sm:$0xff]
    %v768 = vld [vmem:[%s755 + $0x60] sm:$0xff]
    %v769 = vld [vmem:[%s755 + $0x68] sm:$0xff]
    %v770 = vld [vmem:[%s755 + $0x70] sm:$0xff]
    %v771 = vld [vmem:[%s755 + $0x78] sm:$0xff]
    %v772 = vld [vmem:[%s755 + $0x80] sm:$0xff]
    %s773 = scalar_lea.vmem [#allocation8], 6
    %v774 = vld [vmem:[%s773] sm:$0x3]
    %v776 = vperm.slane %v774, 0
    %v777 = vperm.slane %v774, 1
    %v797 = vunpack.c.l.b16 %v756
    %v798 = vunpack.c.h.b16 %v756
    %v799 = vunpack.c.l.b16 %v757
    %v800 = vunpack.c.h.b16 %v757
    %v801 = vunpack.c.l.b16 %v758
    %v802 = vunpack.c.h.b16 %v758
    %v803 = vunpack.c.l.b16 %v759
    %v804 = vunpack.c.h.b16 %v759
    %v805 = vunpack.c.l.b16 %v760
    %v806 = vunpack.c.h.b16 %v760
    %v807 = vunpack.c.l.b16 %v761
    %v808 = vunpack.c.h.b16 %v761
    %v809 = vunpack.c.l.b16 %v762
    %v810 = vunpack.c.h.b16 %v762
    %v811 = vunpack.c.l.b16 %v763
    %v812 = vunpack.c.h.b16 %v763
    %v813 = vunpack.c.l.b16 %v764
    %v814 = vunpack.c.h.b16 %v764
    %v815 = vunpack.c.l.b16 %v765
    %v816 = vunpack.c.h.b16 %v765
    %v817 = vunpack.c.l.b16 %v766
    %v818 = vunpack.c.h.b16 %v766
    %v819 = vunpack.c.l.b16 %v767
    %v820 = vunpack.c.h.b16 %v767
    %v821 = vunpack.c.l.b16 %v768
    %v822 = vunpack.c.h.b16 %v768
    %v823 = vunpack.c.l.b16 %v769
    %v824 = vunpack.c.h.b16 %v769
    %v825 = vunpack.c.l.b16 %v770
    %v826 = vunpack.c.h.b16 %v770
    %v827 = vunpack.c.l.b16 %v771
    %v828 = vunpack.c.h.b16 %v771
    %v829 = vunpack.c.l.b16 %v772
    %v830 = vunpack.c.h.b16 %v772
    %v831 = vpack.c.b16 %v799, %v797
    %v832 = vpack.c.b16 %v800, %v798
    %v833 = vpack.c.b16 %v803, %v801
    %v834 = vpack.c.b16 %v804, %v802
    %v835 = vpack.c.b16 %v807, %v805
    %v836 = vpack.c.b16 %v808, %v806
    %v837 = vpack.c.b16 %v811, %v809
    %v838 = vpack.c.b16 %v812, %v810
    %v839 = vpack.c.b16 %v815, %v813
    %v840 = vpack.c.b16 %v816, %v814
    %v841 = vpack.c.b16 %v819, %v817
    %v842 = vpack.c.b16 %v820, %v818
    %v843 = vpack.c.b16 %v823, %v821
    %v844 = vpack.c.b16 %v824, %v822
    %v845 = vpack.c.b16 %v827, %v825
    %v846 = vpack.c.b16 %v828, %v826
    %v847 = vpack.c.b16 %v829, %v829
    %v848 = vpack.c.b16 %v830, %v830
    %v866 = vsel %vm332, %v754, 0
    %v869 = vsel %vm336, %v847, 0
    %v872 = vsel %vm336, %v848, 0
    %874 = vmatpush.bf16.msra.mxu0 %v845
    %875 = vmatpush.bf16.msra.mxu0 %v843
    %876 = vmatpush.bf16.msra.mxu0 %v841
    %877 = vmatpush.bf16.msra.mxu0 %v839
    %878 = vmatpush.bf16.msra.mxu0 %v837
    %879 = vmatpush.bf16.msra.mxu0 %v835
    %880 = vmatpush.bf16.msra.mxu0 %v833
    %881 = vmatpush.bf16.msra.mxu0 %v831
    %882 = vmatmul.bf16.gmra.mxu0 %v753
    %v883 = vpop.f32.mrf.mxu0
    %v884 = vadd.f32 %v776, %v883
    %v885 = vpop.f32.mrf.mxu0
    %886 = vdwg.mxu0
    %887 = vmatpush.bf16.msra.mxu0 0
    %888 = vmatpush.bf16.msra.mxu0 0
    %889 = vmatpush.bf16.msra.mxu0 0
    %890 = vmatpush.bf16.msra.mxu0 0
    %891 = vmatpush.bf16.msra.mxu0 0
    %892 = vmatpush.bf16.msra.mxu0 0
    %893 = vmatpush.bf16.msra.mxu0 0
    %894 = vmatpush.bf16.msra.mxu0 %v869
    %895 = vmatmul.bf16.gmra.mxu0 %v866
    %v896 = vpop.f32.mrf.mxu0
    %v897 = vadd.f32 %v884, %v896
    %v898 = vpop.f32.mrf.mxu0
    %899 = vdwg.mxu0
    %900 = vmatpush.bf16.msra.mxu0 %v846
    %901 = vmatpush.bf16.msra.mxu0 %v844
    %902 = vmatpush.bf16.msra.mxu0 %v842
    %903 = vmatpush.bf16.msra.mxu0 %v840
    %904 = vmatpush.bf16.msra.mxu0 %v838
    %905 = vmatpush.bf16.msra.mxu0 %v836
    %906 = vmatpush.bf16.msra.mxu0 %v834
    %907 = vmatpush.bf16.msra.mxu0 %v832
    %908 = vmatmul.bf16.gmra.mxu0 %v753
    %v909 = vpop.f32.mrf.mxu0
    %v910 = vadd.f32 %v777, %v909
    %v911 = vpop.f32.mrf.mxu0
    %912 = vdwg.mxu0
    %913 = vmatpush.bf16.msra.mxu0 0
    %914 = vmatpush.bf16.msra.mxu0 0
    %915 = vmatpush.bf16.msra.mxu0 0
    %916 = vmatpush.bf16.msra.mxu0 0
    %917 = vmatpush.bf16.msra.mxu0 0
    %918 = vmatpush.bf16.msra.mxu0 0
    %919 = vmatpush.bf16.msra.mxu0 0
    %920 = vmatpush.bf16.msra.mxu0 %v872
    %921 = vmatmul.bf16.gmra.mxu0 %v866
    %v922 = vpop.f32.mrf.mxu0
    %v923 = vadd.f32 %v910, %v922
    %v924 = vpop.f32.mrf.mxu0
    %925 = vdwg.mxu0
    %v926 = vmul.f32 %v897, 0.01
    %v927 = vmul.f32 %v923, 0.01
    %v928 = vmax.f32 %v897, %v926
    %v929 = vmax.f32 %v923, %v927
    %v930 = vpack.c.bf16 %v928, %v928
    %v931 = vpack.c.bf16 %v929, %v929
    %s932 = scalar_lea.vmem [#allocation7], 544
    %v933 = vld [vmem:[%s932] sm:$0xff]
    %v934 = vld [vmem:[%s932 + $0x8] sm:$0xff]
    %v935 = vld [vmem:[%s932 + $0x10] sm:$0xff]
    %v936 = vld [vmem:[%s932 + $0x18] sm:$0xff]
    %v937 = vld [vmem:[%s932 + $0x20] sm:$0xff]
    %v938 = vld [vmem:[%s932 + $0x28] sm:$0xff]
    %v939 = vld [vmem:[%s932 + $0x30] sm:$0xff]
    %v940 = vld [vmem:[%s932 + $0x38] sm:$0xff]
    %v941 = vld [vmem:[%s932 + $0x40] sm:$0xff]
    %v942 = vld [vmem:[%s932 + $0x48] sm:$0xff]
    %v943 = vld [vmem:[%s932 + $0x50] sm:$0xff]
    %v944 = vld [vmem:[%s932 + $0x58] sm:$0xff]
    %v945 = vld [vmem:[%s932 + $0x60] sm:$0xff]
    %v946 = vld [vmem:[%s932 + $0x68] sm:$0xff]
    %v947 = vld [vmem:[%s932 + $0x70] sm:$0xff]
    %v948 = vld [vmem:[%s932 + $0x78] sm:$0xff]
    %v949 = vld [vmem:[%s932 + $0x80] sm:$0xff]
    %s950 = scalar_lea.vmem [#allocation8], 8
    %v951 = vld [vmem:[%s950] sm:$0x3]
    %v953 = vperm.slane %v951, 0
    %v954 = vperm.slane %v951, 1
    %v974 = vunpack.c.l.b16 %v933
    %v975 = vunpack.c.h.b16 %v933
    %v976 = vunpack.c.l.b16 %v934
    %v977 = vunpack.c.h.b16 %v934
    %v978 = vunpack.c.l.b16 %v935
    %v979 = vunpack.c.h.b16 %v935
    %v980 = vunpack.c.l.b16 %v936
    %v981 = vunpack.c.h.b16 %v936
    %v982 = vunpack.c.l.b16 %v937
    %v983 = vunpack.c.h.b16 %v937
    %v984 = vunpack.c.l.b16 %v938
    %v985 = vunpack.c.h.b16 %v938
    %v986 = vunpack.c.l.b16 %v939
    %v987 = vunpack.c.h.b16 %v939
    %v988 = vunpack.c.l.b16 %v940
    %v989 = vunpack.c.h.b16 %v940
    %v990 = vunpack.c.l.b16 %v941
    %v991 = vunpack.c.h.b16 %v941
    %v992 = vunpack.c.l.b16 %v942
    %v993 = vunpack.c.h.b16 %v942
    %v994 = vunpack.c.l.b16 %v943
    %v995 = vunpack.c.h.b16 %v943
    %v996 = vunpack.c.l.b16 %v944
    %v997 = vunpack.c.h.b16 %v944
    %v998 = vunpack.c.l.b16 %v945
    %v999 = vunpack.c.h.b16 %v945
    %v1000 = vunpack.c.l.b16 %v946
    %v1001 = vunpack.c.h.b16 %v946
    %v1002 = vunpack.c.l.b16 %v947
    %v1003 = vunpack.c.h.b16 %v947
    %v1004 = vunpack.c.l.b16 %v948
    %v1005 = vunpack.c.h.b16 %v948
    %v1006 = vunpack.c.l.b16 %v949
    %v1007 = vunpack.c.h.b16 %v949
    %v1008 = vpack.c.b16 %v976, %v974
    %v1009 = vpack.c.b16 %v977, %v975
    %v1010 = vpack.c.b16 %v980, %v978
    %v1011 = vpack.c.b16 %v981, %v979
    %v1012 = vpack.c.b16 %v984, %v982
    %v1013 = vpack.c.b16 %v985, %v983
    %v1014 = vpack.c.b16 %v988, %v986
    %v1015 = vpack.c.b16 %v989, %v987
    %v1016 = vpack.c.b16 %v992, %v990
    %v1017 = vpack.c.b16 %v993, %v991
    %v1018 = vpack.c.b16 %v996, %v994
    %v1019 = vpack.c.b16 %v997, %v995
    %v1020 = vpack.c.b16 %v1000, %v998
    %v1021 = vpack.c.b16 %v1001, %v999
    %v1022 = vpack.c.b16 %v1004, %v1002
    %v1023 = vpack.c.b16 %v1005, %v1003
    %v1024 = vpack.c.b16 %v1006, %v1006
    %v1025 = vpack.c.b16 %v1007, %v1007
    %v1043 = vsel %vm332, %v931, 0
    %v1046 = vsel %vm336, %v1024, 0
    %v1049 = vsel %vm336, %v1025, 0
    %1051 = vmatpush.bf16.msra.mxu0 %v1022
    %1052 = vmatpush.bf16.msra.mxu0 %v1020
    %1053 = vmatpush.bf16.msra.mxu0 %v1018
    %1054 = vmatpush.bf16.msra.mxu0 %v1016
    %1055 = vmatpush.bf16.msra.mxu0 %v1014
    %1056 = vmatpush.bf16.msra.mxu0 %v1012
    %1057 = vmatpush.bf16.msra.mxu0 %v1010
    %1058 = vmatpush.bf16.msra.mxu0 %v1008
    %1059 = vmatmul.bf16.gmra.mxu0 %v930
    %v1060 = vpop.f32.mrf.mxu0
    %v1061 = vadd.f32 %v953, %v1060
    %v1062 = vpop.f32.mrf.mxu0
    %1063 = vdwg.mxu0
    %1064 = vmatpush.bf16.msra.mxu0 0
    %1065 = vmatpush.bf16.msra.mxu0 0
    %1066 = vmatpush.bf16.msra.mxu0 0
    %1067 = vmatpush.bf16.msra.mxu0 0
    %1068 = vmatpush.bf16.msra.mxu0 0
    %1069 = vmatpush.bf16.msra.mxu0 0
    %1070 = vmatpush.bf16.msra.mxu0 0
    %1071 = vmatpush.bf16.msra.mxu0 %v1046
    %1072 = vmatmul.bf16.gmra.mxu0 %v1043
    %v1073 = vpop.f32.mrf.mxu0
    %v1074 = vadd.f32 %v1061, %v1073
    %v1075 = vpop.f32.mrf.mxu0
    %1076 = vdwg.mxu0
    %1077 = vmatpush.bf16.msra.mxu0 %v1023
    %1078 = vmatpush.bf16.msra.mxu0 %v1021
    %1079 = vmatpush.bf16.msra.mxu0 %v1019
    %1080 = vmatpush.bf16.msra.mxu0 %v1017
    %1081 = vmatpush.bf16.msra.mxu0 %v1015
    %1082 = vmatpush.bf16.msra.mxu0 %v1013
    %1083 = vmatpush.bf16.msra.mxu0 %v1011
    %1084 = vmatpush.bf16.msra.mxu0 %v1009
    %1085 = vmatmul.bf16.gmra.mxu0 %v930
    %v1086 = vpop.f32.mrf.mxu0
    %v1087 = vadd.f32 %v954, %v1086
    %v1088 = vpop.f32.mrf.mxu0
    %1089 = vdwg.mxu0
    %1090 = vmatpush.bf16.msra.mxu0 0
    %1091 = vmatpush.bf16.msra.mxu0 0
    %1092 = vmatpush.bf16.msra.mxu0 0
    %1093 = vmatpush.bf16.msra.mxu0 0
    %1094 = vmatpush.bf16.msra.mxu0 0
    %1095 = vmatpush.bf16.msra.mxu0 0
    %1096 = vmatpush.bf16.msra.mxu0 0
    %1097 = vmatpush.bf16.msra.mxu0 %v1049
    %1098 = vmatmul.bf16.gmra.mxu0 %v1043
    %v1099 = vpop.f32.mrf.mxu0
    %v1100 = vadd.f32 %v1087, %v1099
    %v1101 = vpop.f32.mrf.mxu0
    %1102 = vdwg.mxu0
    %v1103 = vmul.f32 %v1074, 0.01
    %v1104 = vmul.f32 %v1100, 0.01
    %v1105 = vmax.f32 %v1074, %v1103
    %v1106 = vmax.f32 %v1100, %v1104
    %v1107 = vpack.c.bf16 %v1105, %v1105
    %v1108 = vpack.c.bf16 %v1106, %v1106
    %s1109 = scalar_lea.vmem [#allocation7], 680
    %v1110 = vld [vmem:[%s1109] sm:$0xff]
    %v1111 = vld [vmem:[%s1109 + $0x8] sm:$0xff]
    %v1112 = vld [vmem:[%s1109 + $0x10] sm:$0xff]
    %v1113 = vld [vmem:[%s1109 + $0x18] sm:$0xff]
    %v1114 = vld [vmem:[%s1109 + $0x20] sm:$0xff]
    %v1115 = vld [vmem:[%s1109 + $0x28] sm:$0xff]
    %v1116 = vld [vmem:[%s1109 + $0x30] sm:$0xff]
    %v1117 = vld [vmem:[%s1109 + $0x38] sm:$0xff]
    %v1118 = vld [vmem:[%s1109 + $0x40] sm:$0xff]
    %v1119 = vld [vmem:[%s1109 + $0x48] sm:$0xff]
    %v1120 = vld [vmem:[%s1109 + $0x50] sm:$0xff]
    %v1121 = vld [vmem:[%s1109 + $0x58] sm:$0xff]
    %v1122 = vld [vmem:[%s1109 + $0x60] sm:$0xff]
    %v1123 = vld [vmem:[%s1109 + $0x68] sm:$0xff]
    %v1124 = vld [vmem:[%s1109 + $0x70] sm:$0xff]
    %v1125 = vld [vmem:[%s1109 + $0x78] sm:$0xff]
    %v1126 = vld [vmem:[%s1109 + $0x80] sm:$0xff]
    %s1127 = scalar_lea.vmem [#allocation8], 10
    %v1128 = vld [vmem:[%s1127] sm:$0x3]
    %v1130 = vperm.slane %v1128, 0
    %v1131 = vperm.slane %v1128, 1
    %v1151 = vunpack.c.l.b16 %v1110
    %v1152 = vunpack.c.h.b16 %v1110
    %v1153 = vunpack.c.l.b16 %v1111
    %v1154 = vunpack.c.h.b16 %v1111
    %v1155 = vunpack.c.l.b16 %v1112
    %v1156 = vunpack.c.h.b16 %v1112
    %v1157 = vunpack.c.l.b16 %v1113
    %v1158 = vunpack.c.h.b16 %v1113
    %v1159 = vunpack.c.l.b16 %v1114
    %v1160 = vunpack.c.h.b16 %v1114
    %v1161 = vunpack.c.l.b16 %v1115
    %v1162 = vunpack.c.h.b16 %v1115
    %v1163 = vunpack.c.l.b16 %v1116
    %v1164 = vunpack.c.h.b16 %v1116
    %v1165 = vunpack.c.l.b16 %v1117
    %v1166 = vunpack.c.h.b16 %v1117
    %v1167 = vunpack.c.l.b16 %v1118
    %v1168 = vunpack.c.h.b16 %v1118
    %v1169 = vunpack.c.l.b16 %v1119
    %v1170 = vunpack.c.h.b16 %v1119
    %v1171 = vunpack.c.l.b16 %v1120
    %v1172 = vunpack.c.h.b16 %v1120
    %v1173 = vunpack.c.l.b16 %v1121
    %v1174 = vunpack.c.h.b16 %v1121
    %v1175 = vunpack.c.l.b16 %v1122
    %v1176 = vunpack.c.h.b16 %v1122
    %v1177 = vunpack.c.l.b16 %v1123
    %v1178 = vunpack.c.h.b16 %v1123
    %v1179 = vunpack.c.l.b16 %v1124
    %v1180 = vunpack.c.h.b16 %v1124
    %v1181 = vunpack.c.l.b16 %v1125
    %v1182 = vunpack.c.h.b16 %v1125
    %v1183 = vunpack.c.l.b16 %v1126
    %v1184 = vunpack.c.h.b16 %v1126
    %v1185 = vpack.c.b16 %v1153, %v1151
    %v1186 = vpack.c.b16 %v1154, %v1152
    %v1187 = vpack.c.b16 %v1157, %v1155
    %v1188 = vpack.c.b16 %v1158, %v1156
    %v1189 = vpack.c.b16 %v1161, %v1159
    %v1190 = vpack.c.b16 %v1162, %v1160
    %v1191 = vpack.c.b16 %v1165, %v1163
    %v1192 = vpack.c.b16 %v1166, %v1164
    %v1193 = vpack.c.b16 %v1169, %v1167
    %v1194 = vpack.c.b16 %v1170, %v1168
    %v1195 = vpack.c.b16 %v1173, %v1171
    %v1196 = vpack.c.b16 %v1174, %v1172
    %v1197 = vpack.c.b16 %v1177, %v1175
    %v1198 = vpack.c.b16 %v1178, %v1176
    %v1199 = vpack.c.b16 %v1181, %v1179
    %v1200 = vpack.c.b16 %v1182, %v1180
    %v1201 = vpack.c.b16 %v1183, %v1183
    %v1202 = vpack.c.b16 %v1184, %v1184
    %v1220 = vsel %vm332, %v1108, 0
    %v1223 = vsel %vm336, %v1201, 0
    %v1226 = vsel %vm336, %v1202, 0
    %1228 = vmatpush.bf16.msra.mxu0 %v1199
    %1229 = vmatpush.bf16.msra.mxu0 %v1197
    %1230 = vmatpush.bf16.msra.mxu0 %v1195
    %1231 = vmatpush.bf16.msra.mxu0 %v1193
    %1232 = vmatpush.bf16.msra.mxu0 %v1191
    %1233 = vmatpush.bf16.msra.mxu0 %v1189
    %1234 = vmatpush.bf16.msra.mxu0 %v1187
    %1235 = vmatpush.bf16.msra.mxu0 %v1185
    %1236 = vmatmul.bf16.gmra.mxu0 %v1107
    %v1237 = vpop.f32.mrf.mxu0
    %v1238 = vadd.f32 %v1130, %v1237
    %v1239 = vpop.f32.mrf.mxu0
    %1240 = vdwg.mxu0
    %1241 = vmatpush.bf16.msra.mxu0 0
    %1242 = vmatpush.bf16.msra.mxu0 0
    %1243 = vmatpush.bf16.msra.mxu0 0
    %1244 = vmatpush.bf16.msra.mxu0 0
    %1245 = vmatpush.bf16.msra.mxu0 0
    %1246 = vmatpush.bf16.msra.mxu0 0
    %1247 = vmatpush.bf16.msra.mxu0 0
    %1248 = vmatpush.bf16.msra.mxu0 %v1223
    %1249 = vmatmul.bf16.gmra.mxu0 %v1220
    %v1250 = vpop.f32.mrf.mxu0
    %v1251 = vadd.f32 %v1238, %v1250
    %v1252 = vpop.f32.mrf.mxu0
    %1253 = vdwg.mxu0
    %1254 = vmatpush.bf16.msra.mxu0 %v1200
    %1255 = vmatpush.bf16.msra.mxu0 %v1198
    %1256 = vmatpush.bf16.msra.mxu0 %v1196
    %1257 = vmatpush.bf16.msra.mxu0 %v1194
    %1258 = vmatpush.bf16.msra.mxu0 %v1192
    %1259 = vmatpush.bf16.msra.mxu0 %v1190
    %1260 = vmatpush.bf16.msra.mxu0 %v1188
    %1261 = vmatpush.bf16.msra.mxu0 %v1186
    %1262 = vmatmul.bf16.gmra.mxu0 %v1107
    %v1263 = vpop.f32.mrf.mxu0
    %v1264 = vadd.f32 %v1131, %v1263
    %v1265 = vpop.f32.mrf.mxu0
    %1266 = vdwg.mxu0
    %1267 = vmatpush.bf16.msra.mxu0 0
    %1268 = vmatpush.bf16.msra.mxu0 0
    %1269 = vmatpush.bf16.msra.mxu0 0
    %1270 = vmatpush.bf16.msra.mxu0 0
    %1271 = vmatpush.bf16.msra.mxu0 0
    %1272 = vmatpush.bf16.msra.mxu0 0
    %1273 = vmatpush.bf16.msra.mxu0 0
    %1274 = vmatpush.bf16.msra.mxu0 %v1226
    %1275 = vmatmul.bf16.gmra.mxu0 %v1220
    %v1276 = vpop.f32.mrf.mxu0
    %v1277 = vadd.f32 %v1264, %v1276
    %v1278 = vpop.f32.mrf.mxu0
    %1279 = vdwg.mxu0
    %v1280 = vmul.f32 %v1251, 0.01
    %v1281 = vmul.f32 %v1277, 0.01
    %v1282 = vmax.f32 %v1251, %v1280
    %v1283 = vmax.f32 %v1277, %v1281
    %v1284 = vpack.c.bf16 %v1282, %v1282
    %v1285 = vpack.c.bf16 %v1283, %v1283
    %s1286 = scalar_lea.vmem [#allocation7], 816
    %v1287 = vld [vmem:[%s1286] sm:$0xff]
    %v1288 = vld [vmem:[%s1286 + $0x8] sm:$0xff]
    %v1289 = vld [vmem:[%s1286 + $0x10] sm:$0xff]
    %v1290 = vld [vmem:[%s1286 + $0x18] sm:$0xff]
    %v1291 = vld [vmem:[%s1286 + $0x20] sm:$0xff]
    %v1292 = vld [vmem:[%s1286 + $0x28] sm:$0xff]
    %v1293 = vld [vmem:[%s1286 + $0x30] sm:$0xff]
    %v1294 = vld [vmem:[%s1286 + $0x38] sm:$0xff]
    %v1295 = vld [vmem:[%s1286 + $0x40] sm:$0xff]
    %v1296 = vld [vmem:[%s1286 + $0x48] sm:$0xff]
    %v1297 = vld [vmem:[%s1286 + $0x50] sm:$0xff]
    %v1298 = vld [vmem:[%s1286 + $0x58] sm:$0xff]
    %v1299 = vld [vmem:[%s1286 + $0x60] sm:$0xff]
    %v1300 = vld [vmem:[%s1286 + $0x68] sm:$0xff]
    %v1301 = vld [vmem:[%s1286 + $0x70] sm:$0xff]
    %v1302 = vld [vmem:[%s1286 + $0x78] sm:$0xff]
    %v1303 = vld [vmem:[%s1286 + $0x80] sm:$0xff]
    %s1304 = scalar_lea.vmem [#allocation8], 12
    %v1305 = vld [vmem:[%s1304] sm:$0x3]
    %v1307 = vperm.slane %v1305, 0
    %v1308 = vperm.slane %v1305, 1
    %v1328 = vunpack.c.l.b16 %v1287
    %v1329 = vunpack.c.h.b16 %v1287
    %v1330 = vunpack.c.l.b16 %v1288
    %v1331 = vunpack.c.h.b16 %v1288
    %v1332 = vunpack.c.l.b16 %v1289
    %v1333 = vunpack.c.h.b16 %v1289
    %v1334 = vunpack.c.l.b16 %v1290
    %v1335 = vunpack.c.h.b16 %v1290
    %v1336 = vunpack.c.l.b16 %v1291
    %v1337 = vunpack.c.h.b16 %v1291
    %v1338 = vunpack.c.l.b16 %v1292
    %v1339 = vunpack.c.h.b16 %v1292
    %v1340 = vunpack.c.l.b16 %v1293
    %v1341 = vunpack.c.h.b16 %v1293
    %v1342 = vunpack.c.l.b16 %v1294
    %v1343 = vunpack.c.h.b16 %v1294
    %v1344 = vunpack.c.l.b16 %v1295
    %v1345 = vunpack.c.h.b16 %v1295
    %v1346 = vunpack.c.l.b16 %v1296
    %v1347 = vunpack.c.h.b16 %v1296
    %v1348 = vunpack.c.l.b16 %v1297
    %v1349 = vunpack.c.h.b16 %v1297
    %v1350 = vunpack.c.l.b16 %v1298
    %v1351 = vunpack.c.h.b16 %v1298
    %v1352 = vunpack.c.l.b16 %v1299
    %v1353 = vunpack.c.h.b16 %v1299
    %v1354 = vunpack.c.l.b16 %v1300
    %v1355 = vunpack.c.h.b16 %v1300
    %v1356 = vunpack.c.l.b16 %v1301
    %v1357 = vunpack.c.h.b16 %v1301
    %v1358 = vunpack.c.l.b16 %v1302
    %v1359 = vunpack.c.h.b16 %v1302
    %v1360 = vunpack.c.l.b16 %v1303
    %v1361 = vunpack.c.h.b16 %v1303
    %v1362 = vpack.c.b16 %v1330, %v1328
    %v1363 = vpack.c.b16 %v1331, %v1329
    %v1364 = vpack.c.b16 %v1334, %v1332
    %v1365 = vpack.c.b16 %v1335, %v1333
    %v1366 = vpack.c.b16 %v1338, %v1336
    %v1367 = vpack.c.b16 %v1339, %v1337
    %v1368 = vpack.c.b16 %v1342, %v1340
    %v1369 = vpack.c.b16 %v1343, %v1341
    %v1370 = vpack.c.b16 %v1346, %v1344
    %v1371 = vpack.c.b16 %v1347, %v1345
    %v1372 = vpack.c.b16 %v1350, %v1348
    %v1373 = vpack.c.b16 %v1351, %v1349
    %v1374 = vpack.c.b16 %v1354, %v1352
    %v1375 = vpack.c.b16 %v1355, %v1353
    %v1376 = vpack.c.b16 %v1358, %v1356
    %v1377 = vpack.c.b16 %v1359, %v1357
    %v1378 = vpack.c.b16 %v1360, %v1360
    %v1379 = vpack.c.b16 %v1361, %v1361
    %v1397 = vsel %vm332, %v1285, 0
    %v1400 = vsel %vm336, %v1378, 0
    %v1403 = vsel %vm336, %v1379, 0
    %1405 = vmatpush.bf16.msra.mxu0 %v1376
    %1406 = vmatpush.bf16.msra.mxu0 %v1374
    %1407 = vmatpush.bf16.msra.mxu0 %v1372
    %1408 = vmatpush.bf16.msra.mxu0 %v1370
    %1409 = vmatpush.bf16.msra.mxu0 %v1368
    %1410 = vmatpush.bf16.msra.mxu0 %v1366
    %1411 = vmatpush.bf16.msra.mxu0 %v1364
    %1412 = vmatpush.bf16.msra.mxu0 %v1362
    %1413 = vmatmul.bf16.gmra.mxu0 %v1284
    %v1414 = vpop.f32.mrf.mxu0
    %v1415 = vadd.f32 %v1307, %v1414
    %v1416 = vpop.f32.mrf.mxu0
    %1417 = vdwg.mxu0
    %1418 = vmatpush.bf16.msra.mxu0 0
    %1419 = vmatpush.bf16.msra.mxu0 0
    %1420 = vmatpush.bf16.msra.mxu0 0
    %1421 = vmatpush.bf16.msra.mxu0 0
    %1422 = vmatpush.bf16.msra.mxu0 0
    %1423 = vmatpush.bf16.msra.mxu0 0
    %1424 = vmatpush.bf16.msra.mxu0 0
    %1425 = vmatpush.bf16.msra.mxu0 %v1400
    %1426 = vmatmul.bf16.gmra.mxu0 %v1397
    %v1427 = vpop.f32.mrf.mxu0
    %v1428 = vadd.f32 %v1415, %v1427
    %v1429 = vpop.f32.mrf.mxu0
    %1430 = vdwg.mxu0
    %1431 = vmatpush.bf16.msra.mxu0 %v1377
    %1432 = vmatpush.bf16.msra.mxu0 %v1375
    %1433 = vmatpush.bf16.msra.mxu0 %v1373
    %1434 = vmatpush.bf16.msra.mxu0 %v1371
    %1435 = vmatpush.bf16.msra.mxu0 %v1369
    %1436 = vmatpush.bf16.msra.mxu0 %v1367
    %1437 = vmatpush.bf16.msra.mxu0 %v1365
    %1438 = vmatpush.bf16.msra.mxu0 %v1363
    %1439 = vmatmul.bf16.gmra.mxu0 %v1284
    %v1440 = vpop.f32.mrf.mxu0
    %v1441 = vadd.f32 %v1308, %v1440
    %v1442 = vpop.f32.mrf.mxu0
    %1443 = vdwg.mxu0
    %1444 = vmatpush.bf16.msra.mxu0 0
    %1445 = vmatpush.bf16.msra.mxu0 0
    %1446 = vmatpush.bf16.msra.mxu0 0
    %1447 = vmatpush.bf16.msra.mxu0 0
    %1448 = vmatpush.bf16.msra.mxu0 0
    %1449 = vmatpush.bf16.msra.mxu0 0
    %1450 = vmatpush.bf16.msra.mxu0 0
    %1451 = vmatpush.bf16.msra.mxu0 %v1403
    %1452 = vmatmul.bf16.gmra.mxu0 %v1397
    %v1453 = vpop.f32.mrf.mxu0
    %v1454 = vadd.f32 %v1441, %v1453
    %v1455 = vpop.f32.mrf.mxu0
    %1456 = vdwg.mxu0
    %v1457 = vmul.f32 %v1428, 0.01
    %v1458 = vmul.f32 %v1454, 0.01
    %v1459 = vmax.f32 %v1428, %v1457
    %v1460 = vmax.f32 %v1454, %v1458
    %v1461 = vpack.c.bf16 %v1459, %v1459
    %v1462 = vpack.c.bf16 %v1460, %v1460
    %s1463 = scalar_lea.vmem [#allocation7], 952
    %v1464 = vld [vmem:[%s1463] sm:$0xff]
    %v1465 = vld [vmem:[%s1463 + $0x8] sm:$0xff]
    %v1466 = vld [vmem:[%s1463 + $0x10] sm:$0xff]
    %v1467 = vld [vmem:[%s1463 + $0x18] sm:$0xff]
    %v1468 = vld [vmem:[%s1463 + $0x20] sm:$0xff]
    %v1469 = vld [vmem:[%s1463 + $0x28] sm:$0xff]
    %v1470 = vld [vmem:[%s1463 + $0x30] sm:$0xff]
    %v1471 = vld [vmem:[%s1463 + $0x38] sm:$0xff]
    %v1472 = vld [vmem:[%s1463 + $0x40] sm:$0xff]
    %v1473 = vld [vmem:[%s1463 + $0x48] sm:$0xff]
    %v1474 = vld [vmem:[%s1463 + $0x50] sm:$0xff]
    %v1475 = vld [vmem:[%s1463 + $0x58] sm:$0xff]
    %v1476 = vld [vmem:[%s1463 + $0x60] sm:$0xff]
    %v1477 = vld [vmem:[%s1463 + $0x68] sm:$0xff]
    %v1478 = vld [vmem:[%s1463 + $0x70] sm:$0xff]
    %v1479 = vld [vmem:[%s1463 + $0x78] sm:$0xff]
    %v1480 = vld [vmem:[%s1463 + $0x80] sm:$0xff]
    %s1481 = scalar_lea.vmem [#allocation8], 14
    %v1482 = vld [vmem:[%s1481] sm:$0x3]
    %v1484 = vperm.slane %v1482, 0
    %v1485 = vperm.slane %v1482, 1
    %v1505 = vunpack.c.l.b16 %v1464
    %v1506 = vunpack.c.h.b16 %v1464
    %v1507 = vunpack.c.l.b16 %v1465
    %v1508 = vunpack.c.h.b16 %v1465
    %v1509 = vunpack.c.l.b16 %v1466
    %v1510 = vunpack.c.h.b16 %v1466
    %v1511 = vunpack.c.l.b16 %v1467
    %v1512 = vunpack.c.h.b16 %v1467
    %v1513 = vunpack.c.l.b16 %v1468
    %v1514 = vunpack.c.h.b16 %v1468
    %v1515 = vunpack.c.l.b16 %v1469
    %v1516 = vunpack.c.h.b16 %v1469
    %v1517 = vunpack.c.l.b16 %v1470
    %v1518 = vunpack.c.h.b16 %v1470
    %v1519 = vunpack.c.l.b16 %v1471
    %v1520 = vunpack.c.h.b16 %v1471
    %v1521 = vunpack.c.l.b16 %v1472
    %v1522 = vunpack.c.h.b16 %v1472
    %v1523 = vunpack.c.l.b16 %v1473
    %v1524 = vunpack.c.h.b16 %v1473
    %v1525 = vunpack.c.l.b16 %v1474
    %v1526 = vunpack.c.h.b16 %v1474
    %v1527 = vunpack.c.l.b16 %v1475
    %v1528 = vunpack.c.h.b16 %v1475
    %v1529 = vunpack.c.l.b16 %v1476
    %v1530 = vunpack.c.h.b16 %v1476
    %v1531 = vunpack.c.l.b16 %v1477
    %v1532 = vunpack.c.h.b16 %v1477
    %v1533 = vunpack.c.l.b16 %v1478
    %v1534 = vunpack.c.h.b16 %v1478
    %v1535 = vunpack.c.l.b16 %v1479
    %v1536 = vunpack.c.h.b16 %v1479
    %v1537 = vunpack.c.l.b16 %v1480
    %v1538 = vunpack.c.h.b16 %v1480
    %v1539 = vpack.c.b16 %v1507, %v1505
    %v1540 = vpack.c.b16 %v1508, %v1506
    %v1541 = vpack.c.b16 %v1511, %v1509
    %v1542 = vpack.c.b16 %v1512, %v1510
    %v1543 = vpack.c.b16 %v1515, %v1513
    %v1544 = vpack.c.b16 %v1516, %v1514
    %v1545 = vpack.c.b16 %v1519, %v1517
    %v1546 = vpack.c.b16 %v1520, %v1518
    %v1547 = vpack.c.b16 %v1523, %v1521
    %v1548 = vpack.c.b16 %v1524, %v1522
    %v1549 = vpack.c.b16 %v1527, %v1525
    %v1550 = vpack.c.b16 %v1528, %v1526
    %v1551 = vpack.c.b16 %v1531, %v1529
    %v1552 = vpack.c.b16 %v1532, %v1530
    %v1553 = vpack.c.b16 %v1535, %v1533
    %v1554 = vpack.c.b16 %v1536, %v1534
    %v1555 = vpack.c.b16 %v1537, %v1537
    %v1556 = vpack.c.b16 %v1538, %v1538
    %v1574 = vsel %vm332, %v1462, 0
    %v1577 = vsel %vm336, %v1555, 0
    %v1580 = vsel %vm336, %v1556, 0
    %1582 = vmatpush.bf16.msra.mxu0 %v1553
    %1583 = vmatpush.bf16.msra.mxu0 %v1551
    %1584 = vmatpush.bf16.msra.mxu0 %v1549
    %1585 = vmatpush.bf16.msra.mxu0 %v1547
    %1586 = vmatpush.bf16.msra.mxu0 %v1545
    %1587 = vmatpush.bf16.msra.mxu0 %v1543
    %1588 = vmatpush.bf16.msra.mxu0 %v1541
    %1589 = vmatpush.bf16.msra.mxu0 %v1539
    %1590 = vmatmul.bf16.gmra.mxu0 %v1461
    %v1591 = vpop.f32.mrf.mxu0
    %v1592 = vadd.f32 %v1484, %v1591
    %v1593 = vpop.f32.mrf.mxu0
    %1594 = vdwg.mxu0
    %1595 = vmatpush.bf16.msra.mxu0 0
    %1596 = vmatpush.bf16.msra.mxu0 0
    %1597 = vmatpush.bf16.msra.mxu0 0
    %1598 = vmatpush.bf16.msra.mxu0 0
    %1599 = vmatpush.bf16.msra.mxu0 0
    %1600 = vmatpush.bf16.msra.mxu0 0
    %1601 = vmatpush.bf16.msra.mxu0 0
    %1602 = vmatpush.bf16.msra.mxu0 %v1577
    %1603 = vmatmul.bf16.gmra.mxu0 %v1574
    %v1604 = vpop.f32.mrf.mxu0
    %v1605 = vadd.f32 %v1592, %v1604
    %v1606 = vpop.f32.mrf.mxu0
    %1607 = vdwg.mxu0
    %1608 = vmatpush.bf16.msra.mxu0 %v1554
    %1609 = vmatpush.bf16.msra.mxu0 %v1552
    %1610 = vmatpush.bf16.msra.mxu0 %v1550
    %1611 = vmatpush.bf16.msra.mxu0 %v1548
    %1612 = vmatpush.bf16.msra.mxu0 %v1546
    %1613 = vmatpush.bf16.msra.mxu0 %v1544
    %1614 = vmatpush.bf16.msra.mxu0 %v1542
    %1615 = vmatpush.bf16.msra.mxu0 %v1540
    %1616 = vmatmul.bf16.gmra.mxu0 %v1461
    %v1617 = vpop.f32.mrf.mxu0
    %v1618 = vadd.f32 %v1485, %v1617
    %v1619 = vpop.f32.mrf.mxu0
    %1620 = vdwg.mxu0
    %1621 = vmatpush.bf16.msra.mxu0 0
    %1622 = vmatpush.bf16.msra.mxu0 0
    %1623 = vmatpush.bf16.msra.mxu0 0
    %1624 = vmatpush.bf16.msra.mxu0 0
    %1625 = vmatpush.bf16.msra.mxu0 0
    %1626 = vmatpush.bf16.msra.mxu0 0
    %1627 = vmatpush.bf16.msra.mxu0 0
    %1628 = vmatpush.bf16.msra.mxu0 %v1580
    %1629 = vmatmul.bf16.gmra.mxu0 %v1574
    %v1630 = vpop.f32.mrf.mxu0
    %v1631 = vadd.f32 %v1618, %v1630
    %v1632 = vpop.f32.mrf.mxu0
    %1633 = vdwg.mxu0
    %v1634 = vmul.f32 %v1605, 0.01
    %v1635 = vmul.f32 %v1631, 0.01
    %v1636 = vmax.f32 %v1605, %v1634
    %v1637 = vmax.f32 %v1631, %v1635
    %v1638 = vpack.c.bf16 %v1636, %v1636
    %v1639 = vpack.c.bf16 %v1637, %v1637
    %s1640 = scalar_lea.vmem [#allocation7], 1088
    %v1641 = vld [vmem:[%s1640] sm:$0xff]
    %v1642 = vld [vmem:[%s1640 + $0x8] sm:$0xff]
    %v1643 = vld [vmem:[%s1640 + $0x10] sm:$0xff]
    %v1644 = vld [vmem:[%s1640 + $0x18] sm:$0xff]
    %v1645 = vld [vmem:[%s1640 + $0x20] sm:$0xff]
    %v1646 = vld [vmem:[%s1640 + $0x28] sm:$0xff]
    %v1647 = vld [vmem:[%s1640 + $0x30] sm:$0xff]
    %v1648 = vld [vmem:[%s1640 + $0x38] sm:$0xff]
    %v1649 = vld [vmem:[%s1640 + $0x40] sm:$0xff]
    %v1650 = vld [vmem:[%s1640 + $0x48] sm:$0xff]
    %v1651 = vld [vmem:[%s1640 + $0x50] sm:$0xff]
    %v1652 = vld [vmem:[%s1640 + $0x58] sm:$0xff]
    %v1653 = vld [vmem:[%s1640 + $0x60] sm:$0xff]
    %v1654 = vld [vmem:[%s1640 + $0x68] sm:$0xff]
    %v1655 = vld [vmem:[%s1640 + $0x70] sm:$0xff]
    %v1656 = vld [vmem:[%s1640 + $0x78] sm:$0xff]
    %v1657 = vld [vmem:[%s1640 + $0x80] sm:$0xff]
    %s1658 = scalar_lea.vmem [#allocation8], 16
    %v1659 = vld [vmem:[%s1658] sm:$0x3]
    %v1661 = vperm.slane %v1659, 0
    %v1662 = vperm.slane %v1659, 1
    %v1682 = vunpack.c.l.b16 %v1641
    %v1683 = vunpack.c.h.b16 %v1641
    %v1684 = vunpack.c.l.b16 %v1642
    %v1685 = vunpack.c.h.b16 %v1642
    %v1686 = vunpack.c.l.b16 %v1643
    %v1687 = vunpack.c.h.b16 %v1643
    %v1688 = vunpack.c.l.b16 %v1644
    %v1689 = vunpack.c.h.b16 %v1644
    %v1690 = vunpack.c.l.b16 %v1645
    %v1691 = vunpack.c.h.b16 %v1645
    %v1692 = vunpack.c.l.b16 %v1646
    %v1693 = vunpack.c.h.b16 %v1646
    %v1694 = vunpack.c.l.b16 %v1647
    %v1695 = vunpack.c.h.b16 %v1647
    %v1696 = vunpack.c.l.b16 %v1648
    %v1697 = vunpack.c.h.b16 %v1648
    %v1698 = vunpack.c.l.b16 %v1649
    %v1699 = vunpack.c.h.b16 %v1649
    %v1700 = vunpack.c.l.b16 %v1650
    %v1701 = vunpack.c.h.b16 %v1650
    %v1702 = vunpack.c.l.b16 %v1651
    %v1703 = vunpack.c.h.b16 %v1651
    %v1704 = vunpack.c.l.b16 %v1652
    %v1705 = vunpack.c.h.b16 %v1652
    %v1706 = vunpack.c.l.b16 %v1653
    %v1707 = vunpack.c.h.b16 %v1653
    %v1708 = vunpack.c.l.b16 %v1654
    %v1709 = vunpack.c.h.b16 %v1654
    %v1710 = vunpack.c.l.b16 %v1655
    %v1711 = vunpack.c.h.b16 %v1655
    %v1712 = vunpack.c.l.b16 %v1656
    %v1713 = vunpack.c.h.b16 %v1656
    %v1714 = vunpack.c.l.b16 %v1657
    %v1715 = vunpack.c.h.b16 %v1657
    %v1716 = vpack.c.b16 %v1684, %v1682
    %v1717 = vpack.c.b16 %v1685, %v1683
    %v1718 = vpack.c.b16 %v1688, %v1686
    %v1719 = vpack.c.b16 %v1689, %v1687
    %v1720 = vpack.c.b16 %v1692, %v1690
    %v1721 = vpack.c.b16 %v1693, %v1691
    %v1722 = vpack.c.b16 %v1696, %v1694
    %v1723 = vpack.c.b16 %v1697, %v1695
    %v1724 = vpack.c.b16 %v1700, %v1698
    %v1725 = vpack.c.b16 %v1701, %v1699
    %v1726 = vpack.c.b16 %v1704, %v1702
    %v1727 = vpack.c.b16 %v1705, %v1703
    %v1728 = vpack.c.b16 %v1708, %v1706
    %v1729 = vpack.c.b16 %v1709, %v1707
    %v1730 = vpack.c.b16 %v1712, %v1710
    %v1731 = vpack.c.b16 %v1713, %v1711
    %v1732 = vpack.c.b16 %v1714, %v1714
    %v1733 = vpack.c.b16 %v1715, %v1715
    %v1751 = vsel %vm332, %v1639, 0
    %v1754 = vsel %vm336, %v1732, 0
    %v1757 = vsel %vm336, %v1733, 0
    %1759 = vmatpush.bf16.msra.mxu0 %v1730
    %1760 = vmatpush.bf16.msra.mxu0 %v1728
    %1761 = vmatpush.bf16.msra.mxu0 %v1726
    %1762 = vmatpush.bf16.msra.mxu0 %v1724
    %1763 = vmatpush.bf16.msra.mxu0 %v1722
    %1764 = vmatpush.bf16.msra.mxu0 %v1720
    %1765 = vmatpush.bf16.msra.mxu0 %v1718
    %1766 = vmatpush.bf16.msra.mxu0 %v1716
    %1767 = vmatmul.bf16.gmra.mxu0 %v1638
    %v1768 = vpop.f32.mrf.mxu0
    %v1769 = vadd.f32 %v1661, %v1768
    %v1770 = vpop.f32.mrf.mxu0
    %1771 = vdwg.mxu0
    %1772 = vmatpush.bf16.msra.mxu0 0
    %1773 = vmatpush.bf16.msra.mxu0 0
    %1774 = vmatpush.bf16.msra.mxu0 0
    %1775 = vmatpush.bf16.msra.mxu0 0
    %1776 = vmatpush.bf16.msra.mxu0 0
    %1777 = vmatpush.bf16.msra.mxu0 0
    %1778 = vmatpush.bf16.msra.mxu0 0
    %1779 = vmatpush.bf16.msra.mxu0 %v1754
    %1780 = vmatmul.bf16.gmra.mxu0 %v1751
    %v1781 = vpop.f32.mrf.mxu0
    %v1782 = vadd.f32 %v1769, %v1781
    %v1783 = vpop.f32.mrf.mxu0
    %1784 = vdwg.mxu0
    %1785 = vmatpush.bf16.msra.mxu0 %v1731
    %1786 = vmatpush.bf16.msra.mxu0 %v1729
    %1787 = vmatpush.bf16.msra.mxu0 %v1727
    %1788 = vmatpush.bf16.msra.mxu0 %v1725
    %1789 = vmatpush.bf16.msra.mxu0 %v1723
    %1790 = vmatpush.bf16.msra.mxu0 %v1721
    %1791 = vmatpush.bf16.msra.mxu0 %v1719
    %1792 = vmatpush.bf16.msra.mxu0 %v1717
    %1793 = vmatmul.bf16.gmra.mxu0 %v1638
    %v1794 = vpop.f32.mrf.mxu0
    %v1795 = vadd.f32 %v1662, %v1794
    %v1796 = vpop.f32.mrf.mxu0
    %1797 = vdwg.mxu0
    %1798 = vmatpush.bf16.msra.mxu0 0
    %1799 = vmatpush.bf16.msra.mxu0 0
    %1800 = vmatpush.bf16.msra.mxu0 0
    %1801 = vmatpush.bf16.msra.mxu0 0
    %1802 = vmatpush.bf16.msra.mxu0 0
    %1803 = vmatpush.bf16.msra.mxu0 0
    %1804 = vmatpush.bf16.msra.mxu0 0
    %1805 = vmatpush.bf16.msra.mxu0 %v1757
    %1806 = vmatmul.bf16.gmra.mxu0 %v1751
    %v1807 = vpop.f32.mrf.mxu0
    %v1808 = vadd.f32 %v1795, %v1807
    %v1809 = vpop.f32.mrf.mxu0
    %1810 = vdwg.mxu0
    %v1811 = vmul.f32 %v1782, 0.01
    %v1812 = vmul.f32 %v1808, 0.01
    %v1813 = vmax.f32 %v1782, %v1811
    %v1814 = vmax.f32 %v1808, %v1812
    %v1815 = vpack.c.bf16 %v1813, %v1813
    %v1816 = vpack.c.bf16 %v1814, %v1814
    %s1817 = scalar_lea.vmem [#allocation7], 1224
    %v1818 = vld [vmem:[%s1817] sm:$0xff]
    %v1819 = vld [vmem:[%s1817 + $0x8] sm:$0xff]
    %v1820 = vld [vmem:[%s1817 + $0x10] sm:$0xff]
    %v1821 = vld [vmem:[%s1817 + $0x18] sm:$0xff]
    %v1822 = vld [vmem:[%s1817 + $0x20] sm:$0xff]
    %v1823 = vld [vmem:[%s1817 + $0x28] sm:$0xff]
    %v1824 = vld [vmem:[%s1817 + $0x30] sm:$0xff]
    %v1825 = vld [vmem:[%s1817 + $0x38] sm:$0xff]
    %v1826 = vld [vmem:[%s1817 + $0x40] sm:$0xff]
    %v1827 = vld [vmem:[%s1817 + $0x48] sm:$0xff]
    %v1828 = vld [vmem:[%s1817 + $0x50] sm:$0xff]
    %v1829 = vld [vmem:[%s1817 + $0x58] sm:$0xff]
    %v1830 = vld [vmem:[%s1817 + $0x60] sm:$0xff]
    %v1831 = vld [vmem:[%s1817 + $0x68] sm:$0xff]
    %v1832 = vld [vmem:[%s1817 + $0x70] sm:$0xff]
    %v1833 = vld [vmem:[%s1817 + $0x78] sm:$0xff]
    %v1834 = vld [vmem:[%s1817 + $0x80] sm:$0xff]
    %s1835 = scalar_lea.vmem [#allocation8], 18
    %v1836 = vld [vmem:[%s1835] sm:$0x3]
    %v1838 = vperm.slane %v1836, 0
    %v1839 = vperm.slane %v1836, 1
    %v1859 = vunpack.c.l.b16 %v1818
    %v1860 = vunpack.c.h.b16 %v1818
    %v1861 = vunpack.c.l.b16 %v1819
    %v1862 = vunpack.c.h.b16 %v1819
    %v1863 = vunpack.c.l.b16 %v1820
    %v1864 = vunpack.c.h.b16 %v1820
    %v1865 = vunpack.c.l.b16 %v1821
    %v1866 = vunpack.c.h.b16 %v1821
    %v1867 = vunpack.c.l.b16 %v1822
    %v1868 = vunpack.c.h.b16 %v1822
    %v1869 = vunpack.c.l.b16 %v1823
    %v1870 = vunpack.c.h.b16 %v1823
    %v1871 = vunpack.c.l.b16 %v1824
    %v1872 = vunpack.c.h.b16 %v1824
    %v1873 = vunpack.c.l.b16 %v1825
    %v1874 = vunpack.c.h.b16 %v1825
    %v1875 = vunpack.c.l.b16 %v1826
    %v1876 = vunpack.c.h.b16 %v1826
    %v1877 = vunpack.c.l.b16 %v1827
    %v1878 = vunpack.c.h.b16 %v1827
    %v1879 = vunpack.c.l.b16 %v1828
    %v1880 = vunpack.c.h.b16 %v1828
    %v1881 = vunpack.c.l.b16 %v1829
    %v1882 = vunpack.c.h.b16 %v1829
    %v1883 = vunpack.c.l.b16 %v1830
    %v1884 = vunpack.c.h.b16 %v1830
    %v1885 = vunpack.c.l.b16 %v1831
    %v1886 = vunpack.c.h.b16 %v1831
    %v1887 = vunpack.c.l.b16 %v1832
    %v1888 = vunpack.c.h.b16 %v1832
    %v1889 = vunpack.c.l.b16 %v1833
    %v1890 = vunpack.c.h.b16 %v1833
    %v1891 = vunpack.c.l.b16 %v1834
    %v1892 = vunpack.c.h.b16 %v1834
    %v1893 = vpack.c.b16 %v1861, %v1859
    %v1894 = vpack.c.b16 %v1862, %v1860
    %v1895 = vpack.c.b16 %v1865, %v1863
    %v1896 = vpack.c.b16 %v1866, %v1864
    %v1897 = vpack.c.b16 %v1869, %v1867
    %v1898 = vpack.c.b16 %v1870, %v1868
    %v1899 = vpack.c.b16 %v1873, %v1871
    %v1900 = vpack.c.b16 %v1874, %v1872
    %v1901 = vpack.c.b16 %v1877, %v1875
    %v1902 = vpack.c.b16 %v1878, %v1876
    %v1903 = vpack.c.b16 %v1881, %v1879
    %v1904 = vpack.c.b16 %v1882, %v1880
    %v1905 = vpack.c.b16 %v1885, %v1883
    %v1906 = vpack.c.b16 %v1886, %v1884
    %v1907 = vpack.c.b16 %v1889, %v1887
    %v1908 = vpack.c.b16 %v1890, %v1888
    %v1909 = vpack.c.b16 %v1891, %v1891
    %v1910 = vpack.c.b16 %v1892, %v1892
    %v1928 = vsel %vm332, %v1816, 0
    %v1931 = vsel %vm336, %v1909, 0
    %v1934 = vsel %vm336, %v1910, 0
    %1936 = vmatpush.bf16.msra.mxu0 %v1907
    %1937 = vmatpush.bf16.msra.mxu0 %v1905
    %1938 = vmatpush.bf16.msra.mxu0 %v1903
    %1939 = vmatpush.bf16.msra.mxu0 %v1901
    %1940 = vmatpush.bf16.msra.mxu0 %v1899
    %1941 = vmatpush.bf16.msra.mxu0 %v1897
    %1942 = vmatpush.bf16.msra.mxu0 %v1895
    %1943 = vmatpush.bf16.msra.mxu0 %v1893
    %1944 = vmatmul.bf16.gmra.mxu0 %v1815
    %v1945 = vpop.f32.mrf.mxu0
    %v1946 = vadd.f32 %v1838, %v1945
    %v1947 = vpop.f32.mrf.mxu0
    %1948 = vdwg.mxu0
    %1949 = vmatpush.bf16.msra.mxu0 0
    %1950 = vmatpush.bf16.msra.mxu0 0
    %1951 = vmatpush.bf16.msra.mxu0 0
    %1952 = vmatpush.bf16.msra.mxu0 0
    %1953 = vmatpush.bf16.msra.mxu0 0
    %1954 = vmatpush.bf16.msra.mxu0 0
    %1955 = vmatpush.bf16.msra.mxu0 0
    %1956 = vmatpush.bf16.msra.mxu0 %v1931
    %1957 = vmatmul.bf16.gmra.mxu0 %v1928
    %v1958 = vpop.f32.mrf.mxu0
    %v1959 = vadd.f32 %v1946, %v1958
    %v1960 = vpop.f32.mrf.mxu0
    %1961 = vdwg.mxu0
    %1962 = vmatpush.bf16.msra.mxu0 %v1908
    %1963 = vmatpush.bf16.msra.mxu0 %v1906
    %1964 = vmatpush.bf16.msra.mxu0 %v1904
    %1965 = vmatpush.bf16.msra.mxu0 %v1902
    %1966 = vmatpush.bf16.msra.mxu0 %v1900
    %1967 = vmatpush.bf16.msra.mxu0 %v1898
    %1968 = vmatpush.bf16.msra.mxu0 %v1896
    %1969 = vmatpush.bf16.msra.mxu0 %v1894
    %1970 = vmatmul.bf16.gmra.mxu0 %v1815
    %v1971 = vpop.f32.mrf.mxu0
    %v1972 = vadd.f32 %v1839, %v1971
    %v1973 = vpop.f32.mrf.mxu0
    %1974 = vdwg.mxu0
    %1975 = vmatpush.bf16.msra.mxu0 0
    %1976 = vmatpush.bf16.msra.mxu0 0
    %1977 = vmatpush.bf16.msra.mxu0 0
    %1978 = vmatpush.bf16.msra.mxu0 0
    %1979 = vmatpush.bf16.msra.mxu0 0
    %1980 = vmatpush.bf16.msra.mxu0 0
    %1981 = vmatpush.bf16.msra.mxu0 0
    %1982 = vmatpush.bf16.msra.mxu0 %v1934
    %1983 = vmatmul.bf16.gmra.mxu0 %v1928
    %v1984 = vpop.f32.mrf.mxu0
    %v1985 = vadd.f32 %v1972, %v1984
    %v1986 = vpop.f32.mrf.mxu0
    %1987 = vdwg.mxu0
    %v1988 = vmul.f32 %v1959, 0.01
    %v1989 = vmul.f32 %v1985, 0.01
    %v1990 = vmax.f32 %v1959, %v1988
    %v1991 = vmax.f32 %v1985, %v1989
    %v1992 = vpack.c.bf16 %v1990, %v1990
    %v1993 = vpack.c.bf16 %v1991, %v1991
    %s1994 = scalar_lea.vmem [#allocation7], 1360
    %v1995 = vld [vmem:[%s1994] sm:$0xff]
    %v1996 = vld [vmem:[%s1994 + $0x8] sm:$0xff]
    %v1997 = vld [vmem:[%s1994 + $0x10] sm:$0xff]
    %v1998 = vld [vmem:[%s1994 + $0x18] sm:$0xff]
    %v1999 = vld [vmem:[%s1994 + $0x20] sm:$0xff]
    %v2000 = vld [vmem:[%s1994 + $0x28] sm:$0xff]
    %v2001 = vld [vmem:[%s1994 + $0x30] sm:$0xff]
    %v2002 = vld [vmem:[%s1994 + $0x38] sm:$0xff]
    %v2003 = vld [vmem:[%s1994 + $0x40] sm:$0xff]
    %v2004 = vld [vmem:[%s1994 + $0x48] sm:$0xff]
    %v2005 = vld [vmem:[%s1994 + $0x50] sm:$0xff]
    %v2006 = vld [vmem:[%s1994 + $0x58] sm:$0xff]
    %v2007 = vld [vmem:[%s1994 + $0x60] sm:$0xff]
    %v2008 = vld [vmem:[%s1994 + $0x68] sm:$0xff]
    %v2009 = vld [vmem:[%s1994 + $0x70] sm:$0xff]
    %v2010 = vld [vmem:[%s1994 + $0x78] sm:$0xff]
    %v2011 = vld [vmem:[%s1994 + $0x80] sm:$0xff]
    %s2012 = scalar_lea.vmem [#allocation8], 20
    %v2013 = vld [vmem:[%s2012] sm:$0x3]
    %v2015 = vperm.slane %v2013, 0
    %v2016 = vperm.slane %v2013, 1
    %v2036 = vunpack.c.l.b16 %v1995
    %v2037 = vunpack.c.h.b16 %v1995
    %v2038 = vunpack.c.l.b16 %v1996
    %v2039 = vunpack.c.h.b16 %v1996
    %v2040 = vunpack.c.l.b16 %v1997
    %v2041 = vunpack.c.h.b16 %v1997
    %v2042 = vunpack.c.l.b16 %v1998
    %v2043 = vunpack.c.h.b16 %v1998
    %v2044 = vunpack.c.l.b16 %v1999
    %v2045 = vunpack.c.h.b16 %v1999
    %v2046 = vunpack.c.l.b16 %v2000
    %v2047 = vunpack.c.h.b16 %v2000
    %v2048 = vunpack.c.l.b16 %v2001
    %v2049 = vunpack.c.h.b16 %v2001
    %v2050 = vunpack.c.l.b16 %v2002
    %v2051 = vunpack.c.h.b16 %v2002
    %v2052 = vunpack.c.l.b16 %v2003
    %v2053 = vunpack.c.h.b16 %v2003
    %v2054 = vunpack.c.l.b16 %v2004
    %v2055 = vunpack.c.h.b16 %v2004
    %v2056 = vunpack.c.l.b16 %v2005
    %v2057 = vunpack.c.h.b16 %v2005
    %v2058 = vunpack.c.l.b16 %v2006
    %v2059 = vunpack.c.h.b16 %v2006
    %v2060 = vunpack.c.l.b16 %v2007
    %v2061 = vunpack.c.h.b16 %v2007
    %v2062 = vunpack.c.l.b16 %v2008
    %v2063 = vunpack.c.h.b16 %v2008
    %v2064 = vunpack.c.l.b16 %v2009
    %v2065 = vunpack.c.h.b16 %v2009
    %v2066 = vunpack.c.l.b16 %v2010
    %v2067 = vunpack.c.h.b16 %v2010
    %v2068 = vunpack.c.l.b16 %v2011
    %v2069 = vunpack.c.h.b16 %v2011
    %v2070 = vpack.c.b16 %v2038, %v2036
    %v2071 = vpack.c.b16 %v2039, %v2037
    %v2072 = vpack.c.b16 %v2042, %v2040
    %v2073 = vpack.c.b16 %v2043, %v2041
    %v2074 = vpack.c.b16 %v2046, %v2044
    %v2075 = vpack.c.b16 %v2047, %v2045
    %v2076 = vpack.c.b16 %v2050, %v2048
    %v2077 = vpack.c.b16 %v2051, %v2049
    %v2078 = vpack.c.b16 %v2054, %v2052
    %v2079 = vpack.c.b16 %v2055, %v2053
    %v2080 = vpack.c.b16 %v2058, %v2056
    %v2081 = vpack.c.b16 %v2059, %v2057
    %v2082 = vpack.c.b16 %v2062, %v2060
    %v2083 = vpack.c.b16 %v2063, %v2061
    %v2084 = vpack.c.b16 %v2066, %v2064
    %v2085 = vpack.c.b16 %v2067, %v2065
    %v2086 = vpack.c.b16 %v2068, %v2068
    %v2087 = vpack.c.b16 %v2069, %v2069
    %v2105 = vsel %vm332, %v1993, 0
    %v2108 = vsel %vm336, %v2086, 0
    %v2111 = vsel %vm336, %v2087, 0
    %2113 = vmatpush.bf16.msra.mxu0 %v2084
    %2114 = vmatpush.bf16.msra.mxu0 %v2082
    %2115 = vmatpush.bf16.msra.mxu0 %v2080
    %2116 = vmatpush.bf16.msra.mxu0 %v2078
    %2117 = vmatpush.bf16.msra.mxu0 %v2076
    %2118 = vmatpush.bf16.msra.mxu0 %v2074
    %2119 = vmatpush.bf16.msra.mxu0 %v2072
    %2120 = vmatpush.bf16.msra.mxu0 %v2070
    %2121 = vmatmul.bf16.gmra.mxu0 %v1992
    %v2122 = vpop.f32.mrf.mxu0
    %v2123 = vadd.f32 %v2015, %v2122
    %v2124 = vpop.f32.mrf.mxu0
    %2125 = vdwg.mxu0
    %2126 = vmatpush.bf16.msra.mxu0 0
    %2127 = vmatpush.bf16.msra.mxu0 0
    %2128 = vmatpush.bf16.msra.mxu0 0
    %2129 = vmatpush.bf16.msra.mxu0 0
    %2130 = vmatpush.bf16.msra.mxu0 0
    %2131 = vmatpush.bf16.msra.mxu0 0
    %2132 = vmatpush.bf16.msra.mxu0 0
    %2133 = vmatpush.bf16.msra.mxu0 %v2108
    %2134 = vmatmul.bf16.gmra.mxu0 %v2105
    %v2135 = vpop.f32.mrf.mxu0
    %v2136 = vadd.f32 %v2123, %v2135
    %v2137 = vpop.f32.mrf.mxu0
    %2138 = vdwg.mxu0
    %2139 = vmatpush.bf16.msra.mxu0 %v2085
    %2140 = vmatpush.bf16.msra.mxu0 %v2083
    %2141 = vmatpush.bf16.msra.mxu0 %v2081
    %2142 = vmatpush.bf16.msra.mxu0 %v2079
    %2143 = vmatpush.bf16.msra.mxu0 %v2077
    %2144 = vmatpush.bf16.msra.mxu0 %v2075
    %2145 = vmatpush.bf16.msra.mxu0 %v2073
    %2146 = vmatpush.bf16.msra.mxu0 %v2071
    %2147 = vmatmul.bf16.gmra.mxu0 %v1992
    %v2148 = vpop.f32.mrf.mxu0
    %v2149 = vadd.f32 %v2016, %v2148
    %v2150 = vpop.f32.mrf.mxu0
    %2151 = vdwg.mxu0
    %2152 = vmatpush.bf16.msra.mxu0 0
    %2153 = vmatpush.bf16.msra.mxu0 0
    %2154 = vmatpush.bf16.msra.mxu0 0
    %2155 = vmatpush.bf16.msra.mxu0 0
    %2156 = vmatpush.bf16.msra.mxu0 0
    %2157 = vmatpush.bf16.msra.mxu0 0
    %2158 = vmatpush.bf16.msra.mxu0 0
    %2159 = vmatpush.bf16.msra.mxu0 %v2111
    %2160 = vmatmul.bf16.gmra.mxu0 %v2105
    %v2161 = vpop.f32.mrf.mxu0
    %v2162 = vadd.f32 %v2149, %v2161
    %v2163 = vpop.f32.mrf.mxu0
    %2164 = vdwg.mxu0
    %v2165 = vmul.f32 %v2136, 0.01
    %v2166 = vmul.f32 %v2162, 0.01
    %v2167 = vmax.f32 %v2136, %v2165
    %v2168 = vmax.f32 %v2162, %v2166
    %v2169 = vpack.c.bf16 %v2167, %v2167
    %v2170 = vpack.c.bf16 %v2168, %v2168
    %s2171 = scalar_lea.vmem [#allocation7], 1496
    %v2172 = vld [vmem:[%s2171] sm:$0xff]
    %v2173 = vld [vmem:[%s2171 + $0x8] sm:$0xff]
    %v2174 = vld [vmem:[%s2171 + $0x10] sm:$0xff]
    %v2175 = vld [vmem:[%s2171 + $0x18] sm:$0xff]
    %v2176 = vld [vmem:[%s2171 + $0x20] sm:$0xff]
    %v2177 = vld [vmem:[%s2171 + $0x28] sm:$0xff]
    %v2178 = vld [vmem:[%s2171 + $0x30] sm:$0xff]
    %v2179 = vld [vmem:[%s2171 + $0x38] sm:$0xff]
    %v2180 = vld [vmem:[%s2171 + $0x40] sm:$0xff]
    %v2181 = vld [vmem:[%s2171 + $0x48] sm:$0xff]
    %v2182 = vld [vmem:[%s2171 + $0x50] sm:$0xff]
    %v2183 = vld [vmem:[%s2171 + $0x58] sm:$0xff]
    %v2184 = vld [vmem:[%s2171 + $0x60] sm:$0xff]
    %v2185 = vld [vmem:[%s2171 + $0x68] sm:$0xff]
    %v2186 = vld [vmem:[%s2171 + $0x70] sm:$0xff]
    %v2187 = vld [vmem:[%s2171 + $0x78] sm:$0xff]
    %v2188 = vld [vmem:[%s2171 + $0x80] sm:$0xff]
    %s2189 = scalar_lea.vmem [#allocation8], 22
    %v2190 = vld [vmem:[%s2189] sm:$0x3]
    %v2192 = vperm.slane %v2190, 0
    %v2193 = vperm.slane %v2190, 1
    %v2213 = vunpack.c.l.b16 %v2172
    %v2214 = vunpack.c.h.b16 %v2172
    %v2215 = vunpack.c.l.b16 %v2173
    %v2216 = vunpack.c.h.b16 %v2173
    %v2217 = vunpack.c.l.b16 %v2174
    %v2218 = vunpack.c.h.b16 %v2174
    %v2219 = vunpack.c.l.b16 %v2175
    %v2220 = vunpack.c.h.b16 %v2175
    %v2221 = vunpack.c.l.b16 %v2176
    %v2222 = vunpack.c.h.b16 %v2176
    %v2223 = vunpack.c.l.b16 %v2177
    %v2224 = vunpack.c.h.b16 %v2177
    %v2225 = vunpack.c.l.b16 %v2178
    %v2226 = vunpack.c.h.b16 %v2178
    %v2227 = vunpack.c.l.b16 %v2179
    %v2228 = vunpack.c.h.b16 %v2179
    %v2229 = vunpack.c.l.b16 %v2180
    %v2230 = vunpack.c.h.b16 %v2180
    %v2231 = vunpack.c.l.b16 %v2181
    %v2232 = vunpack.c.h.b16 %v2181
    %v2233 = vunpack.c.l.b16 %v2182
    %v2234 = vunpack.c.h.b16 %v2182
    %v2235 = vunpack.c.l.b16 %v2183
    %v2236 = vunpack.c.h.b16 %v2183
    %v2237 = vunpack.c.l.b16 %v2184
    %v2238 = vunpack.c.h.b16 %v2184
    %v2239 = vunpack.c.l.b16 %v2185
    %v2240 = vunpack.c.h.b16 %v2185
    %v2241 = vunpack.c.l.b16 %v2186
    %v2242 = vunpack.c.h.b16 %v2186
    %v2243 = vunpack.c.l.b16 %v2187
    %v2244 = vunpack.c.h.b16 %v2187
    %v2245 = vunpack.c.l.b16 %v2188
    %v2246 = vunpack.c.h.b16 %v2188
    %v2247 = vpack.c.b16 %v2215, %v2213
    %v2248 = vpack.c.b16 %v2216, %v2214
    %v2249 = vpack.c.b16 %v2219, %v2217
    %v2250 = vpack.c.b16 %v2220, %v2218
    %v2251 = vpack.c.b16 %v2223, %v2221
    %v2252 = vpack.c.b16 %v2224, %v2222
    %v2253 = vpack.c.b16 %v2227, %v2225
    %v2254 = vpack.c.b16 %v2228, %v2226
    %v2255 = vpack.c.b16 %v2231, %v2229
    %v2256 = vpack.c.b16 %v2232, %v2230
    %v2257 = vpack.c.b16 %v2235, %v2233
    %v2258 = vpack.c.b16 %v2236, %v2234
    %v2259 = vpack.c.b16 %v2239, %v2237
    %v2260 = vpack.c.b16 %v2240, %v2238
    %v2261 = vpack.c.b16 %v2243, %v2241
    %v2262 = vpack.c.b16 %v2244, %v2242
    %v2263 = vpack.c.b16 %v2245, %v2245
    %v2264 = vpack.c.b16 %v2246, %v2246
    %v2282 = vsel %vm332, %v2170, 0
    %v2285 = vsel %vm336, %v2263, 0
    %v2288 = vsel %vm336, %v2264, 0
    %2290 = vmatpush.bf16.msra.mxu0 %v2261
    %2291 = vmatpush.bf16.msra.mxu0 %v2259
    %2292 = vmatpush.bf16.msra.mxu0 %v2257
    %2293 = vmatpush.bf16.msra.mxu0 %v2255
    %2294 = vmatpush.bf16.msra.mxu0 %v2253
    %2295 = vmatpush.bf16.msra.mxu0 %v2251
    %2296 = vmatpush.bf16.msra.mxu0 %v2249
    %2297 = vmatpush.bf16.msra.mxu0 %v2247
    %2298 = vmatmul.bf16.gmra.mxu0 %v2169
    %v2299 = vpop.f32.mrf.mxu0
    %v2300 = vadd.f32 %v2192, %v2299
    %v2301 = vpop.f32.mrf.mxu0
    %2302 = vdwg.mxu0
    %2303 = vmatpush.bf16.msra.mxu0 0
    %2304 = vmatpush.bf16.msra.mxu0 0
    %2305 = vmatpush.bf16.msra.mxu0 0
    %2306 = vmatpush.bf16.msra.mxu0 0
    %2307 = vmatpush.bf16.msra.mxu0 0
    %2308 = vmatpush.bf16.msra.mxu0 0
    %2309 = vmatpush.bf16.msra.mxu0 0
    %2310 = vmatpush.bf16.msra.mxu0 %v2285
    %2311 = vmatmul.bf16.gmra.mxu0 %v2282
    %v2312 = vpop.f32.mrf.mxu0
    %v2313 = vadd.f32 %v2300, %v2312
    %v2314 = vpop.f32.mrf.mxu0
    %2315 = vdwg.mxu0
    %2316 = vmatpush.bf16.msra.mxu0 %v2262
    %2317 = vmatpush.bf16.msra.mxu0 %v2260
    %2318 = vmatpush.bf16.msra.mxu0 %v2258
    %2319 = vmatpush.bf16.msra.mxu0 %v2256
    %2320 = vmatpush.bf16.msra.mxu0 %v2254
    %2321 = vmatpush.bf16.msra.mxu0 %v2252
    %2322 = vmatpush.bf16.msra.mxu0 %v2250
    %2323 = vmatpush.bf16.msra.mxu0 %v2248
    %2324 = vmatmul.bf16.gmra.mxu0 %v2169
    %v2325 = vpop.f32.mrf.mxu0
    %v2326 = vadd.f32 %v2193, %v2325
    %v2327 = vpop.f32.mrf.mxu0
    %2328 = vdwg.mxu0
    %2329 = vmatpush.bf16.msra.mxu0 0
    %2330 = vmatpush.bf16.msra.mxu0 0
    %2331 = vmatpush.bf16.msra.mxu0 0
    %2332 = vmatpush.bf16.msra.mxu0 0
    %2333 = vmatpush.bf16.msra.mxu0 0
    %2334 = vmatpush.bf16.msra.mxu0 0
    %2335 = vmatpush.bf16.msra.mxu0 0
    %2336 = vmatpush.bf16.msra.mxu0 %v2288
    %2337 = vmatmul.bf16.gmra.mxu0 %v2282
    %v2338 = vpop.f32.mrf.mxu0
    %v2339 = vadd.f32 %v2326, %v2338
    %v2340 = vpop.f32.mrf.mxu0
    %2341 = vdwg.mxu0
    %v2342 = vmul.f32 %v2313, 0.01
    %v2343 = vmul.f32 %v2339, 0.01
    %v2344 = vmax.f32 %v2313, %v2342
    %v2345 = vmax.f32 %v2339, %v2343
    %v2346 = vpack.c.bf16 %v2344, %v2344
    %v2347 = vpack.c.bf16 %v2345, %v2345
    %s2348 = scalar_lea.vmem [#allocation7], 1632
    %v2349 = vld [vmem:[%s2348] sm:$0xff]
    %v2350 = vld [vmem:[%s2348 + $0x8] sm:$0xff]
    %v2351 = vld [vmem:[%s2348 + $0x10] sm:$0xff]
    %v2352 = vld [vmem:[%s2348 + $0x18] sm:$0xff]
    %v2353 = vld [vmem:[%s2348 + $0x20] sm:$0xff]
    %v2354 = vld [vmem:[%s2348 + $0x28] sm:$0xff]
    %v2355 = vld [vmem:[%s2348 + $0x30] sm:$0xff]
    %v2356 = vld [vmem:[%s2348 + $0x38] sm:$0xff]
    %v2357 = vld [vmem:[%s2348 + $0x40] sm:$0xff]
    %v2358 = vld [vmem:[%s2348 + $0x48] sm:$0xff]
    %v2359 = vld [vmem:[%s2348 + $0x50] sm:$0xff]
    %v2360 = vld [vmem:[%s2348 + $0x58] sm:$0xff]
    %v2361 = vld [vmem:[%s2348 + $0x60] sm:$0xff]
    %v2362 = vld [vmem:[%s2348 + $0x68] sm:$0xff]
    %v2363 = vld [vmem:[%s2348 + $0x70] sm:$0xff]
    %v2364 = vld [vmem:[%s2348 + $0x78] sm:$0xff]
    %v2365 = vld [vmem:[%s2348 + $0x80] sm:$0xff]
    %s2366 = scalar_lea.vmem [#allocation8], 24
    %v2367 = vld [vmem:[%s2366] sm:$0x3]
    %v2369 = vperm.slane %v2367, 0
    %v2370 = vperm.slane %v2367, 1
    %v2390 = vunpack.c.l.b16 %v2349
    %v2391 = vunpack.c.h.b16 %v2349
    %v2392 = vunpack.c.l.b16 %v2350
    %v2393 = vunpack.c.h.b16 %v2350
    %v2394 = vunpack.c.l.b16 %v2351
    %v2395 = vunpack.c.h.b16 %v2351
    %v2396 = vunpack.c.l.b16 %v2352
    %v2397 = vunpack.c.h.b16 %v2352
    %v2398 = vunpack.c.l.b16 %v2353
    %v2399 = vunpack.c.h.b16 %v2353
    %v2400 = vunpack.c.l.b16 %v2354
    %v2401 = vunpack.c.h.b16 %v2354
    %v2402 = vunpack.c.l.b16 %v2355
    %v2403 = vunpack.c.h.b16 %v2355
    %v2404 = vunpack.c.l.b16 %v2356
    %v2405 = vunpack.c.h.b16 %v2356
    %v2406 = vunpack.c.l.b16 %v2357
    %v2407 = vunpack.c.h.b16 %v2357
    %v2408 = vunpack.c.l.b16 %v2358
    %v2409 = vunpack.c.h.b16 %v2358
    %v2410 = vunpack.c.l.b16 %v2359
    %v2411 = vunpack.c.h.b16 %v2359
    %v2412 = vunpack.c.l.b16 %v2360
    %v2413 = vunpack.c.h.b16 %v2360
    %v2414 = vunpack.c.l.b16 %v2361
    %v2415 = vunpack.c.h.b16 %v2361
    %v2416 = vunpack.c.l.b16 %v2362
    %v2417 = vunpack.c.h.b16 %v2362
    %v2418 = vunpack.c.l.b16 %v2363
    %v2419 = vunpack.c.h.b16 %v2363
    %v2420 = vunpack.c.l.b16 %v2364
    %v2421 = vunpack.c.h.b16 %v2364
    %v2422 = vunpack.c.l.b16 %v2365
    %v2423 = vunpack.c.h.b16 %v2365
    %v2424 = vpack.c.b16 %v2392, %v2390
    %v2425 = vpack.c.b16 %v2393, %v2391
    %v2426 = vpack.c.b16 %v2396, %v2394
    %v2427 = vpack.c.b16 %v2397, %v2395
    %v2428 = vpack.c.b16 %v2400, %v2398
    %v2429 = vpack.c.b16 %v2401, %v2399
    %v2430 = vpack.c.b16 %v2404, %v2402
    %v2431 = vpack.c.b16 %v2405, %v2403
    %v2432 = vpack.c.b16 %v2408, %v2406
    %v2433 = vpack.c.b16 %v2409, %v2407
    %v2434 = vpack.c.b16 %v2412, %v2410
    %v2435 = vpack.c.b16 %v2413, %v2411
    %v2436 = vpack.c.b16 %v2416, %v2414
    %v2437 = vpack.c.b16 %v2417, %v2415
    %v2438 = vpack.c.b16 %v2420, %v2418
    %v2439 = vpack.c.b16 %v2421, %v2419
    %v2440 = vpack.c.b16 %v2422, %v2422
    %v2441 = vpack.c.b16 %v2423, %v2423
    %v2459 = vsel %vm332, %v2347, 0
    %v2462 = vsel %vm336, %v2440, 0
    %v2465 = vsel %vm336, %v2441, 0
    %2467 = vmatpush.bf16.msra.mxu0 %v2438
    %2468 = vmatpush.bf16.msra.mxu0 %v2436
    %2469 = vmatpush.bf16.msra.mxu0 %v2434
    %2470 = vmatpush.bf16.msra.mxu0 %v2432
    %2471 = vmatpush.bf16.msra.mxu0 %v2430
    %2472 = vmatpush.bf16.msra.mxu0 %v2428
    %2473 = vmatpush.bf16.msra.mxu0 %v2426
    %2474 = vmatpush.bf16.msra.mxu0 %v2424
    %2475 = vmatmul.bf16.gmra.mxu0 %v2346
    %v2476 = vpop.f32.mrf.mxu0
    %v2477 = vadd.f32 %v2369, %v2476
    %v2478 = vpop.f32.mrf.mxu0
    %2479 = vdwg.mxu0
    %2480 = vmatpush.bf16.msra.mxu0 0
    %2481 = vmatpush.bf16.msra.mxu0 0
    %2482 = vmatpush.bf16.msra.mxu0 0
    %2483 = vmatpush.bf16.msra.mxu0 0
    %2484 = vmatpush.bf16.msra.mxu0 0
    %2485 = vmatpush.bf16.msra.mxu0 0
    %2486 = vmatpush.bf16.msra.mxu0 0
    %2487 = vmatpush.bf16.msra.mxu0 %v2462
    %2488 = vmatmul.bf16.gmra.mxu0 %v2459
    %v2489 = vpop.f32.mrf.mxu0
    %v2490 = vadd.f32 %v2477, %v2489
    %v2491 = vpop.f32.mrf.mxu0
    %2492 = vdwg.mxu0
    %2493 = vmatpush.bf16.msra.mxu0 %v2439
    %2494 = vmatpush.bf16.msra.mxu0 %v2437
    %2495 = vmatpush.bf16.msra.mxu0 %v2435
    %2496 = vmatpush.bf16.msra.mxu0 %v2433
    %2497 = vmatpush.bf16.msra.mxu0 %v2431
    %2498 = vmatpush.bf16.msra.mxu0 %v2429
    %2499 = vmatpush.bf16.msra.mxu0 %v2427
    %2500 = vmatpush.bf16.msra.mxu0 %v2425
    %2501 = vmatmul.bf16.gmra.mxu0 %v2346
    %v2502 = vpop.f32.mrf.mxu0
    %v2503 = vadd.f32 %v2370, %v2502
    %v2504 = vpop.f32.mrf.mxu0
    %2505 = vdwg.mxu0
    %2506 = vmatpush.bf16.msra.mxu0 0
    %2507 = vmatpush.bf16.msra.mxu0 0
    %2508 = vmatpush.bf16.msra.mxu0 0
    %2509 = vmatpush.bf16.msra.mxu0 0
    %2510 = vmatpush.bf16.msra.mxu0 0
    %2511 = vmatpush.bf16.msra.mxu0 0
    %2512 = vmatpush.bf16.msra.mxu0 0
    %2513 = vmatpush.bf16.msra.mxu0 %v2465
    %2514 = vmatmul.bf16.gmra.mxu0 %v2459
    %v2515 = vpop.f32.mrf.mxu0
    %v2516 = vadd.f32 %v2503, %v2515
    %v2517 = vpop.f32.mrf.mxu0
    %2518 = vdwg.mxu0
    %v2519 = vmul.f32 %v2490, 0.01
    %v2520 = vmul.f32 %v2516, 0.01
    %v2521 = vmax.f32 %v2490, %v2519
    %v2522 = vmax.f32 %v2516, %v2520
    %v2523 = vpack.c.bf16 %v2521, %v2521
    %v2524 = vpack.c.bf16 %v2522, %v2522
    %s2525 = scalar_lea.vmem [#allocation7], 1768
    %v2526 = vld [vmem:[%s2525] sm:$0xff]
    %v2527 = vld [vmem:[%s2525 + $0x8] sm:$0xff]
    %v2528 = vld [vmem:[%s2525 + $0x10] sm:$0xff]
    %v2529 = vld [vmem:[%s2525 + $0x18] sm:$0xff]
    %v2530 = vld [vmem:[%s2525 + $0x20] sm:$0xff]
    %v2531 = vld [vmem:[%s2525 + $0x28] sm:$0xff]
    %v2532 = vld [vmem:[%s2525 + $0x30] sm:$0xff]
    %v2533 = vld [vmem:[%s2525 + $0x38] sm:$0xff]
    %v2534 = vld [vmem:[%s2525 + $0x40] sm:$0xff]
    %v2535 = vld [vmem:[%s2525 + $0x48] sm:$0xff]
    %v2536 = vld [vmem:[%s2525 + $0x50] sm:$0xff]
    %v2537 = vld [vmem:[%s2525 + $0x58] sm:$0xff]
    %v2538 = vld [vmem:[%s2525 + $0x60] sm:$0xff]
    %v2539 = vld [vmem:[%s2525 + $0x68] sm:$0xff]
    %v2540 = vld [vmem:[%s2525 + $0x70] sm:$0xff]
    %v2541 = vld [vmem:[%s2525 + $0x78] sm:$0xff]
    %v2542 = vld [vmem:[%s2525 + $0x80] sm:$0xff]
    %s2543 = scalar_lea.vmem [#allocation8], 26
    %v2544 = vld [vmem:[%s2543] sm:$0x3]
    %v2546 = vperm.slane %v2544, 0
    %v2547 = vperm.slane %v2544, 1
    %v2567 = vunpack.c.l.b16 %v2526
    %v2568 = vunpack.c.h.b16 %v2526
    %v2569 = vunpack.c.l.b16 %v2527
    %v2570 = vunpack.c.h.b16 %v2527
    %v2571 = vunpack.c.l.b16 %v2528
    %v2572 = vunpack.c.h.b16 %v2528
    %v2573 = vunpack.c.l.b16 %v2529
    %v2574 = vunpack.c.h.b16 %v2529
    %v2575 = vunpack.c.l.b16 %v2530
    %v2576 = vunpack.c.h.b16 %v2530
    %v2577 = vunpack.c.l.b16 %v2531
    %v2578 = vunpack.c.h.b16 %v2531
    %v2579 = vunpack.c.l.b16 %v2532
    %v2580 = vunpack.c.h.b16 %v2532
    %v2581 = vunpack.c.l.b16 %v2533
    %v2582 = vunpack.c.h.b16 %v2533
    %v2583 = vunpack.c.l.b16 %v2534
    %v2584 = vunpack.c.h.b16 %v2534
    %v2585 = vunpack.c.l.b16 %v2535
    %v2586 = vunpack.c.h.b16 %v2535
    %v2587 = vunpack.c.l.b16 %v2536
    %v2588 = vunpack.c.h.b16 %v2536
    %v2589 = vunpack.c.l.b16 %v2537
    %v2590 = vunpack.c.h.b16 %v2537
    %v2591 = vunpack.c.l.b16 %v2538
    %v2592 = vunpack.c.h.b16 %v2538
    %v2593 = vunpack.c.l.b16 %v2539
    %v2594 = vunpack.c.h.b16 %v2539
    %v2595 = vunpack.c.l.b16 %v2540
    %v2596 = vunpack.c.h.b16 %v2540
    %v2597 = vunpack.c.l.b16 %v2541
    %v2598 = vunpack.c.h.b16 %v2541
    %v2599 = vunpack.c.l.b16 %v2542
    %v2600 = vunpack.c.h.b16 %v2542
    %v2601 = vpack.c.b16 %v2569, %v2567
    %v2602 = vpack.c.b16 %v2570, %v2568
    %v2603 = vpack.c.b16 %v2573, %v2571
    %v2604 = vpack.c.b16 %v2574, %v2572
    %v2605 = vpack.c.b16 %v2577, %v2575
    %v2606 = vpack.c.b16 %v2578, %v2576
    %v2607 = vpack.c.b16 %v2581, %v2579
    %v2608 = vpack.c.b16 %v2582, %v2580
    %v2609 = vpack.c.b16 %v2585, %v2583
    %v2610 = vpack.c.b16 %v2586, %v2584
    %v2611 = vpack.c.b16 %v2589, %v2587
    %v2612 = vpack.c.b16 %v2590, %v2588
    %v2613 = vpack.c.b16 %v2593, %v2591
    %v2614 = vpack.c.b16 %v2594, %v2592
    %v2615 = vpack.c.b16 %v2597, %v2595
    %v2616 = vpack.c.b16 %v2598, %v2596
    %v2617 = vpack.c.b16 %v2599, %v2599
    %v2618 = vpack.c.b16 %v2600, %v2600
    %v2636 = vsel %vm332, %v2524, 0
    %v2639 = vsel %vm336, %v2617, 0
    %v2642 = vsel %vm336, %v2618, 0
    %2644 = vmatpush.bf16.msra.mxu0 %v2615
    %2645 = vmatpush.bf16.msra.mxu0 %v2613
    %2646 = vmatpush.bf16.msra.mxu0 %v2611
    %2647 = vmatpush.bf16.msra.mxu0 %v2609
    %2648 = vmatpush.bf16.msra.mxu0 %v2607
    %2649 = vmatpush.bf16.msra.mxu0 %v2605
    %2650 = vmatpush.bf16.msra.mxu0 %v2603
    %2651 = vmatpush.bf16.msra.mxu0 %v2601
    %2652 = vmatmul.bf16.gmra.mxu0 %v2523
    %v2653 = vpop.f32.mrf.mxu0
    %v2654 = vadd.f32 %v2546, %v2653
    %v2655 = vpop.f32.mrf.mxu0
    %2656 = vdwg.mxu0
    %2657 = vmatpush.bf16.msra.mxu0 0
    %2658 = vmatpush.bf16.msra.mxu0 0
    %2659 = vmatpush.bf16.msra.mxu0 0
    %2660 = vmatpush.bf16.msra.mxu0 0
    %2661 = vmatpush.bf16.msra.mxu0 0
    %2662 = vmatpush.bf16.msra.mxu0 0
    %2663 = vmatpush.bf16.msra.mxu0 0
    %2664 = vmatpush.bf16.msra.mxu0 %v2639
    %2665 = vmatmul.bf16.gmra.mxu0 %v2636
    %v2666 = vpop.f32.mrf.mxu0
    %v2667 = vadd.f32 %v2654, %v2666
    %v2668 = vpop.f32.mrf.mxu0
    %2669 = vdwg.mxu0
    %2670 = vmatpush.bf16.msra.mxu0 %v2616
    %2671 = vmatpush.bf16.msra.mxu0 %v2614
    %2672 = vmatpush.bf16.msra.mxu0 %v2612
    %2673 = vmatpush.bf16.msra.mxu0 %v2610
    %2674 = vmatpush.bf16.msra.mxu0 %v2608
    %2675 = vmatpush.bf16.msra.mxu0 %v2606
    %2676 = vmatpush.bf16.msra.mxu0 %v2604
    %2677 = vmatpush.bf16.msra.mxu0 %v2602
    %2678 = vmatmul.bf16.gmra.mxu0 %v2523
    %v2679 = vpop.f32.mrf.mxu0
    %v2680 = vadd.f32 %v2547, %v2679
    %v2681 = vpop.f32.mrf.mxu0
    %2682 = vdwg.mxu0
    %2683 = vmatpush.bf16.msra.mxu0 0
    %2684 = vmatpush.bf16.msra.mxu0 0
    %2685 = vmatpush.bf16.msra.mxu0 0
    %2686 = vmatpush.bf16.msra.mxu0 0
    %2687 = vmatpush.bf16.msra.mxu0 0
    %2688 = vmatpush.bf16.msra.mxu0 0
    %2689 = vmatpush.bf16.msra.mxu0 0
    %2690 = vmatpush.bf16.msra.mxu0 %v2642
    %2691 = vmatmul.bf16.gmra.mxu0 %v2636
    %v2692 = vpop.f32.mrf.mxu0
    %v2693 = vadd.f32 %v2680, %v2692
    %v2694 = vpop.f32.mrf.mxu0
    %2695 = vdwg.mxu0
    %v2696 = vmul.f32 %v2667, 0.01
    %v2697 = vmul.f32 %v2693, 0.01
    %v2698 = vmax.f32 %v2667, %v2696
    %v2699 = vmax.f32 %v2693, %v2697
    %v2700 = vpack.c.bf16 %v2698, %v2698
    %v2701 = vpack.c.bf16 %v2699, %v2699
    %s2702 = scalar_lea.vmem [#allocation7], 1904
    %v2703 = vld [vmem:[%s2702] sm:$0xff]
    %v2704 = vld [vmem:[%s2702 + $0x8] sm:$0xff]
    %v2705 = vld [vmem:[%s2702 + $0x10] sm:$0xff]
    %v2706 = vld [vmem:[%s2702 + $0x18] sm:$0xff]
    %v2707 = vld [vmem:[%s2702 + $0x20] sm:$0xff]
    %v2708 = vld [vmem:[%s2702 + $0x28] sm:$0xff]
    %v2709 = vld [vmem:[%s2702 + $0x30] sm:$0xff]
    %v2710 = vld [vmem:[%s2702 + $0x38] sm:$0xff]
    %v2711 = vld [vmem:[%s2702 + $0x40] sm:$0xff]
    %v2712 = vld [vmem:[%s2702 + $0x48] sm:$0xff]
    %v2713 = vld [vmem:[%s2702 + $0x50] sm:$0xff]
    %v2714 = vld [vmem:[%s2702 + $0x58] sm:$0xff]
    %v2715 = vld [vmem:[%s2702 + $0x60] sm:$0xff]
    %v2716 = vld [vmem:[%s2702 + $0x68] sm:$0xff]
    %v2717 = vld [vmem:[%s2702 + $0x70] sm:$0xff]
    %v2718 = vld [vmem:[%s2702 + $0x78] sm:$0xff]
    %v2719 = vld [vmem:[%s2702 + $0x80] sm:$0xff]
    %s2720 = scalar_lea.vmem [#allocation8], 28
    %v2721 = vld [vmem:[%s2720] sm:$0x3]
    %v2723 = vperm.slane %v2721, 0
    %v2724 = vperm.slane %v2721, 1
    %v2744 = vunpack.c.l.b16 %v2703
    %v2745 = vunpack.c.h.b16 %v2703
    %v2746 = vunpack.c.l.b16 %v2704
    %v2747 = vunpack.c.h.b16 %v2704
    %v2748 = vunpack.c.l.b16 %v2705
    %v2749 = vunpack.c.h.b16 %v2705
    %v2750 = vunpack.c.l.b16 %v2706
    %v2751 = vunpack.c.h.b16 %v2706
    %v2752 = vunpack.c.l.b16 %v2707
    %v2753 = vunpack.c.h.b16 %v2707
    %v2754 = vunpack.c.l.b16 %v2708
    %v2755 = vunpack.c.h.b16 %v2708
    %v2756 = vunpack.c.l.b16 %v2709
    %v2757 = vunpack.c.h.b16 %v2709
    %v2758 = vunpack.c.l.b16 %v2710
    %v2759 = vunpack.c.h.b16 %v2710
    %v2760 = vunpack.c.l.b16 %v2711
    %v2761 = vunpack.c.h.b16 %v2711
    %v2762 = vunpack.c.l.b16 %v2712
    %v2763 = vunpack.c.h.b16 %v2712
    %v2764 = vunpack.c.l.b16 %v2713
    %v2765 = vunpack.c.h.b16 %v2713
    %v2766 = vunpack.c.l.b16 %v2714
    %v2767 = vunpack.c.h.b16 %v2714
    %v2768 = vunpack.c.l.b16 %v2715
    %v2769 = vunpack.c.h.b16 %v2715
    %v2770 = vunpack.c.l.b16 %v2716
    %v2771 = vunpack.c.h.b16 %v2716
    %v2772 = vunpack.c.l.b16 %v2717
    %v2773 = vunpack.c.h.b16 %v2717
    %v2774 = vunpack.c.l.b16 %v2718
    %v2775 = vunpack.c.h.b16 %v2718
    %v2776 = vunpack.c.l.b16 %v2719
    %v2777 = vunpack.c.h.b16 %v2719
    %v2778 = vpack.c.b16 %v2746, %v2744
    %v2779 = vpack.c.b16 %v2747, %v2745
    %v2780 = vpack.c.b16 %v2750, %v2748
    %v2781 = vpack.c.b16 %v2751, %v2749
    %v2782 = vpack.c.b16 %v2754, %v2752
    %v2783 = vpack.c.b16 %v2755, %v2753
    %v2784 = vpack.c.b16 %v2758, %v2756
    %v2785 = vpack.c.b16 %v2759, %v2757
    %v2786 = vpack.c.b16 %v2762, %v2760
    %v2787 = vpack.c.b16 %v2763, %v2761
    %v2788 = vpack.c.b16 %v2766, %v2764
    %v2789 = vpack.c.b16 %v2767, %v2765
    %v2790 = vpack.c.b16 %v2770, %v2768
    %v2791 = vpack.c.b16 %v2771, %v2769
    %v2792 = vpack.c.b16 %v2774, %v2772
    %v2793 = vpack.c.b16 %v2775, %v2773
    %v2794 = vpack.c.b16 %v2776, %v2776
    %v2795 = vpack.c.b16 %v2777, %v2777
    %v2813 = vsel %vm332, %v2701, 0
    %v2816 = vsel %vm336, %v2794, 0
    %v2819 = vsel %vm336, %v2795, 0
    %2821 = vmatpush.bf16.msra.mxu0 %v2792
    %2822 = vmatpush.bf16.msra.mxu0 %v2790
    %2823 = vmatpush.bf16.msra.mxu0 %v2788
    %2824 = vmatpush.bf16.msra.mxu0 %v2786
    %2825 = vmatpush.bf16.msra.mxu0 %v2784
    %2826 = vmatpush.bf16.msra.mxu0 %v2782
    %2827 = vmatpush.bf16.msra.mxu0 %v2780
    %2828 = vmatpush.bf16.msra.mxu0 %v2778
    %2829 = vmatmul.bf16.gmra.mxu0 %v2700
    %v2830 = vpop.f32.mrf.mxu0
    %v2831 = vadd.f32 %v2723, %v2830
    %v2832 = vpop.f32.mrf.mxu0
    %2833 = vdwg.mxu0
    %2834 = vmatpush.bf16.msra.mxu0 0
    %2835 = vmatpush.bf16.msra.mxu0 0
    %2836 = vmatpush.bf16.msra.mxu0 0
    %2837 = vmatpush.bf16.msra.mxu0 0
    %2838 = vmatpush.bf16.msra.mxu0 0
    %2839 = vmatpush.bf16.msra.mxu0 0
    %2840 = vmatpush.bf16.msra.mxu0 0
    %2841 = vmatpush.bf16.msra.mxu0 %v2816
    %2842 = vmatmul.bf16.gmra.mxu0 %v2813
    %v2843 = vpop.f32.mrf.mxu0
    %v2844 = vadd.f32 %v2831, %v2843
    %v2845 = vpop.f32.mrf.mxu0
    %2846 = vdwg.mxu0
    %2847 = vmatpush.bf16.msra.mxu0 %v2793
    %2848 = vmatpush.bf16.msra.mxu0 %v2791
    %2849 = vmatpush.bf16.msra.mxu0 %v2789
    %2850 = vmatpush.bf16.msra.mxu0 %v2787
    %2851 = vmatpush.bf16.msra.mxu0 %v2785
    %2852 = vmatpush.bf16.msra.mxu0 %v2783
    %2853 = vmatpush.bf16.msra.mxu0 %v2781
    %2854 = vmatpush.bf16.msra.mxu0 %v2779
    %2855 = vmatmul.bf16.gmra.mxu0 %v2700
    %v2856 = vpop.f32.mrf.mxu0
    %v2857 = vadd.f32 %v2724, %v2856
    %v2858 = vpop.f32.mrf.mxu0
    %2859 = vdwg.mxu0
    %2860 = vmatpush.bf16.msra.mxu0 0
    %2861 = vmatpush.bf16.msra.mxu0 0
    %2862 = vmatpush.bf16.msra.mxu0 0
    %2863 = vmatpush.bf16.msra.mxu0 0
    %2864 = vmatpush.bf16.msra.mxu0 0
    %2865 = vmatpush.bf16.msra.mxu0 0
    %2866 = vmatpush.bf16.msra.mxu0 0
    %2867 = vmatpush.bf16.msra.mxu0 %v2819
    %2868 = vmatmul.bf16.gmra.mxu0 %v2813
    %v2869 = vpop.f32.mrf.mxu0
    %v2870 = vadd.f32 %v2857, %v2869
    %v2871 = vpop.f32.mrf.mxu0
    %2872 = vdwg.mxu0
    %v2873 = vmul.f32 %v2844, 0.01
    %v2874 = vmul.f32 %v2870, 0.01
    %v2875 = vmax.f32 %v2844, %v2873
    %v2876 = vmax.f32 %v2870, %v2874
    %v2877 = vpack.c.bf16 %v2875, %v2875
    %v2878 = vpack.c.bf16 %v2876, %v2876
    %s2879 = scalar_lea.vmem [#allocation7], 2040
    %v2880 = vld [vmem:[%s2879] sm:$0xff]
    %v2881 = vld [vmem:[%s2879 + $0x8] sm:$0xff]
    %v2882 = vld [vmem:[%s2879 + $0x10] sm:$0xff]
    %v2883 = vld [vmem:[%s2879 + $0x18] sm:$0xff]
    %v2884 = vld [vmem:[%s2879 + $0x20] sm:$0xff]
    %v2885 = vld [vmem:[%s2879 + $0x28] sm:$0xff]
    %v2886 = vld [vmem:[%s2879 + $0x30] sm:$0xff]
    %v2887 = vld [vmem:[%s2879 + $0x38] sm:$0xff]
    %v2888 = vld [vmem:[%s2879 + $0x40] sm:$0xff]
    %v2889 = vld [vmem:[%s2879 + $0x48] sm:$0xff]
    %v2890 = vld [vmem:[%s2879 + $0x50] sm:$0xff]
    %v2891 = vld [vmem:[%s2879 + $0x58] sm:$0xff]
    %v2892 = vld [vmem:[%s2879 + $0x60] sm:$0xff]
    %v2893 = vld [vmem:[%s2879 + $0x68] sm:$0xff]
    %v2894 = vld [vmem:[%s2879 + $0x70] sm:$0xff]
    %v2895 = vld [vmem:[%s2879 + $0x78] sm:$0xff]
    %v2896 = vld [vmem:[%s2879 + $0x80] sm:$0xff]
    %s2897 = scalar_lea.vmem [#allocation8], 30
    %v2898 = vld [vmem:[%s2897] sm:$0x3]
    %v2900 = vperm.slane %v2898, 0
    %v2901 = vperm.slane %v2898, 1
    %v2921 = vunpack.c.l.b16 %v2880
    %v2922 = vunpack.c.h.b16 %v2880
    %v2923 = vunpack.c.l.b16 %v2881
    %v2924 = vunpack.c.h.b16 %v2881
    %v2925 = vunpack.c.l.b16 %v2882
    %v2926 = vunpack.c.h.b16 %v2882
    %v2927 = vunpack.c.l.b16 %v2883
    %v2928 = vunpack.c.h.b16 %v2883
    %v2929 = vunpack.c.l.b16 %v2884
    %v2930 = vunpack.c.h.b16 %v2884
    %v2931 = vunpack.c.l.b16 %v2885
    %v2932 = vunpack.c.h.b16 %v2885
    %v2933 = vunpack.c.l.b16 %v2886
    %v2934 = vunpack.c.h.b16 %v2886
    %v2935 = vunpack.c.l.b16 %v2887
    %v2936 = vunpack.c.h.b16 %v2887
    %v2937 = vunpack.c.l.b16 %v2888
    %v2938 = vunpack.c.h.b16 %v2888
    %v2939 = vunpack.c.l.b16 %v2889
    %v2940 = vunpack.c.h.b16 %v2889
    %v2941 = vunpack.c.l.b16 %v2890
    %v2942 = vunpack.c.h.b16 %v2890
    %v2943 = vunpack.c.l.b16 %v2891
    %v2944 = vunpack.c.h.b16 %v2891
    %v2945 = vunpack.c.l.b16 %v2892
    %v2946 = vunpack.c.h.b16 %v2892
    %v2947 = vunpack.c.l.b16 %v2893
    %v2948 = vunpack.c.h.b16 %v2893
    %v2949 = vunpack.c.l.b16 %v2894
    %v2950 = vunpack.c.h.b16 %v2894
    %v2951 = vunpack.c.l.b16 %v2895
    %v2952 = vunpack.c.h.b16 %v2895
    %v2953 = vunpack.c.l.b16 %v2896
    %v2954 = vunpack.c.h.b16 %v2896
    %v2955 = vpack.c.b16 %v2923, %v2921
    %v2956 = vpack.c.b16 %v2924, %v2922
    %v2957 = vpack.c.b16 %v2927, %v2925
    %v2958 = vpack.c.b16 %v2928, %v2926
    %v2959 = vpack.c.b16 %v2931, %v2929
    %v2960 = vpack.c.b16 %v2932, %v2930
    %v2961 = vpack.c.b16 %v2935, %v2933
    %v2962 = vpack.c.b16 %v2936, %v2934
    %v2963 = vpack.c.b16 %v2939, %v2937
    %v2964 = vpack.c.b16 %v2940, %v2938
    %v2965 = vpack.c.b16 %v2943, %v2941
    %v2966 = vpack.c.b16 %v2944, %v2942
    %v2967 = vpack.c.b16 %v2947, %v2945
    %v2968 = vpack.c.b16 %v2948, %v2946
    %v2969 = vpack.c.b16 %v2951, %v2949
    %v2970 = vpack.c.b16 %v2952, %v2950
    %v2971 = vpack.c.b16 %v2953, %v2953
    %v2972 = vpack.c.b16 %v2954, %v2954
    %v2990 = vsel %vm332, %v2878, 0
    %v2993 = vsel %vm336, %v2971, 0
    %v2996 = vsel %vm336, %v2972, 0
    %2998 = vmatpush.bf16.msra.mxu0 %v2969
    %2999 = vmatpush.bf16.msra.mxu0 %v2967
    %3000 = vmatpush.bf16.msra.mxu0 %v2965
    %3001 = vmatpush.bf16.msra.mxu0 %v2963
    %3002 = vmatpush.bf16.msra.mxu0 %v2961
    %3003 = vmatpush.bf16.msra.mxu0 %v2959
    %3004 = vmatpush.bf16.msra.mxu0 %v2957
    %3005 = vmatpush.bf16.msra.mxu0 %v2955
    %3006 = vmatmul.bf16.gmra.mxu0 %v2877
    %v3007 = vpop.f32.mrf.mxu0
    %v3008 = vadd.f32 %v2900, %v3007
    %v3009 = vpop.f32.mrf.mxu0
    %3010 = vdwg.mxu0
    %3011 = vmatpush.bf16.msra.mxu0 0
    %3012 = vmatpush.bf16.msra.mxu0 0
    %3013 = vmatpush.bf16.msra.mxu0 0
    %3014 = vmatpush.bf16.msra.mxu0 0
    %3015 = vmatpush.bf16.msra.mxu0 0
    %3016 = vmatpush.bf16.msra.mxu0 0
    %3017 = vmatpush.bf16.msra.mxu0 0
    %3018 = vmatpush.bf16.msra.mxu0 %v2993
    %3019 = vmatmul.bf16.gmra.mxu0 %v2990
    %v3020 = vpop.f32.mrf.mxu0
    %v3021 = vadd.f32 %v3008, %v3020
    %v3022 = vpop.f32.mrf.mxu0
    %3023 = vdwg.mxu0
    %3024 = vmatpush.bf16.msra.mxu0 %v2970
    %3025 = vmatpush.bf16.msra.mxu0 %v2968
    %3026 = vmatpush.bf16.msra.mxu0 %v2966
    %3027 = vmatpush.bf16.msra.mxu0 %v2964
    %3028 = vmatpush.bf16.msra.mxu0 %v2962
    %3029 = vmatpush.bf16.msra.mxu0 %v2960
    %3030 = vmatpush.bf16.msra.mxu0 %v2958
    %3031 = vmatpush.bf16.msra.mxu0 %v2956
    %3032 = vmatmul.bf16.gmra.mxu0 %v2877
    %v3033 = vpop.f32.mrf.mxu0
    %v3034 = vadd.f32 %v2901, %v3033
    %v3035 = vpop.f32.mrf.mxu0
    %3036 = vdwg.mxu0
    %3037 = vmatpush.bf16.msra.mxu0 0
    %3038 = vmatpush.bf16.msra.mxu0 0
    %3039 = vmatpush.bf16.msra.mxu0 0
    %3040 = vmatpush.bf16.msra.mxu0 0
    %3041 = vmatpush.bf16.msra.mxu0 0
    %3042 = vmatpush.bf16.msra.mxu0 0
    %3043 = vmatpush.bf16.msra.mxu0 0
    %3044 = vmatpush.bf16.msra.mxu0 %v2996
    %3045 = vmatmul.bf16.gmra.mxu0 %v2990
    %v3046 = vpop.f32.mrf.mxu0
    %v3047 = vadd.f32 %v3034, %v3046
    %v3048 = vpop.f32.mrf.mxu0
    %3049 = vdwg.mxu0
    %v3050 = vmul.f32 %v3021, 0.01
    %v3051 = vmul.f32 %v3047, 0.01
    %v3052 = vmax.f32 %v3021, %v3050
    %v3053 = vmax.f32 %v3047, %v3051
    %v3054 = vpack.c.bf16 %v3052, %v3052
    %v3055 = vpack.c.bf16 %v3053, %v3053
    %s3056 = scalar_lea.vmem [#allocation7], 2176
    %v3057 = vld [vmem:[%s3056] sm:$0xff]
    %v3058 = vld [vmem:[%s3056 + $0x8] sm:$0xff]
    %v3059 = vld [vmem:[%s3056 + $0x10] sm:$0xff]
    %v3060 = vld [vmem:[%s3056 + $0x18] sm:$0xff]
    %v3061 = vld [vmem:[%s3056 + $0x20] sm:$0xff]
    %v3062 = vld [vmem:[%s3056 + $0x28] sm:$0xff]
    %v3063 = vld [vmem:[%s3056 + $0x30] sm:$0xff]
    %v3064 = vld [vmem:[%s3056 + $0x38] sm:$0xff]
    %v3065 = vld [vmem:[%s3056 + $0x40] sm:$0xff]
    %v3066 = vld [vmem:[%s3056 + $0x48] sm:$0xff]
    %v3067 = vld [vmem:[%s3056 + $0x50] sm:$0xff]
    %v3068 = vld [vmem:[%s3056 + $0x58] sm:$0xff]
    %v3069 = vld [vmem:[%s3056 + $0x60] sm:$0xff]
    %v3070 = vld [vmem:[%s3056 + $0x68] sm:$0xff]
    %v3071 = vld [vmem:[%s3056 + $0x70] sm:$0xff]
    %v3072 = vld [vmem:[%s3056 + $0x78] sm:$0xff]
    %v3073 = vld [vmem:[%s3056 + $0x80] sm:$0xff]
    %s3074 = scalar_lea.vmem [#allocation8], 32
    %v3075 = vld [vmem:[%s3074] sm:$0x3]
    %v3077 = vperm.slane %v3075, 0
    %v3078 = vperm.slane %v3075, 1
    %v3098 = vunpack.c.l.b16 %v3057
    %v3099 = vunpack.c.h.b16 %v3057
    %v3100 = vunpack.c.l.b16 %v3058
    %v3101 = vunpack.c.h.b16 %v3058
    %v3102 = vunpack.c.l.b16 %v3059
    %v3103 = vunpack.c.h.b16 %v3059
    %v3104 = vunpack.c.l.b16 %v3060
    %v3105 = vunpack.c.h.b16 %v3060
    %v3106 = vunpack.c.l.b16 %v3061
    %v3107 = vunpack.c.h.b16 %v3061
    %v3108 = vunpack.c.l.b16 %v3062
    %v3109 = vunpack.c.h.b16 %v3062
    %v3110 = vunpack.c.l.b16 %v3063
    %v3111 = vunpack.c.h.b16 %v3063
    %v3112 = vunpack.c.l.b16 %v3064
    %v3113 = vunpack.c.h.b16 %v3064
    %v3114 = vunpack.c.l.b16 %v3065
    %v3115 = vunpack.c.h.b16 %v3065
    %v3116 = vunpack.c.l.b16 %v3066
    %v3117 = vunpack.c.h.b16 %v3066
    %v3118 = vunpack.c.l.b16 %v3067
    %v3119 = vunpack.c.h.b16 %v3067
    %v3120 = vunpack.c.l.b16 %v3068
    %v3121 = vunpack.c.h.b16 %v3068
    %v3122 = vunpack.c.l.b16 %v3069
    %v3123 = vunpack.c.h.b16 %v3069
    %v3124 = vunpack.c.l.b16 %v3070
    %v3125 = vunpack.c.h.b16 %v3070
    %v3126 = vunpack.c.l.b16 %v3071
    %v3127 = vunpack.c.h.b16 %v3071
    %v3128 = vunpack.c.l.b16 %v3072
    %v3129 = vunpack.c.h.b16 %v3072
    %v3130 = vunpack.c.l.b16 %v3073
    %v3131 = vunpack.c.h.b16 %v3073
    %v3132 = vpack.c.b16 %v3100, %v3098
    %v3133 = vpack.c.b16 %v3101, %v3099
    %v3134 = vpack.c.b16 %v3104, %v3102
    %v3135 = vpack.c.b16 %v3105, %v3103
    %v3136 = vpack.c.b16 %v3108, %v3106
    %v3137 = vpack.c.b16 %v3109, %v3107
    %v3138 = vpack.c.b16 %v3112, %v3110
    %v3139 = vpack.c.b16 %v3113, %v3111
    %v3140 = vpack.c.b16 %v3116, %v3114
    %v3141 = vpack.c.b16 %v3117, %v3115
    %v3142 = vpack.c.b16 %v3120, %v3118
    %v3143 = vpack.c.b16 %v3121, %v3119
    %v3144 = vpack.c.b16 %v3124, %v3122
    %v3145 = vpack.c.b16 %v3125, %v3123
    %v3146 = vpack.c.b16 %v3128, %v3126
    %v3147 = vpack.c.b16 %v3129, %v3127
    %v3148 = vpack.c.b16 %v3130, %v3130
    %v3149 = vpack.c.b16 %v3131, %v3131
    %v3167 = vsel %vm332, %v3055, 0
    %v3170 = vsel %vm336, %v3148, 0
    %v3173 = vsel %vm336, %v3149, 0
    %3175 = vmatpush.bf16.msra.mxu0 %v3146
    %3176 = vmatpush.bf16.msra.mxu0 %v3144
    %3177 = vmatpush.bf16.msra.mxu0 %v3142
    %3178 = vmatpush.bf16.msra.mxu0 %v3140
    %3179 = vmatpush.bf16.msra.mxu0 %v3138
    %3180 = vmatpush.bf16.msra.mxu0 %v3136
    %3181 = vmatpush.bf16.msra.mxu0 %v3134
    %3182 = vmatpush.bf16.msra.mxu0 %v3132
    %3183 = vmatmul.bf16.gmra.mxu0 %v3054
    %v3184 = vpop.f32.mrf.mxu0
    %v3185 = vadd.f32 %v3077, %v3184
    %v3186 = vpop.f32.mrf.mxu0
    %3187 = vdwg.mxu0
    %3188 = vmatpush.bf16.msra.mxu0 0
    %3189 = vmatpush.bf16.msra.mxu0 0
    %3190 = vmatpush.bf16.msra.mxu0 0
    %3191 = vmatpush.bf16.msra.mxu0 0
    %3192 = vmatpush.bf16.msra.mxu0 0
    %3193 = vmatpush.bf16.msra.mxu0 0
    %3194 = vmatpush.bf16.msra.mxu0 0
    %3195 = vmatpush.bf16.msra.mxu0 %v3170
    %3196 = vmatmul.bf16.gmra.mxu0 %v3167
    %v3197 = vpop.f32.mrf.mxu0
    %v3198 = vadd.f32 %v3185, %v3197
    %v3199 = vpop.f32.mrf.mxu0
    %3200 = vdwg.mxu0
    %3201 = vmatpush.bf16.msra.mxu0 %v3147
    %3202 = vmatpush.bf16.msra.mxu0 %v3145
    %3203 = vmatpush.bf16.msra.mxu0 %v3143
    %3204 = vmatpush.bf16.msra.mxu0 %v3141
    %3205 = vmatpush.bf16.msra.mxu0 %v3139
    %3206 = vmatpush.bf16.msra.mxu0 %v3137
    %3207 = vmatpush.bf16.msra.mxu0 %v3135
    %3208 = vmatpush.bf16.msra.mxu0 %v3133
    %3209 = vmatmul.bf16.gmra.mxu0 %v3054
    %v3210 = vpop.f32.mrf.mxu0
    %v3211 = vadd.f32 %v3078, %v3210
    %v3212 = vpop.f32.mrf.mxu0
    %3213 = vdwg.mxu0
    %3214 = vmatpush.bf16.msra.mxu0 0
    %3215 = vmatpush.bf16.msra.mxu0 0
    %3216 = vmatpush.bf16.msra.mxu0 0
    %3217 = vmatpush.bf16.msra.mxu0 0
    %3218 = vmatpush.bf16.msra.mxu0 0
    %3219 = vmatpush.bf16.msra.mxu0 0
    %3220 = vmatpush.bf16.msra.mxu0 0
    %3221 = vmatpush.bf16.msra.mxu0 %v3173
    %3222 = vmatmul.bf16.gmra.mxu0 %v3167
    %v3223 = vpop.f32.mrf.mxu0
    %v3224 = vadd.f32 %v3211, %v3223
    %v3225 = vpop.f32.mrf.mxu0
    %3226 = vdwg.mxu0
    %v3227 = vmul.f32 %v3198, 0.01
    %v3228 = vmul.f32 %v3224, 0.01
    %v3229 = vmax.f32 %v3198, %v3227
    %v3230 = vmax.f32 %v3224, %v3228
    %v3231 = vpack.c.bf16 %v3229, %v3229
    %v3232 = vpack.c.bf16 %v3230, %v3230
    %v3233 = vld [vmem:[#allocation10] sm:$0xf]
    %v3234 = vld [vmem:[#allocation10 + $0x4] sm:$0xf]
    %v3235 = vld [vmem:[#allocation10 + $0x8] sm:$0xf]
    %v3236 = vld [vmem:[#allocation10 + $0xc] sm:$0xf]
    %v3237 = vld [vmem:[#allocation10 + $0x10] sm:$0xf]
    %v3238 = vld [vmem:[#allocation10 + $0x14] sm:$0xf]
    %v3239 = vld [vmem:[#allocation10 + $0x18] sm:$0xf]
    %v3240 = vld [vmem:[#allocation10 + $0x1c] sm:$0xf]
    %v3241 = vld [vmem:[#allocation10 + $0x20] sm:$0xf]
    %v3242 = vld [vmem:[#allocation10 + $0x24] sm:$0xf]
    %v3243 = vld [vmem:[#allocation10 + $0x28] sm:$0xf]
    %v3244 = vld [vmem:[#allocation10 + $0x2c] sm:$0xf]
    %v3245 = vld [vmem:[#allocation10 + $0x30] sm:$0xf]
    %v3246 = vld [vmem:[#allocation10 + $0x34] sm:$0xf]
    %v3247 = vld [vmem:[#allocation10 + $0x38] sm:$0xf]
    %v3248 = vld [vmem:[#allocation10 + $0x3c] sm:$0xf]
    %v3249 = vld [vmem:[#allocation10 + $0x40] sm:$0xf]
    %v3250 = vld [vmem:[#allocation11] sm:$0x1]
    %v3252 = vperm.slane %v3250, 0
    %v3271 = vunpack.c.l.b16 %v3233
    %v3272 = vunpack.c.l.b16 %v3234
    %v3273 = vunpack.c.l.b16 %v3235
    %v3274 = vunpack.c.l.b16 %v3236
    %v3275 = vunpack.c.l.b16 %v3237
    %v3276 = vunpack.c.l.b16 %v3238
    %v3277 = vunpack.c.l.b16 %v3239
    %v3278 = vunpack.c.l.b16 %v3240
    %v3279 = vunpack.c.l.b16 %v3241
    %v3280 = vunpack.c.l.b16 %v3242
    %v3281 = vunpack.c.l.b16 %v3243
    %v3282 = vunpack.c.l.b16 %v3244
    %v3283 = vunpack.c.l.b16 %v3245
    %v3284 = vunpack.c.l.b16 %v3246
    %v3285 = vunpack.c.l.b16 %v3247
    %v3286 = vunpack.c.l.b16 %v3248
    %v3287 = vunpack.c.l.b16 %v3249
    %v3288 = vpack.c.b16 %v3272, %v3271
    %v3289 = vpack.c.b16 %v3274, %v3273
    %v3290 = vpack.c.b16 %v3276, %v3275
    %v3291 = vpack.c.b16 %v3278, %v3277
    %v3292 = vpack.c.b16 %v3280, %v3279
    %v3293 = vpack.c.b16 %v3282, %v3281
    %v3294 = vpack.c.b16 %v3284, %v3283
    %v3295 = vpack.c.b16 %v3286, %v3285
    %v3296 = vpack.c.b16 %v3287, %v3287
    %v3306 = vsel %vm332, %v3232, 0
    %v3309 = vsel %vm336, %v3296, 0
    %3311 = vmatpush.bf16.msra.mxu0 %v3295
    %3312 = vmatpush.bf16.msra.mxu0 %v3294
    %3313 = vmatpush.bf16.msra.mxu0 %v3293
    %3314 = vmatpush.bf16.msra.mxu0 %v3292
    %3315 = vmatpush.bf16.msra.mxu0 %v3291
    %3316 = vmatpush.bf16.msra.mxu0 %v3290
    %3317 = vmatpush.bf16.msra.mxu0 %v3289
    %3318 = vmatpush.bf16.msra.mxu0 %v3288
    %3319 = vmatmul.bf16.gmra.mxu0 %v3231
    %v3320 = vpop.f32.mrf.mxu0
    %v3321 = vadd.f32 %v3252, %v3320
    %v3322 = vpop.f32.mrf.mxu0
    %3323 = vdwg.mxu0
    %3324 = vmatpush.bf16.msra.mxu0 0
    %3325 = vmatpush.bf16.msra.mxu0 0
    %3326 = vmatpush.bf16.msra.mxu0 0
    %3327 = vmatpush.bf16.msra.mxu0 0
    %3328 = vmatpush.bf16.msra.mxu0 0
    %3329 = vmatpush.bf16.msra.mxu0 0
    %3330 = vmatpush.bf16.msra.mxu0 0
    %3331 = vmatpush.bf16.msra.mxu0 %v3309
    %3332 = vmatmul.bf16.gmra.mxu0 %v3306
    %v3333 = vpop.f32.mrf.mxu0
    %v3334 = vadd.f32 %v3321, %v3333
    %v3335 = vpop.f32.mrf.mxu0
    %3336 = vdwg.mxu0
    %3337 = vst [vmem:[#allocation13] sm:$0xff] %v3334
    // Predicated region
    $region54: #{tpu_custom_call.1} parent=1 // pred_check
      _
    $region55: #{tpu_custom_call.1} parent=1 // pred_check_branch
      %3339 = sbr.rel (0) target = $region57
    $region56: #{tpu_custom_call.1} parent=1 // pred_region
      %3341 = vsyncadd [#allocation4], 0
      %s3343 = sshll.u32 [#allocation13], 4
      %s3344 = int_to_ptr.vmem [resolvable:$true] %s3343
      %s3345 = sshll.u32 %s7, 4
      %s3346 = int_to_ptr.hbm [resolvable:$true] %s3345
      %3348 = dma.vmem_to_hbm [thread:$0]  %s3344, 128, %s3346, [#allocation4]
    $region57: #{tpu_custom_call.1} parent=1 // pred_fallthru
      _
    // Predicated region
    $region58: #{tpu_custom_call.1} parent=1 // pred_check
      _
    $region59: #{tpu_custom_call.1} parent=1 // pred_check_branch
      %3350 = sbr.rel (0) target = $region61
    $region60: #{tpu_custom_call.1} parent=1 // pred_region
      %3352 = dma.done [#allocation4], 128
    $region61: #{tpu_custom_call.1} parent=1 // pred_fallthru
      _
    %3353 = vsyncpa [#allocation3], 1
    %3354 = vsyncpa [#allocation6], 1
    %3355 = vsyncpa [#allocation9], 1
    %3356 = vsyncpa [#allocation12], 1
    %3357 = vsyncpa [#allocation4], 1

</llo_original>
